<compile_context>
chip_gen: v7x
topology: tpu7x:2x2x1
jax: 0.10.0
libtpu: 0.0.40
codegen_flags: <defaults>
</compile_context>

<pallas_src>
import functools

import jax
import jax.numpy as jnp
from jax.experimental import pallas as pl
from jax.experimental.pallas import tpu as pltpu

EPS = 1e-5
_LANE = 128


def _round_up(x, m):
    return (x + m - 1) // m * m


def _pick_vmem_limit():
    """Generation-aware scoped-VMEM limit: ~half of physical, capped at 96MiB."""
    try:
        cap = pltpu.get_tpu_info().vmem_capacity_bytes
        return int(min(cap // 2, 96 * 1024 * 1024))
    except Exception:
        return None  # fall back to the compiler default


_VMEM_LIMIT = _pick_vmem_limit()


# ------------------------------ kernel --------------------------------------


def _conv_valid(xp, w_ref, Ho, Wo, KH, KW):
    """Stride-1 'valid' conv of a padded VMEM tile on the MXU.

    xp:    (Ho+KH-1, Wo+KW-1, C) f32 value (already zero-padded).
    w_ref: (KH*KW*C, Cpad) bf16 ref, tap-major / channel-minor rows.
    Returns an (Ho*Wo, Cpad) f32 accumulator.

    Small C: one im2col matmul.  C >= 128: per-tap accumulating dots, which
    keep only the accumulator live (no 9x patch-matrix materialization).
    """
    C = xp.shape[-1]
    if C >= _LANE:
        acc = None
        for kh in range(KH):
            for kw in range(KW):
                tap = xp[kh:kh + Ho, kw:kw + Wo, :].reshape(Ho * Wo, C)
                w_tap = w_ref[(kh * KW + kw) * C:(kh * KW + kw + 1) * C, :]
                d = jnp.dot(tap.astype(jnp.bfloat16), w_tap,
                            preferred_element_type=jnp.float32)
                acc = d if acc is None else acc + d
        return acc
    parts = [xp[kh:kh + Ho, kw:kw + Wo, :].reshape(Ho * Wo, C)
             for kh in range(KH) for kw in range(KW)]
    patches = jnp.concatenate(parts, axis=-1).astype(jnp.bfloat16)
    return jnp.dot(patches, w_ref[...], preferred_element_type=jnp.float32)


def _basic_block_kernel(x_ref, w0_ref, w1_ref, a0_ref, b0_ref, a1_ref, b1_ref,
                        *rest, Ho, Wo, Hin, Win, KH0, KW0, Cout, Cpad,
                        has_proj, proj_k, transpose_out):
    if has_proj:
        ws_ref, as_ref, bs_ref, o_ref, xpad_ref, y0pad_ref = rest
    else:
        o_ref, xpad_ref, y0pad_ref = rest

    HWo = Ho * Wo
    C0 = x_ref.shape[-1]

    # Zero the padded scratches once; halos stay zero and the interiors are
    # fully rewritten every grid step (scratch persists across the batch grid;
    # batch axis is "arbitrary" so program_id==0 is the first iteration).
    @pl.when(pl.program_id(0) == 0)
    def _():
        xpad_ref[...] = jnp.zeros_like(xpad_ref)
        y0pad_ref[...] = jnp.zeros_like(y0pad_ref)

    # Stage the bf16 input tile into the f32 padded scratch.
    # TODO(synk): stage xpad/y0pad in bf16 once packed sublane-offset stores
    # are verified on all target generations; halves VMEM staging traffic.
    xpad_ref[1:1 + Hin, 1:1 + Win, :] = x_ref[0].astype(jnp.float32)
    xp = xpad_ref[...]

    # ---- conv0 + folded BN0 + ReLU -----------------------------------------
    acc0 = _conv_valid(xp, w0_ref, Ho, Wo, KH0, KW0)
    y0 = jnp.maximum(acc0 * a0_ref[...] + b0_ref[...], 0.0)        # (HWo, Cpad)

    # ---- stage y0 into a padded VMEM scratch for conv1 ---------------------
    y0pad_ref[1:1 + Ho, 1:1 + Wo, :] = y0.reshape(Ho, Wo, Cpad)
    yp = y0pad_ref[...]

    # ---- conv1 + folded BN1 -------------------------------------------------
    acc1 = _conv_valid(yp, w1_ref, Ho, Wo, 3, 3)
    y1 = acc1 * a1_ref[...] + b1_ref[...]                           # (HWo, Cpad)

    # ---- shortcut, read directly from the aligned unpadded input ref -------
    if has_proj:
        xin = x_ref[0].reshape(HWo, C0)[:, :proj_k]   # phase-(0,0) slice if s2
        idn = jnp.dot(xin, ws_ref[...], preferred_element_type=jnp.float32)
        idn = idn * as_ref[...] + bs_ref[...]
    else:
        idn = x_ref[0].reshape(HWo, C0).astype(jnp.float32)
        if Cpad > C0:
            idn = jnp.concatenate(
                [idn, jnp.zeros((HWo, Cpad - C0), jnp.float32)], axis=-1)

    # ---- residual add + ReLU ------------------------------------------------
    y = jnp.maximum(y1 + idn, 0.0)                                  # (HWo, Cpad)

    if transpose_out:
        # Lane-dense NCHW-native store: (Cout, Ho*Wo) with Ho*Wo % 128 == 0.
        yt = jnp.transpose(y, (1, 0))
        o_ref[0] = yt[:Cout, :].astype(o_ref.dtype)
    else:
        o_ref[0] = y[:, :Cout].astype(o_ref.dtype)


# ------------------------------ wrapper --------------------------------------


def _fold_bn(gamma, beta, mean, var):
    a = gamma / jnp.sqrt(var + EPS)
    return a.reshape(1, -1), (beta - mean * a).reshape(1, -1)


def _pad_cols(x, n):
    pad = n - x.shape[-1]
    if pad == 0:
        return x
    return jnp.pad(x, [(0, 0)] * (x.ndim - 1) + [(0, pad)])


@functools.partial(jax.jit, static_argnames=("downsample", "increase_dim"))
def basic_block_forward(x_nchw, p, *, downsample=False, increase_dim=False):
    """BasicBlock.forward (inference BN). (N, Cin, H, W) -> (N, Cout, Ho, Wo)."""
    stride = 2 if downsample else 1
    N, Cin, H, W = x_nchw.shape
    Cout = p["w0"].shape[0]
    if downsample and not increase_dim:
        # Same latent shape bug as the PyTorch module (identity add would fail).
        raise ValueError("downsample=True requires increase_dim=True")
    if not increase_dim:
        assert Cin == Cout, "identity shortcut needs Cin == Cout"
    if downsample:
        assert H % 2 == 0 and W % 2 == 0, "downsample path needs even H and W"
    Ho, Wo = H // stride, W // stride
    HWo = Ho * Wo
    Cpad = _round_up(Cout, _LANE)   # lane-dense matmul N dim / BN / transpose

    # Weights -> HWIO; fold BN into per-channel affine; zero-pad Cout -> Cpad
    # (padded output channels are exactly zero and are sliced off in-kernel).
    w0 = jnp.transpose(p["w0"], (2, 3, 1, 0))
    w1 = jnp.transpose(p["w1"], (2, 3, 1, 0))
    a0, b0 = _fold_bn(p["g0"], p["be0"], p["m0"], p["v0"])
    a1, b1 = _fold_bn(p["g1"], p["be1"], p["m1"], p["v1"])
    w1p = jnp.zeros((3, 3, Cpad, Cpad), w1.dtype).at[:, :, :Cout, :Cout].set(w1)
    w1m = w1p.reshape(9 * Cpad, Cpad).astype(jnp.bfloat16)

    # Activations travel to the kernel in bf16 (conv math is bf16 anyway):
    # halves HBM->VMEM input traffic and the layout-transpose pass below.
    # TODO(synk): fold the NCHW->NHWC / space-to-depth transpose into the
    # kernel (XLU) to remove this extra HBM pass entirely.
    x_bf = x_nchw.astype(jnp.bfloat16)
    if stride == 1:
        x_in = jnp.transpose(x_bf, (0, 2, 3, 1))          # NCHW -> NHWC
        KH0 = KW0 = 3
        C0 = Cin
        w0m = w0.reshape(9 * Cin, Cout)
    else:
        # Fold the stride-2 3x3 conv into a stride-1 2x2 conv on a
        # space-to-depth view of x (channel blocks = 2x2 phases) -> no strided
        # loads in-kernel and no wasted MXU FLOPs.
        xr = x_bf.reshape(N, Cin, Ho, 2, Wo, 2)
        x_in = jnp.transpose(xr, (0, 2, 4, 3, 5, 1)).reshape(N, Ho, Wo, 4 * Cin)
        KH0 = KW0 = 2
        C0 = 4 * Cin
        w0q = jnp.zeros((2, 2, 4, Cin, Cout), w0.dtype)
        for kh in range(3):
            a_, hh = (0, 1) if kh == 0 else (1, kh - 1)
            for kw in range(3):
                b_, ww = (0, 1) if kw == 0 else (1, kw - 1)
                w0q = w0q.at[a_, b_, hh * 2 + ww].set(w0[kh, kw])
        w0m = w0q.reshape(2 * 2 * C0, Cout)
    w0m = _pad_cols(w0m, Cpad).astype(jnp.bfloat16)
    a0p, b0p = _pad_cols(a0, Cpad), _pad_cols(b0, Cpad)
    a1p, b1p = _pad_cols(a1, Cpad), _pad_cols(b1, Cpad)

    Hin, Win = x_in.shape[1], x_in.shape[2]
    K0 = KH0 * KW0 * C0

    args = [x_in, w0m, w1m, a0p, b0p, a1p, b1p]
    in_specs = [
        pl.BlockSpec((1, Hin, Win, C0), lambda n: (n, 0, 0, 0)),
        pl.BlockSpec((K0, Cpad), lambda n: (0, 0)),
        pl.BlockSpec((9 * Cpad, Cpad), lambda n: (0, 0)),
        pl.BlockSpec((1, Cpad), lambda n: (0, 0)),
        pl.BlockSpec((1, Cpad), lambda n: (0, 0)),
        pl.BlockSpec((1, Cpad), lambda n: (0, 0)),
        pl.BlockSpec((1, Cpad), lambda n: (0, 0)),
    ]
    proj_k = Cin
    if increase_dim:
        # 1x1 projection: for stride 2 only the phase-(0,0) channel slice of
        # the space-to-depth input feeds it, so the weight stays (Cin, Cpad).
        ws = jnp.transpose(p["ws"], (2, 3, 1, 0))[0, 0]            # (Cin, Cout)
        ws_m = _pad_cols(ws, Cpad).astype(jnp.bfloat16)
        a_s, b_s = _fold_bn(p["gs"], p["bes"], p["ms"], p["vs"])
        args += [ws_m, _pad_cols(a_s, Cpad), _pad_cols(b_s, Cpad)]
        in_specs += [
            pl.BlockSpec((Cin, Cpad), lambda n: (0, 0)),
            pl.BlockSpec((1, Cpad), lambda n: (0, 0)),
            pl.BlockSpec((1, Cpad), lambda n: (0, 0)),
        ]

    # Lane-dense, NCHW-native output (drops the XLA NHWC->NCHW pass) whenever
    # Ho*Wo is lane-aligned; tiny odd maps fall back to the NHWC store.
    transpose_out = (HWo % _LANE == 0)
    if transpose_out:
        out_shape = jax.ShapeDtypeStruct((N, Cout, HWo), jnp.float32)
        out_spec = pl.BlockSpec((1, Cout, HWo), lambda n: (n, 0, 0))
    else:
        out_shape = jax.ShapeDtypeStruct((N, HWo, Cout), jnp.float32)
        out_spec = pl.BlockSpec((1, HWo, Cout), lambda n: (n, 0, 0))

    kernel = functools.partial(
        _basic_block_kernel, Ho=Ho, Wo=Wo, Hin=Hin, Win=Win,
        KH0=KH0, KW0=KW0, Cout=Cout, Cpad=Cpad,
        has_proj=increase_dim, proj_k=proj_k, transpose_out=transpose_out)

    # TODO(synk): for large feature maps (56x56x256+) add an H-row grid axis
    # with a 1-row halo so the working set fits v7x's 64 MiB VMEM and both of
    # its TensorCores are used; whole-image blocks are fine at these sizes.
    # The batch axis is "arbitrary" so the one-time scratch zeroing at
    # program_id==0 stays valid on multi-TensorCore parts.
    out = pl.pallas_call(
        kernel,
        out_shape=out_shape,
        grid=(N,),
        in_specs=in_specs,
        out_specs=out_spec,
        scratch_shapes=[
            pltpu.VMEM((Hin + KH0 - 1, Win + KW0 - 1, C0), jnp.float32),
            pltpu.VMEM((Ho + 2, Wo + 2, Cpad), jnp.float32),
        ],
        compiler_params=pltpu.CompilerParams(
            dimension_semantics=("arbitrary",),
            vmem_limit_bytes=_VMEM_LIMIT),
    )(*args)

    if transpose_out:
        return out.reshape(N, Cout, Ho, Wo)          # already NCHW
    out = out.reshape(N, Ho, Wo, Cout)
    return jnp.transpose(out, (0, 3, 1, 2))          # NHWC -> NCHW


# ------------------------ pure-JAX reference ---------------------------------
# Matches the kernel's numerics convention: conv inputs/weights in bf16,
# accumulation and BN/ReLU in f32 (standard TPU MXU practice).


def reference_forward(x_nchw, p, *, downsample=False, increase_dim=False):
    stride = 2 if downsample else 1

    def conv(x, w, s, pad):
        return jax.lax.conv_general_dilated(
            x.astype(jnp.bfloat16), w.astype(jnp.bfloat16),
            window_strides=(s, s), padding=[(pad, pad), (pad, pad)],
            dimension_numbers=("NCHW", "OIHW", "NCHW"),
            preferred_element_type=jnp.float32)

    def bn(x, g, b, m, v):
        inv = g / jnp.sqrt(v + EPS)
        return x * inv[None, :, None, None] + (b - m * inv)[None, :, None, None]

    out = jax.nn.relu(bn(conv(x_nchw, p["w0"], stride, 1),
                         p["g0"], p["be0"], p["m0"], p["v0"]))
    out = bn(conv(out, p["w1"], 1, 1), p["g1"], p["be1"], p["m1"], p["v1"])
    identity = x_nchw
    if increase_dim:
        identity = bn(conv(x_nchw, p["ws"], stride, 0),
                      p["gs"], p["bes"], p["ms"], p["vs"])
    return jax.nn.relu(out + identity)


# --------------------------- deterministic init -------------------------------


def init_params(key, cin, cout, increase_dim):
    keys = iter(jax.random.split(key, 24))

    def conv_w(o, i, kh, kw):
        bound = 1.0 / float(i * kh * kw) ** 0.5
        return jax.random.uniform(next(keys), (o, i, kh, kw), jnp.float32,
                                  -bound, bound)

    def bn_params(c):
        return (jax.random.uniform(next(keys), (c,), jnp.float32, 0.5, 1.5),
                jax.random.uniform(next(keys), (c,), jnp.float32, -0.1, 0.1),
                jax.random.uniform(next(keys), (c,), jnp.float32, -0.1, 0.1),
                jax.random.uniform(next(keys), (c,), jnp.float32, 0.5, 1.5))

    p = {"w0": conv_w(cout, cin, 3, 3)}
    p["g0"], p["be0"], p["m0"], p["v0"] = bn_params(cout)
    p["w1"] = conv_w(cout, cout, 3, 3)
    p["g1"], p["be1"], p["m1"], p["v1"] = bn_params(cout)
    if increase_dim:
        p["ws"] = conv_w(cout, cin, 1, 1)
        p["gs"], p["bes"], p["ms"], p["vs"] = bn_params(cout)
    # TODO(synk): training-mode BatchNorm (batch statistics) not implemented;
    # kernel reproduces inference-mode BN with running stats.
    return p


# ------------------------------ main ------------------------------------------


if __name__ == "__main__":
    key = jax.random.PRNGKey(0)
    kx, kp1, kp2 = jax.random.split(key, 3)

    x = jax.random.normal(kx, (2, 8, 16, 16), jnp.float32)  # NCHW

    # Config A: default BasicBlock (stride 1, identity shortcut)
    pA = init_params(kp1, 8, 8, increase_dim=False)
    outA = basic_block_forward(x, pA, downsample=False, increase_dim=False)
    jax.block_until_ready(outA)
    refA = reference_forward(x, pA, downsample=False, increase_dim=False)
    assert outA.shape == (2, 8, 16, 16)
    diffA = float(jnp.max(jnp.abs(outA - refA)))
    # bf16 activation DMA makes the identity add bf16-rounded vs the f32 ref.
    assert jnp.allclose(outA, refA, atol=2e-2, rtol=2e-2), diffA

    # Config B: downsample + increase_dim (stride 2, 1x1-conv projection shortcut)
    pB = init_params(kp2, 8, 16, increase_dim=True)
    outB = basic_block_forward(x, pB, downsample=True, increase_dim=True)
    jax.block_until_ready(outB)
    refB = reference_forward(x, pB, downsample=True, increase_dim=True)
    assert outB.shape == (2, 16, 8, 8)
    diffB = float(jnp.max(jnp.abs(outB - refB)))
    assert jnp.allclose(outB, refB, atol=2e-2, rtol=2e-2), diffB

    print("KERNEL_OK")
</pallas_src>

<mosaic_0001>
module attributes {stable_mosaic.version = 11 : i64} {
  func.func @_basic_block_kernel(%arg0: i32, %arg1: memref<1x16x16x8xbf16, #tpu.memory_space<vmem>>, %arg2: memref<72x128xbf16, #tpu.memory_space<vmem>>, %arg3: memref<1152x128xbf16, #tpu.memory_space<vmem>>, %arg4: memref<1x128xf32, #tpu.memory_space<vmem>>, %arg5: memref<1x128xf32, #tpu.memory_space<vmem>>, %arg6: memref<1x128xf32, #tpu.memory_space<vmem>>, %arg7: memref<1x128xf32, #tpu.memory_space<vmem>>, %arg8: memref<1x8x256xf32, #tpu.memory_space<vmem>>, %arg9: memref<18x18x8xf32, #tpu.memory_space<vmem>>, %arg10: memref<18x18x128xf32, #tpu.memory_space<vmem>>) attributes {dimension_semantics = [#tpu.dimension_semantics<arbitrary>], iteration_bounds = array<i64: 2>, scalar_prefetch = 0 : i64, scratch_operands = 2 : i64, tpu.core_type = #tpu.core_type<tc>, window_params = [{transform_indices = @transform_0, window_bounds = array<i64: 1, 16, 16, 8>}, {pipeline_mode = #tpu.pipeline_mode<synchronous>, transform_indices = @transform_1, window_bounds = array<i64: 72, 128>}, {pipeline_mode = #tpu.pipeline_mode<synchronous>, transform_indices = @transform_2, window_bounds = array<i64: 1152, 128>}, {pipeline_mode = #tpu.pipeline_mode<synchronous>, transform_indices = @transform_3, window_bounds = array<i64: 1, 128>}, {pipeline_mode = #tpu.pipeline_mode<synchronous>, transform_indices = @transform_4, window_bounds = array<i64: 1, 128>}, {pipeline_mode = #tpu.pipeline_mode<synchronous>, transform_indices = @transform_5, window_bounds = array<i64: 1, 128>}, {pipeline_mode = #tpu.pipeline_mode<synchronous>, transform_indices = @transform_6, window_bounds = array<i64: 1, 128>}, {transform_indices = @transform_7, window_bounds = array<i64: 1, 8, 256>}]} {
    %c0_i32 = arith.constant 0 : i32
    %0 = arith.cmpi eq, %arg0, %c0_i32 : i32
    %1 = arith.extui %0 : i1 to i32
    %c0_i32_0 = arith.constant 0 : i32
    %2 = arith.cmpi ne, %1, %c0_i32_0 : i32
    scf.if %2 {
      %cst_54 = arith.constant 0.000000e+00 : f32
      %114 = vector.broadcast %cst_54 : f32 to vector<18x18x8xf32>
      %c0_55 = arith.constant 0 : index
      %c0_56 = arith.constant 0 : index
      %c0_57 = arith.constant 0 : index
      %115 = vector.load %arg9[%c0_55, %c0_56, %c0_57] : memref<18x18x8xf32, #tpu.memory_space<vmem>>, vector<18x18x8xf32>
      tpu.vector_store %arg9[%c0_55, %c0_56, %c0_57], %114 {strides = array<i32>} : memref<18x18x8xf32, #tpu.memory_space<vmem>>, vector<18x18x8xf32>,
      %cst_58 = arith.constant 0.000000e+00 : f32
      %116 = vector.broadcast %cst_58 : f32 to vector<18x18x128xf32>
      %c0_59 = arith.constant 0 : index
      %c0_60 = arith.constant 0 : index
      %c0_61 = arith.constant 0 : index
      %117 = vector.load %arg10[%c0_59, %c0_60, %c0_61] : memref<18x18x128xf32, #tpu.memory_space<vmem>>, vector<18x18x128xf32>
      tpu.vector_store %arg10[%c0_59, %c0_60, %c0_61], %116 {strides = array<i32>} : memref<18x18x128xf32, #tpu.memory_space<vmem>>, vector<18x18x128xf32>,
    } else {
    }
    %c0 = arith.constant 0 : index
    %c0_1 = arith.constant 0 : index
    %c0_2 = arith.constant 0 : index
    %c0_3 = arith.constant 0 : index
    %3 = vector.load %arg1[%c0, %c0_1, %c0_2, %c0_3] : memref<1x16x16x8xbf16, #tpu.memory_space<vmem>>, vector<1x16x16x8xbf16>
    %4 = vector.shape_cast %3 : vector<1x16x16x8xbf16> to vector<16x16x8xbf16>
    %5 = arith.extf %4 : vector<16x16x8xbf16> to vector<16x16x8xf32>
    %c1 = arith.constant 1 : index
    %c1_4 = arith.constant 1 : index
    %c0_5 = arith.constant 0 : index
    %6 = vector.load %arg9[%c1, %c1_4, %c0_5] : memref<18x18x8xf32, #tpu.memory_space<vmem>>, vector<16x16x8xf32>
    tpu.vector_store %arg9[%c1, %c1_4, %c0_5], %5 {strides = array<i32>} : memref<18x18x8xf32, #tpu.memory_space<vmem>>, vector<16x16x8xf32>,
    %c0_6 = arith.constant 0 : index
    %c0_7 = arith.constant 0 : index
    %c0_8 = arith.constant 0 : index
    %7 = vector.load %arg9[%c0_6, %c0_7, %c0_8] : memref<18x18x8xf32, #tpu.memory_space<vmem>>, vector<18x18x8xf32>
    %8 = vector.extract_strided_slice %7 {offsets = [0, 0, 0], sizes = [16, 16, 8], strides = [1, 1, 1]} : vector<18x18x8xf32> to vector<16x16x8xf32>
    %9 = vector.shape_cast %8 : vector<16x16x8xf32> to vector<256x8xf32>
    %10 = vector.extract_strided_slice %7 {offsets = [0, 1, 0], sizes = [16, 16, 8], strides = [1, 1, 1]} : vector<18x18x8xf32> to vector<16x16x8xf32>
    %11 = vector.shape_cast %10 : vector<16x16x8xf32> to vector<256x8xf32>
    %12 = vector.extract_strided_slice %7 {offsets = [0, 2, 0], sizes = [16, 16, 8], strides = [1, 1, 1]} : vector<18x18x8xf32> to vector<16x16x8xf32>
    %13 = vector.shape_cast %12 : vector<16x16x8xf32> to vector<256x8xf32>
    %14 = vector.extract_strided_slice %7 {offsets = [1, 0, 0], sizes = [16, 16, 8], strides = [1, 1, 1]} : vector<18x18x8xf32> to vector<16x16x8xf32>
    %15 = vector.shape_cast %14 : vector<16x16x8xf32> to vector<256x8xf32>
    %16 = vector.extract_strided_slice %7 {offsets = [1, 1, 0], sizes = [16, 16, 8], strides = [1, 1, 1]} : vector<18x18x8xf32> to vector<16x16x8xf32>
    %17 = vector.shape_cast %16 : vector<16x16x8xf32> to vector<256x8xf32>
    %18 = vector.extract_strided_slice %7 {offsets = [1, 2, 0], sizes = [16, 16, 8], strides = [1, 1, 1]} : vector<18x18x8xf32> to vector<16x16x8xf32>
    %19 = vector.shape_cast %18 : vector<16x16x8xf32> to vector<256x8xf32>
    %20 = vector.extract_strided_slice %7 {offsets = [2, 0, 0], sizes = [16, 16, 8], strides = [1, 1, 1]} : vector<18x18x8xf32> to vector<16x16x8xf32>
    %21 = vector.shape_cast %20 : vector<16x16x8xf32> to vector<256x8xf32>
    %22 = vector.extract_strided_slice %7 {offsets = [2, 1, 0], sizes = [16, 16, 8], strides = [1, 1, 1]} : vector<18x18x8xf32> to vector<16x16x8xf32>
    %23 = vector.shape_cast %22 : vector<16x16x8xf32> to vector<256x8xf32>
    %24 = vector.extract_strided_slice %7 {offsets = [2, 2, 0], sizes = [16, 16, 8], strides = [1, 1, 1]} : vector<18x18x8xf32> to vector<16x16x8xf32>
    %25 = vector.shape_cast %24 : vector<16x16x8xf32> to vector<256x8xf32>
    %26 = tpu.concatenate %9, %11, %13, %15, %17, %19, %21, %23, %25 in 1 : vector<256x8xf32>, vector<256x8xf32>, vector<256x8xf32>, vector<256x8xf32>, vector<256x8xf32>, vector<256x8xf32>, vector<256x8xf32>, vector<256x8xf32>, vector<256x8xf32> -> vector<256x72xf32>
    %27 = arith.truncf %26 : vector<256x72xf32> to vector<256x72xbf16>
    %c0_9 = arith.constant 0 : index
    %c0_10 = arith.constant 0 : index
    %28 = vector.load %arg2[%c0_9, %c0_10] : memref<72x128xbf16, #tpu.memory_space<vmem>>, vector<72x128xbf16>
    %cst = arith.constant dense<0.000000e+00> : vector<256x128xf32>
    %29 = tpu.matmul %27, %28, %cst {dimension_numbers = #tpu.dot_dimension_numbers<[1], [0], [0], [1], [0, 0, 1, 1], [], []>} : vector<256x72xbf16>, vector<72x128xbf16>, vector<256x128xf32> -> vector<256x128xf32>
    %c0_11 = arith.constant 0 : index
    %c0_12 = arith.constant 0 : index
    %30 = vector.load %arg4[%c0_11, %c0_12] : memref<1x128xf32, #tpu.memory_space<vmem>>, vector<1x128xf32>
    %31 = vector.broadcast %30 : vector<1x128xf32> to vector<256x128xf32>
    %32 = arith.mulf %29, %31 : vector<256x128xf32>
    %c0_13 = arith.constant 0 : index
    %c0_14 = arith.constant 0 : index
    %33 = vector.load %arg5[%c0_13, %c0_14] : memref<1x128xf32, #tpu.memory_space<vmem>>, vector<1x128xf32>
    %34 = vector.broadcast %33 : vector<1x128xf32> to vector<256x128xf32>
    %35 = arith.addf %32, %34 : vector<256x128xf32>
    %cst_15 = arith.constant 0.000000e+00 : f32
    %36 = vector.broadcast %cst_15 : f32 to vector<256x128xf32>
    %37 = arith.maximumf %35, %36 : vector<256x128xf32>
    %38 = vector.shape_cast %37 : vector<256x128xf32> to vector<16x16x128xf32>
    %c1_16 = arith.constant 1 : index
    %c1_17 = arith.constant 1 : index
    %c0_18 = arith.constant 0 : index
    %39 = vector.load %arg10[%c1_16, %c1_17, %c0_18] : memref<18x18x128xf32, #tpu.memory_space<vmem>>, vector<16x16x128xf32>
    tpu.vector_store %arg10[%c1_16, %c1_17, %c0_18], %38 {strides = array<i32>} : memref<18x18x128xf32, #tpu.memory_space<vmem>>, vector<16x16x128xf32>,
    %c0_19 = arith.constant 0 : index
    %c0_20 = arith.constant 0 : index
    %c0_21 = arith.constant 0 : index
    %40 = vector.load %arg10[%c0_19, %c0_20, %c0_21] : memref<18x18x128xf32, #tpu.memory_space<vmem>>, vector<18x18x128xf32>
    %41 = vector.extract_strided_slice %40 {offsets = [0, 0, 0], sizes = [16, 16, 128], strides = [1, 1, 1]} : vector<18x18x128xf32> to vector<16x16x128xf32>
    %42 = vector.shape_cast %41 : vector<16x16x128xf32> to vector<256x128xf32>
    %c0_22 = arith.constant 0 : index
    %c0_23 = arith.constant 0 : index
    %43 = vector.load %arg3[%c0_22, %c0_23] : memref<1152x128xbf16, #tpu.memory_space<vmem>>, vector<128x128xbf16>
    %44 = arith.truncf %42 : vector<256x128xf32> to vector<256x128xbf16>
    %cst_24 = arith.constant dense<0.000000e+00> : vector<256x128xf32>
    %45 = tpu.matmul %44, %43, %cst_24 {dimension_numbers = #tpu.dot_dimension_numbers<[1], [0], [0], [1], [0, 0, 1, 1], [], []>} : vector<256x128xbf16>, vector<128x128xbf16>, vector<256x128xf32> -> vector<256x128xf32>
    %46 = vector.extract_strided_slice %40 {offsets = [0, 1, 0], sizes = [16, 16, 128], strides = [1, 1, 1]} : vector<18x18x128xf32> to vector<16x16x128xf32>
    %47 = vector.shape_cast %46 : vector<16x16x128xf32> to vector<256x128xf32>
    %c128 = arith.constant 128 : index
    %c0_25 = arith.constant 0 : index
    %48 = vector.load %arg3[%c128, %c0_25] : memref<1152x128xbf16, #tpu.memory_space<vmem>>, vector<128x128xbf16>
    %49 = arith.truncf %47 : vector<256x128xf32> to vector<256x128xbf16>
    %cst_26 = arith.constant dense<0.000000e+00> : vector<256x128xf32>
    %50 = tpu.matmul %49, %48, %cst_26 {dimension_numbers = #tpu.dot_dimension_numbers<[1], [0], [0], [1], [0, 0, 1, 1], [], []>} : vector<256x128xbf16>, vector<128x128xbf16>, vector<256x128xf32> -> vector<256x128xf32>
    %51 = arith.addf %45, %50 : vector<256x128xf32>
    %52 = vector.extract_strided_slice %40 {offsets = [0, 2, 0], sizes = [16, 16, 128], strides = [1, 1, 1]} : vector<18x18x128xf32> to vector<16x16x128xf32>
    %53 = vector.shape_cast %52 : vector<16x16x128xf32> to vector<256x128xf32>
    %c256 = arith.constant 256 : index
    %c0_27 = arith.constant 0 : index
    %54 = vector.load %arg3[%c256, %c0_27] : memref<1152x128xbf16, #tpu.memory_space<vmem>>, vector<128x128xbf16>
    %55 = arith.truncf %53 : vector<256x128xf32> to vector<256x128xbf16>
    %cst_28 = arith.constant dense<0.000000e+00> : vector<256x128xf32>
    %56 = tpu.matmul %55, %54, %cst_28 {dimension_numbers = #tpu.dot_dimension_numbers<[1], [0], [0], [1], [0, 0, 1, 1], [], []>} : vector<256x128xbf16>, vector<128x128xbf16>, vector<256x128xf32> -> vector<256x128xf32>
    %57 = arith.addf %51, %56 : vector<256x128xf32>
    %58 = vector.extract_strided_slice %40 {offsets = [1, 0, 0], sizes = [16, 16, 128], strides = [1, 1, 1]} : vector<18x18x128xf32> to vector<16x16x128xf32>
    %59 = vector.shape_cast %58 : vector<16x16x128xf32> to vector<256x128xf32>
    %c384 = arith.constant 384 : index
    %c0_29 = arith.constant 0 : index
    %60 = vector.load %arg3[%c384, %c0_29] : memref<1152x128xbf16, #tpu.memory_space<vmem>>, vector<128x128xbf16>
    %61 = arith.truncf %59 : vector<256x128xf32> to vector<256x128xbf16>
    %cst_30 = arith.constant dense<0.000000e+00> : vector<256x128xf32>
    %62 = tpu.matmul %61, %60, %cst_30 {dimension_numbers = #tpu.dot_dimension_numbers<[1], [0], [0], [1], [0, 0, 1, 1], [], []>} : vector<256x128xbf16>, vector<128x128xbf16>, vector<256x128xf32> -> vector<256x128xf32>
    %63 = arith.addf %57, %62 : vector<256x128xf32>
    %64 = vector.extract_strided_slice %40 {offsets = [1, 1, 0], sizes = [16, 16, 128], strides = [1, 1, 1]} : vector<18x18x128xf32> to vector<16x16x128xf32>
    %65 = vector.shape_cast %64 : vector<16x16x128xf32> to vector<256x128xf32>
    %c512 = arith.constant 512 : index
    %c0_31 = arith.constant 0 : index
    %66 = vector.load %arg3[%c512, %c0_31] : memref<1152x128xbf16, #tpu.memory_space<vmem>>, vector<128x128xbf16>
    %67 = arith.truncf %65 : vector<256x128xf32> to vector<256x128xbf16>
    %cst_32 = arith.constant dense<0.000000e+00> : vector<256x128xf32>
    %68 = tpu.matmul %67, %66, %cst_32 {dimension_numbers = #tpu.dot_dimension_numbers<[1], [0], [0], [1], [0, 0, 1, 1], [], []>} : vector<256x128xbf16>, vector<128x128xbf16>, vector<256x128xf32> -> vector<256x128xf32>
    %69 = arith.addf %63, %68 : vector<256x128xf32>
    %70 = vector.extract_strided_slice %40 {offsets = [1, 2, 0], sizes = [16, 16, 128], strides = [1, 1, 1]} : vector<18x18x128xf32> to vector<16x16x128xf32>
    %71 = vector.shape_cast %70 : vector<16x16x128xf32> to vector<256x128xf32>
    %c640 = arith.constant 640 : index
    %c0_33 = arith.constant 0 : index
    %72 = vector.load %arg3[%c640, %c0_33] : memref<1152x128xbf16, #tpu.memory_space<vmem>>, vector<128x128xbf16>
    %73 = arith.truncf %71 : vector<256x128xf32> to vector<256x128xbf16>
    %cst_34 = arith.constant dense<0.000000e+00> : vector<256x128xf32>
    %74 = tpu.matmul %73, %72, %cst_34 {dimension_numbers = #tpu.dot_dimension_numbers<[1], [0], [0], [1], [0, 0, 1, 1], [], []>} : vector<256x128xbf16>, vector<128x128xbf16>, vector<256x128xf32> -> vector<256x128xf32>
    %75 = arith.addf %69, %74 : vector<256x128xf32>
    %76 = vector.extract_strided_slice %40 {offsets = [2, 0, 0], sizes = [16, 16, 128], strides = [1, 1, 1]} : vector<18x18x128xf32> to vector<16x16x128xf32>
    %77 = vector.shape_cast %76 : vector<16x16x128xf32> to vector<256x128xf32>
    %c768 = arith.constant 768 : index
    %c0_35 = arith.constant 0 : index
    %78 = vector.load %arg3[%c768, %c0_35] : memref<1152x128xbf16, #tpu.memory_space<vmem>>, vector<128x128xbf16>
    %79 = arith.truncf %77 : vector<256x128xf32> to vector<256x128xbf16>
    %cst_36 = arith.constant dense<0.000000e+00> : vector<256x128xf32>
    %80 = tpu.matmul %79, %78, %cst_36 {dimension_numbers = #tpu.dot_dimension_numbers<[1], [0], [0], [1], [0, 0, 1, 1], [], []>} : vector<256x128xbf16>, vector<128x128xbf16>, vector<256x128xf32> -> vector<256x128xf32>
    %81 = arith.addf %75, %80 : vector<256x128xf32>
    %82 = vector.extract_strided_slice %40 {offsets = [2, 1, 0], sizes = [16, 16, 128], strides = [1, 1, 1]} : vector<18x18x128xf32> to vector<16x16x128xf32>
    %83 = vector.shape_cast %82 : vector<16x16x128xf32> to vector<256x128xf32>
    %c896 = arith.constant 896 : index
    %c0_37 = arith.constant 0 : index
    %84 = vector.load %arg3[%c896, %c0_37] : memref<1152x128xbf16, #tpu.memory_space<vmem>>, vector<128x128xbf16>
    %85 = arith.truncf %83 : vector<256x128xf32> to vector<256x128xbf16>
    %cst_38 = arith.constant dense<0.000000e+00> : vector<256x128xf32>
    %86 = tpu.matmul %85, %84, %cst_38 {dimension_numbers = #tpu.dot_dimension_numbers<[1], [0], [0], [1], [0, 0, 1, 1], [], []>} : vector<256x128xbf16>, vector<128x128xbf16>, vector<256x128xf32> -> vector<256x128xf32>
    %87 = arith.addf %81, %86 : vector<256x128xf32>
    %88 = vector.extract_strided_slice %40 {offsets = [2, 2, 0], sizes = [16, 16, 128], strides = [1, 1, 1]} : vector<18x18x128xf32> to vector<16x16x128xf32>
    %89 = vector.shape_cast %88 : vector<16x16x128xf32> to vector<256x128xf32>
    %c1024 = arith.constant 1024 : index
    %c0_39 = arith.constant 0 : index
    %90 = vector.load %arg3[%c1024, %c0_39] : memref<1152x128xbf16, #tpu.memory_space<vmem>>, vector<128x128xbf16>
    %91 = arith.truncf %89 : vector<256x128xf32> to vector<256x128xbf16>
    %cst_40 = arith.constant dense<0.000000e+00> : vector<256x128xf32>
    %92 = tpu.matmul %91, %90, %cst_40 {dimension_numbers = #tpu.dot_dimension_numbers<[1], [0], [0], [1], [0, 0, 1, 1], [], []>} : vector<256x128xbf16>, vector<128x128xbf16>, vector<256x128xf32> -> vector<256x128xf32>
    %93 = arith.addf %87, %92 : vector<256x128xf32>
    %c0_41 = arith.constant 0 : index
    %c0_42 = arith.constant 0 : index
    %94 = vector.load %arg6[%c0_41, %c0_42] : memref<1x128xf32, #tpu.memory_space<vmem>>, vector<1x128xf32>
    %95 = vector.broadcast %94 : vector<1x128xf32> to vector<256x128xf32>
    %96 = arith.mulf %93, %95 : vector<256x128xf32>
    %c0_43 = arith.constant 0 : index
    %c0_44 = arith.constant 0 : index
    %97 = vector.load %arg7[%c0_43, %c0_44] : memref<1x128xf32, #tpu.memory_space<vmem>>, vector<1x128xf32>
    %98 = vector.broadcast %97 : vector<1x128xf32> to vector<256x128xf32>
    %99 = arith.addf %96, %98 : vector<256x128xf32>
    %c0_45 = arith.constant 0 : index
    %c0_46 = arith.constant 0 : index
    %c0_47 = arith.constant 0 : index
    %c0_48 = arith.constant 0 : index
    %100 = vector.load %arg1[%c0_45, %c0_46, %c0_47, %c0_48] : memref<1x16x16x8xbf16, #tpu.memory_space<vmem>>, vector<1x16x16x8xbf16>
    %101 = vector.shape_cast %100 : vector<1x16x16x8xbf16> to vector<16x16x8xbf16>
    %102 = vector.shape_cast %101 : vector<16x16x8xbf16> to vector<256x8xbf16>
    %103 = arith.extf %102 : vector<256x8xbf16> to vector<256x8xf32>
    %cst_49 = arith.constant 0.000000e+00 : f32
    %104 = vector.broadcast %cst_49 : f32 to vector<256x120xf32>
    %105 = tpu.concatenate %103, %104 in 1 : vector<256x8xf32>, vector<256x120xf32> -> vector<256x128xf32>
    %106 = arith.addf %99, %105 : vector<256x128xf32>
    %cst_50 = arith.constant 0.000000e+00 : f32
    %107 = vector.broadcast %cst_50 : f32 to vector<256x128xf32>
    %108 = arith.maximumf %106, %107 : vector<256x128xf32>
    %109 = tpu.transpose %108, [1, 0] : vector<256x128xf32> -> vector<128x256xf32>
    %110 = vector.extract_strided_slice %109 {offsets = [0, 0], sizes = [8, 256], strides = [1, 1]} : vector<128x256xf32> to vector<8x256xf32>
    %c0_51 = arith.constant 0 : index
    %c0_52 = arith.constant 0 : index
    %c0_53 = arith.constant 0 : index
    %111 = vector.load %arg8[%c0_51, %c0_52, %c0_53] : memref<1x8x256xf32, #tpu.memory_space<vmem>>, vector<1x8x256xf32>
    %112 = vector.shape_cast %111 : vector<1x8x256xf32> to vector<8x256xf32>
    %113 = vector.shape_cast %110 : vector<8x256xf32> to vector<1x8x256xf32>
    tpu.vector_store %arg8[%c0_51, %c0_52, %c0_53], %113 {strides = array<i32>} : memref<1x8x256xf32, #tpu.memory_space<vmem>>, vector<1x8x256xf32>,
    return
  }
  func.func @transform_0(%arg0: i32) -> (i32, i32, i32, i32) {
    %c0_i32 = arith.constant 0 : i32
    %c0_i32_0 = arith.constant 0 : i32
    %c0_i32_1 = arith.constant 0 : i32
    %c0_i32_2 = arith.constant 0 : i32
    return %arg0, %c0_i32, %c0_i32_0, %c0_i32_1 : i32, i32, i32, i32
  }
  func.func @transform_1(%arg0: i32) -> (i32, i32) {
    %c0_i32 = arith.constant 0 : i32
    %c0_i32_0 = arith.constant 0 : i32
    %c0_i32_1 = arith.constant 0 : i32
    return %c0_i32, %c0_i32_0 : i32, i32
  }
  func.func @transform_2(%arg0: i32) -> (i32, i32) {
    %c0_i32 = arith.constant 0 : i32
    %c0_i32_0 = arith.constant 0 : i32
    %c0_i32_1 = arith.constant 0 : i32
    return %c0_i32, %c0_i32_0 : i32, i32
  }
  func.func @transform_3(%arg0: i32) -> (i32, i32) {
    %c0_i32 = arith.constant 0 : i32
    %c0_i32_0 = arith.constant 0 : i32
    %c0_i32_1 = arith.constant 0 : i32
    return %c0_i32, %c0_i32_0 : i32, i32
  }
  func.func @transform_4(%arg0: i32) -> (i32, i32) {
    %c0_i32 = arith.constant 0 : i32
    %c0_i32_0 = arith.constant 0 : i32
    %c0_i32_1 = arith.constant 0 : i32
    return %c0_i32, %c0_i32_0 : i32, i32
  }
  func.func @transform_5(%arg0: i32) -> (i32, i32) {
    %c0_i32 = arith.constant 0 : i32
    %c0_i32_0 = arith.constant 0 : i32
    %c0_i32_1 = arith.constant 0 : i32
    return %c0_i32, %c0_i32_0 : i32, i32
  }
  func.func @transform_6(%arg0: i32) -> (i32, i32) {
    %c0_i32 = arith.constant 0 : i32
    %c0_i32_0 = arith.constant 0 : i32
    %c0_i32_1 = arith.constant 0 : i32
    return %c0_i32, %c0_i32_0 : i32, i32
  }
  func.func @transform_7(%arg0: i32) -> (i32, i32, i32) {
    %c0_i32 = arith.constant 0 : i32
    %c0_i32_0 = arith.constant 0 : i32
    %c0_i32_1 = arith.constant 0 : i32
    return %arg0, %c0_i32, %c0_i32_0 : i32, i32, i32
  }
}

</mosaic_0001>

<llo_original>
// kernel: basic_block_forward.1
$region0: #{basic_block_forward.1}
  #allocation0 [shape = 'u32[]', space=smem, size = 0x4, offset = 0x4, fixed_abs, tag = 'smem constant byte address 0x4 - core index']
  #allocation1 [shape = 'u32[144,128]{1,0:T(1,128)}', space=vmem, size = 0x12000, scoped, tag = 'internal scratch']
  #allocation2 [shape = 'f32[18,18,8]{2,1,0:T(8,128)}', space=vmem, size = 0x36000, scoped, tag = 'scratch operand']
  #allocation3 [shape = 'f32[18,18,128]{2,1,0:T(8,128)}', space=vmem, size = 0x36000, scoped, tag = 'scratch operand']
  %s0 = inlined_call_operand.vmem [shape: bf16[2,16,16,8], index: 0, kind: input, shape index: {}]
  %s1 = inlined_call_operand.vmem [shape: bf16[72,128], index: 1, kind: input, shape index: {}]
  %s2 = inlined_call_operand.vmem [shape: bf16[1152,128], index: 2, kind: input, shape index: {}]
  %s3 = inlined_call_operand.vmem [shape: f32[1,128], index: 3, kind: input, shape index: {}]
  %s4 = inlined_call_operand.vmem [shape: f32[1,128], index: 4, kind: input, shape index: {}]
  %s5 = inlined_call_operand.vmem [shape: f32[1,128], index: 5, kind: input, shape index: {}]
  %s6 = inlined_call_operand.vmem [shape: f32[1,128], index: 6, kind: input, shape index: {}]
  %s7 = inlined_call_operand.vmem [shape: f32[2,8,256], index: 7, kind: output, shape index: {}]
  %s8 = sld [smem:[#allocation0]]
  $region65: #{basic_block_forward.1} parent=0
    _
  %s10 = ssub.s32 1, %s8
  %s11 = scalar_select 0, %s10, %s8
  loop: start=0, step=1, limit=4
  $region2: #{basic_block_forward.1} parent=0 // loop_pre_header
    _
  $region3: #{basic_block_forward.1} parent=0 // loop_header
    %s13 = sphi 0, %s17
    %p14 = scmp.ge.s32.totalorder %s13, 4
    %s23 = sphi 0, %s25
    %s26 = sphi 0, %s23
    %s27 = sphi 0, %s26
    %s43 = sphi 0, %s27
    %s47 = sphi 0, %s47
    %s49 = sphi 0, %s47
    %s50 = sphi 0, %s49
    %s64 = sphi 0, %s50
    %s68 = sphi 0, %s68
    %s70 = sphi 0, %s68
    %s71 = sphi 0, %s70
    %s85 = sphi 0, %s71
    %s89 = sphi 0, %s89
    %s91 = sphi 0, %s89
    %s92 = sphi 0, %s91
    %s106 = sphi 0, %s92
    %s110 = sphi 0, %s110
    %s112 = sphi 0, %s110
    %s113 = sphi 0, %s112
    %s127 = sphi 0, %s113
    %s131 = sphi 0, %s131
    %s133 = sphi 0, %s131
    %s134 = sphi 0, %s133
    %s148 = sphi 0, %s134
    %s152 = sphi 0, %s152
    %s154 = sphi 0, %s152
    %s155 = sphi 0, %s154
    %s169 = sphi 0, %s155
    %s175 = sphi 0, %s177
    %s178 = sphi 0, %s175
    %s179 = sphi 0, %s178
    %s195 = sphi 0, %s179
  $region4: #{basic_block_forward.1} parent=0 // loop_header_branch
    %16 = sbr.rel (%p14) target = $region8
  $region5: #{basic_block_forward.1} parent=0 // loop_body
    %s18 = ssub.s32 %s13, 1
    %s19 = ssub.s32 %s13, 2
    %s20 = sadd.s32 %s13, 1
    %s21 = ssub.s32 %s13, %s20
    %p22 = scmp.eq.s32.totalorder %s21, 0
    %s24 = sadd.s32 %s23, 1
    %s25 = scalar_select %p22, %s23, %s24
    %p28 = pneg %p22
    %p29 = scmp.eq.s32.totalorder %s13, 1
    %p30 = por %p28, %p29
    %p31 = scmp.ne.s32.totalorder %s23, %s26
    %p32 = scmp.eq.s32.totalorder %s13, 0
    %p33 = por %p31, %p32
    %p34 = scmp.ne.s32.totalorder %s23, %s26
    %p35 = scmp.eq.s32.totalorder %s18, 1
    %p36 = por %p34, %p35
    %p37 = scmp.ne.s32.totalorder %s26, %s27
    %p38 = scmp.eq.s32.totalorder %s18, 0
    %p39 = por %p37, %p38
    %p40 = scmp.ne.s32.totalorder %s26, %s27
    %p41 = scmp.eq.s32.totalorder %s19, 1
    %p42 = por %p40, %p41
    %p44 = scmp.ne.s32.totalorder %s27, %s43
    %p45 = scmp.eq.s32.totalorder %s19, 0
    %p46 = por %p44, %p45
    %s48 = sadd.s32 %s47, 1
    %p51 = scmp.eq.s32.totalorder %s13, 1
    %p52 = scmp.ne.s32.totalorder %s47, %s49
    %p53 = scmp.eq.s32.totalorder %s13, 0
    %p54 = por %p52, %p53
    %p55 = scmp.ne.s32.totalorder %s47, %s49
    %p56 = scmp.eq.s32.totalorder %s18, 1
    %p57 = por %p55, %p56
    %p58 = scmp.ne.s32.totalorder %s49, %s50
    %p59 = scmp.eq.s32.totalorder %s18, 0
    %p60 = por %p58, %p59
    %p61 = scmp.ne.s32.totalorder %s49, %s50
    %p62 = scmp.eq.s32.totalorder %s19, 1
    %p63 = por %p61, %p62
    %p65 = scmp.ne.s32.totalorder %s50, %s64
    %p66 = scmp.eq.s32.totalorder %s19, 0
    %p67 = por %p65, %p66
    %s69 = sadd.s32 %s68, 1
    %p72 = scmp.eq.s32.totalorder %s13, 1
    %p73 = scmp.ne.s32.totalorder %s68, %s70
    %p74 = scmp.eq.s32.totalorder %s13, 0
    %p75 = por %p73, %p74
    %p76 = scmp.ne.s32.totalorder %s68, %s70
    %p77 = scmp.eq.s32.totalorder %s18, 1
    %p78 = por %p76, %p77
    %p79 = scmp.ne.s32.totalorder %s70, %s71
    %p80 = scmp.eq.s32.totalorder %s18, 0
    %p81 = por %p79, %p80
    %p82 = scmp.ne.s32.totalorder %s70, %s71
    %p83 = scmp.eq.s32.totalorder %s19, 1
    %p84 = por %p82, %p83
    %p86 = scmp.ne.s32.totalorder %s71, %s85
    %p87 = scmp.eq.s32.totalorder %s19, 0
    %p88 = por %p86, %p87
    %s90 = sadd.s32 %s89, 1
    %p93 = scmp.eq.s32.totalorder %s13, 1
    %p94 = scmp.ne.s32.totalorder %s89, %s91
    %p95 = scmp.eq.s32.totalorder %s13, 0
    %p96 = por %p94, %p95
    %p97 = scmp.ne.s32.totalorder %s89, %s91
    %p98 = scmp.eq.s32.totalorder %s18, 1
    %p99 = por %p97, %p98
    %p100 = scmp.ne.s32.totalorder %s91, %s92
    %p101 = scmp.eq.s32.totalorder %s18, 0
    %p102 = por %p100, %p101
    %p103 = scmp.ne.s32.totalorder %s91, %s92
    %p104 = scmp.eq.s32.totalorder %s19, 1
    %p105 = por %p103, %p104
    %p107 = scmp.ne.s32.totalorder %s92, %s106
    %p108 = scmp.eq.s32.totalorder %s19, 0
    %p109 = por %p107, %p108
    %s111 = sadd.s32 %s110, 1
    %p114 = scmp.eq.s32.totalorder %s13, 1
    %p115 = scmp.ne.s32.totalorder %s110, %s112
    %p116 = scmp.eq.s32.totalorder %s13, 0
    %p117 = por %p115, %p116
    %p118 = scmp.ne.s32.totalorder %s110, %s112
    %p119 = scmp.eq.s32.totalorder %s18, 1
    %p120 = por %p118, %p119
    %p121 = scmp.ne.s32.totalorder %s112, %s113
    %p122 = scmp.eq.s32.totalorder %s18, 0
    %p123 = por %p121, %p122
    %p124 = scmp.ne.s32.totalorder %s112, %s113
    %p125 = scmp.eq.s32.totalorder %s19, 1
    %p126 = por %p124, %p125
    %p128 = scmp.ne.s32.totalorder %s113, %s127
    %p129 = scmp.eq.s32.totalorder %s19, 0
    %p130 = por %p128, %p129
    %s132 = sadd.s32 %s131, 1
    %p135 = scmp.eq.s32.totalorder %s13, 1
    %p136 = scmp.ne.s32.totalorder %s131, %s133
    %p137 = scmp.eq.s32.totalorder %s13, 0
    %p138 = por %p136, %p137
    %p139 = scmp.ne.s32.totalorder %s131, %s133
    %p140 = scmp.eq.s32.totalorder %s18, 1
    %p141 = por %p139, %p140
    %p142 = scmp.ne.s32.totalorder %s133, %s134
    %p143 = scmp.eq.s32.totalorder %s18, 0
    %p144 = por %p142, %p143
    %p145 = scmp.ne.s32.totalorder %s133, %s134
    %p146 = scmp.eq.s32.totalorder %s19, 1
    %p147 = por %p145, %p146
    %p149 = scmp.ne.s32.totalorder %s134, %s148
    %p150 = scmp.eq.s32.totalorder %s19, 0
    %p151 = por %p149, %p150
    %s153 = sadd.s32 %s152, 1
    %p156 = scmp.eq.s32.totalorder %s13, 1
    %p157 = scmp.ne.s32.totalorder %s152, %s154
    %p158 = scmp.eq.s32.totalorder %s13, 0
    %p159 = por %p157, %p158
    %p160 = scmp.ne.s32.totalorder %s152, %s154
    %p161 = scmp.eq.s32.totalorder %s18, 1
    %p162 = por %p160, %p161
    %p163 = scmp.ne.s32.totalorder %s154, %s155
    %p164 = scmp.eq.s32.totalorder %s18, 0
    %p165 = por %p163, %p164
    %p166 = scmp.ne.s32.totalorder %s154, %s155
    %p167 = scmp.eq.s32.totalorder %s19, 1
    %p168 = por %p166, %p167
    %p170 = scmp.ne.s32.totalorder %s155, %s169
    %p171 = scmp.eq.s32.totalorder %s19, 0
    %p172 = por %p170, %p171
    %s173 = ssub.s32 %s13, %s20
    %p174 = scmp.eq.s32.totalorder %s173, 0
    %s176 = sadd.s32 %s175, 1
    %s177 = scalar_select %p174, %s175, %s176
    %p180 = pneg %p174
    %p181 = scmp.eq.s32.totalorder %s13, 1
    %p182 = por %p180, %p181
    %p183 = scmp.ne.s32.totalorder %s175, %s178
    %p184 = scmp.eq.s32.totalorder %s13, 0
    %p185 = por %p183, %p184
    %p186 = scmp.ne.s32.totalorder %s175, %s178
    %p187 = scmp.eq.s32.totalorder %s18, 1
    %p188 = por %p186, %p187
    %p189 = scmp.ne.s32.totalorder %s178, %s179
    %p190 = scmp.eq.s32.totalorder %s18, 0
    %p191 = por %p189, %p190
    %p192 = scmp.ne.s32.totalorder %s178, %s179
    %p193 = scmp.eq.s32.totalorder %s19, 1
    %p194 = por %p192, %p193
    %p196 = scmp.ne.s32.totalorder %s179, %s195
    %p197 = scmp.eq.s32.totalorder %s19, 0
    %p198 = por %p196, %p197
    %p199 = scmp.le.s32.totalorder 1, %s13
    %p200 = scmp.lt.s32.totalorder %s13, 3
    %p201 = pnand %p199, %p200
    %p202 = pneg %p201
    // Predicated region
    $region9: #{basic_block_forward.1} parent=5 // pred_check
      _
    $region10: #{basic_block_forward.1} parent=5 // pred_check_branch
      %204 = sbr.rel (%p201) target = $region12
    $region11: #{basic_block_forward.1} parent=5 // pred_region
      %s205 = ssub.s32 %s13, 1
      // Predicated region
      $region13: #{basic_block_forward.1} parent=11 // pred_check
        %p206 = pneg %p60
      $region14: #{basic_block_forward.1} parent=11 // pred_check_branch
        %208 = sbr.rel (%p206) target = $region16
      $region15: #{basic_block_forward.1} parent=11 // pred_region
        _
      $region16: #{basic_block_forward.1} parent=11 // pred_fallthru
        _
      // Predicated region
      $region17: #{basic_block_forward.1} parent=11 // pred_check
        %p209 = pneg %p81
      $region18: #{basic_block_forward.1} parent=11 // pred_check_branch
        %211 = sbr.rel (%p209) target = $region20
      $region19: #{basic_block_forward.1} parent=11 // pred_region
        _
      $region20: #{basic_block_forward.1} parent=11 // pred_fallthru
        _
      // Predicated region
      $region21: #{basic_block_forward.1} parent=11 // pred_check
        %p212 = pneg %p102
      $region22: #{basic_block_forward.1} parent=11 // pred_check_branch
        %214 = sbr.rel (%p212) target = $region24
      $region23: #{basic_block_forward.1} parent=11 // pred_region
        _
      $region24: #{basic_block_forward.1} parent=11 // pred_fallthru
        _
      // Predicated region
      $region25: #{basic_block_forward.1} parent=11 // pred_check
        %p215 = pneg %p123
      $region26: #{basic_block_forward.1} parent=11 // pred_check_branch
        %217 = sbr.rel (%p215) target = $region28
      $region27: #{basic_block_forward.1} parent=11 // pred_region
        _
      $region28: #{basic_block_forward.1} parent=11 // pred_fallthru
        _
      // Predicated region
      $region29: #{basic_block_forward.1} parent=11 // pred_check
        %p218 = pneg %p144
      $region30: #{basic_block_forward.1} parent=11 // pred_check_branch
        %220 = sbr.rel (%p218) target = $region32
      $region31: #{basic_block_forward.1} parent=11 // pred_region
        _
      $region32: #{basic_block_forward.1} parent=11 // pred_fallthru
        _
      // Predicated region
      $region33: #{basic_block_forward.1} parent=11 // pred_check
        %p221 = pneg %p165
      $region34: #{basic_block_forward.1} parent=11 // pred_check_branch
        %223 = sbr.rel (%p221) target = $region36
      $region35: #{basic_block_forward.1} parent=11 // pred_region
        _
      $region36: #{basic_block_forward.1} parent=11 // pred_fallthru
        _
    $region12: #{basic_block_forward.1} parent=5 // pred_fallthru
      _
    %p224 = scmp.lt.s32.totalorder %s13, 2
    // Predicated region
    $region37: #{basic_block_forward.1} parent=5 // pred_check
      %p225 = pneg %p224
    $region38: #{basic_block_forward.1} parent=5 // pred_check_branch
      %227 = sbr.rel (%p225) target = $region40
    $region39: #{basic_block_forward.1} parent=5 // pred_region
      // Predicated region
      $region41: #{basic_block_forward.1} parent=39 // pred_check
        %p228 = pneg %p33
      $region42: #{basic_block_forward.1} parent=39 // pred_check_branch
        %230 = sbr.rel (%p228) target = $region44
      $region43: #{basic_block_forward.1} parent=39 // pred_region
        %p231 = scmp.lt.s32.totalorder %s13, 1
        %s232 = scalar_select %p231, %s13, 1
        %s233 = smul.addr %s232, 32
        %s234 = smul.addr %s233, 4
        %s235 = scalar_lea.vmem %s0, %s234
      $region44: #{basic_block_forward.1} parent=39 // pred_fallthru
        _
    $region40: #{basic_block_forward.1} parent=5 // pred_fallthru
      _
    %p236 = scmp.le.s32.totalorder 1, %s13
    %p237 = scmp.lt.s32.totalorder %s13, 3
    %p238 = pnand %p236, %p237
    %p239 = pneg %p238
    // Predicated region
    $region45: #{basic_block_forward.1} parent=5 // pred_check
      _
    $region46: #{basic_block_forward.1} parent=5 // pred_check_branch
      %241 = sbr.rel (%p238) target = $region48
    $region47: #{basic_block_forward.1} parent=5 // pred_region
      %s242 = ssub.s32 %s13, 1
      %p243 = scmp.lt.s32.totalorder %s18, 1
      %s244 = scalar_select %p243, %s18, 1
      %s245 = smul.addr %s244, 32
      %s246 = smul.addr %s245, 4
      %s247 = scalar_lea.vmem %s0, %s246
      %p248 = pneg %p39
      %p249 = pneg %p36
      %p250 = pneg %p60
      %p251 = pneg %p57
      %p252 = pneg %p81
      %p253 = pneg %p78
      %p254 = pneg %p102
      %p255 = pneg %p99
      %p256 = pneg %p123
      %p257 = pneg %p120
      %p258 = pneg %p144
      %p259 = pneg %p141
      %p260 = pneg %p165
      %p261 = pneg %p162
      %p262 = pneg %p191
      %p263 = pneg %p188
      %p264 = scmp.lt.s32.totalorder %s18, 1
      %s265 = scalar_select %p264, %s18, 1
      %s266 = smul.addr %s265, 2
      %s267 = smul.addr %s266, 8
      %s268 = scalar_lea.vmem %s7, %s267
      %p269 = scmp.lt.s32.totalorder %s18, 1
      %s270 = scalar_select %p269, %s18, 1
      %s271 = smul.addr %s270, 32
      %s272 = smul.addr %s271, 4
      %s273 = scalar_lea.vmem %s0, %s272
      %p274 = scmp.lt.s32.totalorder %s18, 1
      %s275 = scalar_select %p274, %s18, 1
      %s276 = smul.addr %s275, 2
      %s277 = smul.addr %s276, 8
      %s278 = scalar_lea.vmem %s7, %s277
      %p280 = scmp.eq.s32.totalorder %s18, 0
      // Predicated region
      $region49: #{basic_block_forward.1} parent=47 // pred_check
        %p281 = pneg %p280
      $region50: #{basic_block_forward.1} parent=47 // pred_check_branch
        %283 = sbr.rel (%p281) target = $region52
      $region51: #{basic_block_forward.1} parent=47 // pred_region
        %vm284 = vcmask 64512
        %285 = vst.msk [vmem:[#allocation2] sm:$0xff] %vm284, 0.0
        %286 = vst.msk [vmem:[#allocation2 + $0x8] sm:$0xff] %vm284, 0.0
        %vm287 = vcmask 58368
        %288 = vst.msk [vmem:[#allocation2 + $0x10] sm:$0x3] %vm287, 0.0
        %289 = vst.msk [vmem:[#allocation2 + $0x18] sm:$0xff] %vm284, 0.0
        %290 = vst.msk [vmem:[#allocation2 + $0x20] sm:$0xff] %vm284, 0.0
        %291 = vst.msk [vmem:[#allocation2 + $0x28] sm:$0x3] %vm287, 0.0
        %292 = vst.msk [vmem:[#allocation2 + $0x30] sm:$0xff] %vm284, 0.0
        %293 = vst.msk [vmem:[#allocation2 + $0x38] sm:$0xff] %vm284, 0.0
        %294 = vst.msk [vmem:[#allocation2 + $0x40] sm:$0x3] %vm287, 0.0
        %295 = vst.msk [vmem:[#allocation2 + $0x48] sm:$0xff] %vm284, 0.0
        %296 = vst.msk [vmem:[#allocation2 + $0x50] sm:$0xff] %vm284, 0.0
        %297 = vst.msk [vmem:[#allocation2 + $0x58] sm:$0x3] %vm287, 0.0
        %298 = vst.msk [vmem:[#allocation2 + $0x60] sm:$0xff] %vm284, 0.0
        %299 = vst.msk [vmem:[#allocation2 + $0x68] sm:$0xff] %vm284, 0.0
        %300 = vst.msk [vmem:[#allocation2 + $0x70] sm:$0x3] %vm287, 0.0
        %301 = vst.msk [vmem:[#allocation2 + $0x78] sm:$0xff] %vm284, 0.0
        %302 = vst.msk [vmem:[#allocation2 + $0x80] sm:$0xff] %vm284, 0.0
        %303 = vst.msk [vmem:[#allocation2 + $0x88] sm:$0x3] %vm287, 0.0
        %304 = vst.msk [vmem:[#allocation2 + $0x90] sm:$0xff] %vm284, 0.0
        %305 = vst.msk [vmem:[#allocation2 + $0x98] sm:$0xff] %vm284, 0.0
        %306 = vst.msk [vmem:[#allocation2 + $0xa0] sm:$0x3] %vm287, 0.0
        %307 = vst.msk [vmem:[#allocation2 + $0xa8] sm:$0xff] %vm284, 0.0
        %308 = vst.msk [vmem:[#allocation2 + $0xb0] sm:$0xff] %vm284, 0.0
        %309 = vst.msk [vmem:[#allocation2 + $0xb8] sm:$0x3] %vm287, 0.0
        %310 = vst.msk [vmem:[#allocation2 + $0xc0] sm:$0xff] %vm284, 0.0
        %311 = vst.msk [vmem:[#allocation2 + $0xc8] sm:$0xff] %vm284, 0.0
        %312 = vst.msk [vmem:[#allocation2 + $0xd0] sm:$0x3] %vm287, 0.0
        %313 = vst.msk [vmem:[#allocation2 + $0xd8] sm:$0xff] %vm284, 0.0
        %314 = vst.msk [vmem:[#allocation2 + $0xe0] sm:$0xff] %vm284, 0.0
        %315 = vst.msk [vmem:[#allocation2 + $0xe8] sm:$0x3] %vm287, 0.0
        %316 = vst.msk [vmem:[#allocation2 + $0xf0] sm:$0xff] %vm284, 0.0
        %317 = vst.msk [vmem:[#allocation2 + $0xf8] sm:$0xff] %vm284, 0.0
        %318 = vst.msk [vmem:[#allocation2 + $0x100] sm:$0x3] %vm287, 0.0
        %319 = vst.msk [vmem:[#allocation2 + $0x108] sm:$0xff] %vm284, 0.0
        %320 = vst.msk [vmem:[#allocation2 + $0x110] sm:$0xff] %vm284, 0.0
        %321 = vst.msk [vmem:[#allocation2 + $0x118] sm:$0x3] %vm287, 0.0
        %322 = vst.msk [vmem:[#allocation2 + $0x120] sm:$0xff] %vm284, 0.0
        %323 = vst.msk [vmem:[#allocation2 + $0x128] sm:$0xff] %vm284, 0.0
        %324 = vst.msk [vmem:[#allocation2 + $0x130] sm:$0x3] %vm287, 0.0
        %325 = vst.msk [vmem:[#allocation2 + $0x138] sm:$0xff] %vm284, 0.0
        %326 = vst.msk [vmem:[#allocation2 + $0x140] sm:$0xff] %vm284, 0.0
        %327 = vst.msk [vmem:[#allocation2 + $0x148] sm:$0x3] %vm287, 0.0
        %328 = vst.msk [vmem:[#allocation2 + $0x150] sm:$0xff] %vm284, 0.0
        %329 = vst.msk [vmem:[#allocation2 + $0x158] sm:$0xff] %vm284, 0.0
        %330 = vst.msk [vmem:[#allocation2 + $0x160] sm:$0x3] %vm287, 0.0
        %331 = vst.msk [vmem:[#allocation2 + $0x168] sm:$0xff] %vm284, 0.0
        %332 = vst.msk [vmem:[#allocation2 + $0x170] sm:$0xff] %vm284, 0.0
        %333 = vst.msk [vmem:[#allocation2 + $0x178] sm:$0x3] %vm287, 0.0
        %334 = vst.msk [vmem:[#allocation2 + $0x180] sm:$0xff] %vm284, 0.0
        %335 = vst.msk [vmem:[#allocation2 + $0x188] sm:$0xff] %vm284, 0.0
        %336 = vst.msk [vmem:[#allocation2 + $0x190] sm:$0x3] %vm287, 0.0
        %337 = vst.msk [vmem:[#allocation2 + $0x198] sm:$0xff] %vm284, 0.0
        %338 = vst.msk [vmem:[#allocation2 + $0x1a0] sm:$0xff] %vm284, 0.0
        %339 = vst.msk [vmem:[#allocation2 + $0x1a8] sm:$0x3] %vm287, 0.0
        %340 = vst [vmem:[#allocation3] sm:$0xff] 0.0
        %341 = vst [vmem:[#allocation3 + $0x8] sm:$0xff] 0.0
        %342 = vst [vmem:[#allocation3 + $0x10] sm:$0x3] 0.0
        %343 = vst [vmem:[#allocation3 + $0x18] sm:$0xff] 0.0
        %344 = vst [vmem:[#allocation3 + $0x20] sm:$0xff] 0.0
        %345 = vst [vmem:[#allocation3 + $0x28] sm:$0x3] 0.0
        %346 = vst [vmem:[#allocation3 + $0x30] sm:$0xff] 0.0
        %347 = vst [vmem:[#allocation3 + $0x38] sm:$0xff] 0.0
        %348 = vst [vmem:[#allocation3 + $0x40] sm:$0x3] 0.0
        %349 = vst [vmem:[#allocation3 + $0x48] sm:$0xff] 0.0
        %350 = vst [vmem:[#allocation3 + $0x50] sm:$0xff] 0.0
        %351 = vst [vmem:[#allocation3 + $0x58] sm:$0x3] 0.0
        %352 = vst [vmem:[#allocation3 + $0x60] sm:$0xff] 0.0
        %353 = vst [vmem:[#allocation3 + $0x68] sm:$0xff] 0.0
        %354 = vst [vmem:[#allocation3 + $0x70] sm:$0x3] 0.0
        %355 = vst [vmem:[#allocation3 + $0x78] sm:$0xff] 0.0
        %356 = vst [vmem:[#allocation3 + $0x80] sm:$0xff] 0.0
        %357 = vst [vmem:[#allocation3 + $0x88] sm:$0x3] 0.0
        %358 = vst [vmem:[#allocation3 + $0x90] sm:$0xff] 0.0
        %359 = vst [vmem:[#allocation3 + $0x98] sm:$0xff] 0.0
        %360 = vst [vmem:[#allocation3 + $0xa0] sm:$0x3] 0.0
        %361 = vst [vmem:[#allocation3 + $0xa8] sm:$0xff] 0.0
        %362 = vst [vmem:[#allocation3 + $0xb0] sm:$0xff] 0.0
        %363 = vst [vmem:[#allocation3 + $0xb8] sm:$0x3] 0.0
        %364 = vst [vmem:[#allocation3 + $0xc0] sm:$0xff] 0.0
        %365 = vst [vmem:[#allocation3 + $0xc8] sm:$0xff] 0.0
        %366 = vst [vmem:[#allocation3 + $0xd0] sm:$0x3] 0.0
        %367 = vst [vmem:[#allocation3 + $0xd8] sm:$0xff] 0.0
        %368 = vst [vmem:[#allocation3 + $0xe0] sm:$0xff] 0.0
        %369 = vst [vmem:[#allocation3 + $0xe8] sm:$0x3] 0.0
        %370 = vst [vmem:[#allocation3 + $0xf0] sm:$0xff] 0.0
        %371 = vst [vmem:[#allocation3 + $0xf8] sm:$0xff] 0.0
        %372 = vst [vmem:[#allocation3 + $0x100] sm:$0x3] 0.0
        %373 = vst [vmem:[#allocation3 + $0x108] sm:$0xff] 0.0
        %374 = vst [vmem:[#allocation3 + $0x110] sm:$0xff] 0.0
        %375 = vst [vmem:[#allocation3 + $0x118] sm:$0x3] 0.0
        %376 = vst [vmem:[#allocation3 + $0x120] sm:$0xff] 0.0
        %377 = vst [vmem:[#allocation3 + $0x128] sm:$0xff] 0.0
        %378 = vst [vmem:[#allocation3 + $0x130] sm:$0x3] 0.0
        %379 = vst [vmem:[#allocation3 + $0x138] sm:$0xff] 0.0
        %380 = vst [vmem:[#allocation3 + $0x140] sm:$0xff] 0.0
        %381 = vst [vmem:[#allocation3 + $0x148] sm:$0x3] 0.0
        %382 = vst [vmem:[#allocation3 + $0x150] sm:$0xff] 0.0
        %383 = vst [vmem:[#allocation3 + $0x158] sm:$0xff] 0.0
        %384 = vst [vmem:[#allocation3 + $0x160] sm:$0x3] 0.0
        %385 = vst [vmem:[#allocation3 + $0x168] sm:$0xff] 0.0
        %386 = vst [vmem:[#allocation3 + $0x170] sm:$0xff] 0.0
        %387 = vst [vmem:[#allocation3 + $0x178] sm:$0x3] 0.0
        %388 = vst [vmem:[#allocation3 + $0x180] sm:$0xff] 0.0
        %389 = vst [vmem:[#allocation3 + $0x188] sm:$0xff] 0.0
        %390 = vst [vmem:[#allocation3 + $0x190] sm:$0x3] 0.0
        %391 = vst [vmem:[#allocation3 + $0x198] sm:$0xff] 0.0
        %392 = vst [vmem:[#allocation3 + $0x1a0] sm:$0xff] 0.0
        %393 = vst [vmem:[#allocation3 + $0x1a8] sm:$0x3] 0.0
      $region52: #{basic_block_forward.1} parent=47 // pred_fallthru
        _
      %v394 = vld [vmem:[%s273] sm:$0xf]
      %v395 = vld [vmem:[%s273 + $0x4] sm:$0xf]
      %v396 = vld [vmem:[%s273 + $0x8] sm:$0xf]
      %v397 = vld [vmem:[%s273 + $0xc] sm:$0xf]
      %v398 = vld [vmem:[%s273 + $0x10] sm:$0xf]
      %v399 = vld [vmem:[%s273 + $0x14] sm:$0xf]
      %v400 = vld [vmem:[%s273 + $0x18] sm:$0xf]
      %v401 = vld [vmem:[%s273 + $0x1c] sm:$0xf]
      %v402 = vld [vmem:[%s273 + $0x20] sm:$0xf]
      %v403 = vld [vmem:[%s273 + $0x24] sm:$0xf]
      %v404 = vld [vmem:[%s273 + $0x28] sm:$0xf]
      %v405 = vld [vmem:[%s273 + $0x2c] sm:$0xf]
      %v406 = vld [vmem:[%s273 + $0x30] sm:$0xf]
      %v407 = vld [vmem:[%s273 + $0x34] sm:$0xf]
      %v408 = vld [vmem:[%s273 + $0x38] sm:$0xf]
      %v409 = vld [vmem:[%s273 + $0x3c] sm:$0xf]
      %v410 = vld [vmem:[%s273 + $0x40] sm:$0xf]
      %v411 = vld [vmem:[%s273 + $0x44] sm:$0xf]
      %v412 = vld [vmem:[%s273 + $0x48] sm:$0xf]
      %v413 = vld [vmem:[%s273 + $0x4c] sm:$0xf]
      %v414 = vld [vmem:[%s273 + $0x50] sm:$0xf]
      %v415 = vld [vmem:[%s273 + $0x54] sm:$0xf]
      %v416 = vld [vmem:[%s273 + $0x58] sm:$0xf]
      %v417 = vld [vmem:[%s273 + $0x5c] sm:$0xf]
      %v418 = vld [vmem:[%s273 + $0x60] sm:$0xf]
      %v419 = vld [vmem:[%s273 + $0x64] sm:$0xf]
      %v420 = vld [vmem:[%s273 + $0x68] sm:$0xf]
      %v421 = vld [vmem:[%s273 + $0x6c] sm:$0xf]
      %v422 = vld [vmem:[%s273 + $0x70] sm:$0xf]
      %v423 = vld [vmem:[%s273 + $0x74] sm:$0xf]
      %v424 = vld [vmem:[%s273 + $0x78] sm:$0xf]
      %v425 = vld [vmem:[%s273 + $0x7c] sm:$0xf]
      %v426 = vunpack.c.l.bf16 %v394
      %v427 = vunpack.c.l.bf16 %v395
      %v428 = vunpack.c.l.bf16 %v396
      %v429 = vunpack.c.l.bf16 %v397
      %v430 = vunpack.c.l.bf16 %v398
      %v431 = vunpack.c.l.bf16 %v399
      %v432 = vunpack.c.l.bf16 %v400
      %v433 = vunpack.c.l.bf16 %v401
      %v434 = vunpack.c.l.bf16 %v402
      %v435 = vunpack.c.l.bf16 %v403
      %v436 = vunpack.c.l.bf16 %v404
      %v437 = vunpack.c.l.bf16 %v405
      %v438 = vunpack.c.l.bf16 %v406
      %v439 = vunpack.c.l.bf16 %v407
      %v440 = vunpack.c.l.bf16 %v408
      %v441 = vunpack.c.l.bf16 %v409
      %v442 = vunpack.c.l.bf16 %v410
      %v443 = vunpack.c.l.bf16 %v411
      %v444 = vunpack.c.l.bf16 %v412
      %v445 = vunpack.c.l.bf16 %v413
      %v446 = vunpack.c.l.bf16 %v414
      %v447 = vunpack.c.l.bf16 %v415
      %v448 = vunpack.c.l.bf16 %v416
      %v449 = vunpack.c.l.bf16 %v417
      %v450 = vunpack.c.l.bf16 %v418
      %v451 = vunpack.c.l.bf16 %v419
      %v452 = vunpack.c.l.bf16 %v420
      %v453 = vunpack.c.l.bf16 %v421
      %v454 = vunpack.c.l.bf16 %v422
      %v455 = vunpack.c.l.bf16 %v423
      %v456 = vunpack.c.l.bf16 %v424
      %v457 = vunpack.c.l.bf16 %v425
      %s458 = scalar_lea.vmem [#allocation2], 24
      %vm459 = vcmask 64512
      %460 = vst.msk [vmem:[%s458 + $0x1] sm:$0xff] %vm459, %v426
      %461 = vst.msk [vmem:[%s458 + $0x9] sm:$0xff] %vm459, %v427
      %462 = vst.msk [vmem:[%s458 + $0x19] sm:$0xff] %vm459, %v428
      %463 = vst.msk [vmem:[%s458 + $0x21] sm:$0xff] %vm459, %v429
      %464 = vst.msk [vmem:[%s458 + $0x31] sm:$0xff] %vm459, %v430
      %465 = vst.msk [vmem:[%s458 + $0x39] sm:$0xff] %vm459, %v431
      %466 = vst.msk [vmem:[%s458 + $0x49] sm:$0xff] %vm459, %v432
      %467 = vst.msk [vmem:[%s458 + $0x51] sm:$0xff] %vm459, %v433
      %468 = vst.msk [vmem:[%s458 + $0x61] sm:$0xff] %vm459, %v434
      %469 = vst.msk [vmem:[%s458 + $0x69] sm:$0xff] %vm459, %v435
      %470 = vst.msk [vmem:[%s458 + $0x79] sm:$0xff] %vm459, %v436
      %471 = vst.msk [vmem:[%s458 + $0x81] sm:$0xff] %vm459, %v437
      %472 = vst.msk [vmem:[%s458 + $0x91] sm:$0xff] %vm459, %v438
      %473 = vst.msk [vmem:[%s458 + $0x99] sm:$0xff] %vm459, %v439
      %474 = vst.msk [vmem:[%s458 + $0xa9] sm:$0xff] %vm459, %v440
      %475 = vst.msk [vmem:[%s458 + $0xb1] sm:$0xff] %vm459, %v441
      %476 = vst.msk [vmem:[%s458 + $0xc1] sm:$0xff] %vm459, %v442
      %477 = vst.msk [vmem:[%s458 + $0xc9] sm:$0xff] %vm459, %v443
      %478 = vst.msk [vmem:[%s458 + $0xd9] sm:$0xff] %vm459, %v444
      %479 = vst.msk [vmem:[%s458 + $0xe1] sm:$0xff] %vm459, %v445
      %480 = vst.msk [vmem:[%s458 + $0xf1] sm:$0xff] %vm459, %v446
      %481 = vst.msk [vmem:[%s458 + $0xf9] sm:$0xff] %vm459, %v447
      %482 = vst.msk [vmem:[%s458 + $0x109] sm:$0xff] %vm459, %v448
      %483 = vst.msk [vmem:[%s458 + $0x111] sm:$0xff] %vm459, %v449
      %484 = vst.msk [vmem:[%s458 + $0x121] sm:$0xff] %vm459, %v450
      %485 = vst.msk [vmem:[%s458 + $0x129] sm:$0xff] %vm459, %v451
      %486 = vst.msk [vmem:[%s458 + $0x139] sm:$0xff] %vm459, %v452
      %487 = vst.msk [vmem:[%s458 + $0x141] sm:$0xff] %vm459, %v453
      %488 = vst.msk [vmem:[%s458 + $0x151] sm:$0xff] %vm459, %v454
      %489 = vst.msk [vmem:[%s458 + $0x159] sm:$0xff] %vm459, %v455
      %490 = vst.msk [vmem:[%s458 + $0x169] sm:$0xff] %vm459, %v456
      %491 = vst.msk [vmem:[%s458 + $0x171] sm:$0xff] %vm459, %v457
      %v492 = vld [vmem:[#allocation2] sm:$0xff]
      %v493 = vld [vmem:[#allocation2 + $0x8] sm:$0xff]
      %v494 = vld [vmem:[#allocation2 + $0x10] sm:$0x3]
      %v495 = vld [vmem:[#allocation2 + $0x18] sm:$0xff]
      %v496 = vld [vmem:[#allocation2 + $0x20] sm:$0xff]
      %v497 = vld [vmem:[#allocation2 + $0x28] sm:$0x3]
      %v498 = vld [vmem:[#allocation2 + $0x30] sm:$0xff]
      %v499 = vld [vmem:[#allocation2 + $0x38] sm:$0xff]
      %v500 = vld [vmem:[#allocation2 + $0x40] sm:$0x3]
      %v501 = vld [vmem:[#allocation2 + $0x48] sm:$0xff]
      %v502 = vld [vmem:[#allocation2 + $0x50] sm:$0xff]
      %v503 = vld [vmem:[#allocation2 + $0x58] sm:$0x3]
      %v504 = vld [vmem:[#allocation2 + $0x60] sm:$0xff]
      %v505 = vld [vmem:[#allocation2 + $0x68] sm:$0xff]
      %v506 = vld [vmem:[#allocation2 + $0x70] sm:$0x3]
      %v507 = vld [vmem:[#allocation2 + $0x78] sm:$0xff]
      %v508 = vld [vmem:[#allocation2 + $0x80] sm:$0xff]
      %v509 = vld [vmem:[#allocation2 + $0x88] sm:$0x3]
      %v510 = vld [vmem:[#allocation2 + $0x90] sm:$0xff]
      %v511 = vld [vmem:[#allocation2 + $0x98] sm:$0xff]
      %v512 = vld [vmem:[#allocation2 + $0xa0] sm:$0x3]
      %v513 = vld [vmem:[#allocation2 + $0xa8] sm:$0xff]
      %v514 = vld [vmem:[#allocation2 + $0xb0] sm:$0xff]
      %v515 = vld [vmem:[#allocation2 + $0xb8] sm:$0x3]
      %v516 = vld [vmem:[#allocation2 + $0xc0] sm:$0xff]
      %v517 = vld [vmem:[#allocation2 + $0xc8] sm:$0xff]
      %v518 = vld [vmem:[#allocation2 + $0xd0] sm:$0x3]
      %v519 = vld [vmem:[#allocation2 + $0xd8] sm:$0xff]
      %v520 = vld [vmem:[#allocation2 + $0xe0] sm:$0xff]
      %v521 = vld [vmem:[#allocation2 + $0xe8] sm:$0x3]
      %v522 = vld [vmem:[#allocation2 + $0xf0] sm:$0xff]
      %v523 = vld [vmem:[#allocation2 + $0xf8] sm:$0xff]
      %v524 = vld [vmem:[#allocation2 + $0x100] sm:$0x3]
      %v525 = vld [vmem:[#allocation2 + $0x108] sm:$0xff]
      %v526 = vld [vmem:[#allocation2 + $0x110] sm:$0xff]
      %v527 = vld [vmem:[#allocation2 + $0x118] sm:$0x3]
      %v528 = vld [vmem:[#allocation2 + $0x120] sm:$0xff]
      %v529 = vld [vmem:[#allocation2 + $0x128] sm:$0xff]
      %v530 = vld [vmem:[#allocation2 + $0x130] sm:$0x3]
      %v531 = vld [vmem:[#allocation2 + $0x138] sm:$0xff]
      %v532 = vld [vmem:[#allocation2 + $0x140] sm:$0xff]
      %v533 = vld [vmem:[#allocation2 + $0x148] sm:$0x3]
      %v534 = vld [vmem:[#allocation2 + $0x150] sm:$0xff]
      %v535 = vld [vmem:[#allocation2 + $0x158] sm:$0xff]
      %v536 = vld [vmem:[#allocation2 + $0x160] sm:$0x3]
      %v537 = vld [vmem:[#allocation2 + $0x168] sm:$0xff]
      %v538 = vld [vmem:[#allocation2 + $0x170] sm:$0xff]
      %v539 = vld [vmem:[#allocation2 + $0x178] sm:$0x3]
      %v540 = vld [vmem:[#allocation2 + $0x180] sm:$0xff]
      %v541 = vld [vmem:[#allocation2 + $0x188] sm:$0xff]
      %v542 = vld [vmem:[#allocation2 + $0x190] sm:$0x3]
      %v543 = vld [vmem:[#allocation2 + $0x198] sm:$0xff]
      %v544 = vld [vmem:[#allocation2 + $0x1a0] sm:$0xff]
      %v545 = vld [vmem:[#allocation2 + $0x1a8] sm:$0x3]
      %vm594 = vcmask 1046528
      %v595 = vrot.slane %v492, 1
      %v596 = vrot.slane %v493, 1
      %v597 = vsel %vm594, %v595, %v596
      %v598 = vrot.slane %v494, 1
      %v599 = vsel %vm594, %v596, %v598
      %v600 = vrot.slane %v495, 1
      %v601 = vrot.slane %v496, 1
      %v602 = vsel %vm594, %v600, %v601
      %v603 = vrot.slane %v497, 1
      %v604 = vsel %vm594, %v601, %v603
      %v605 = vrot.slane %v498, 1
      %v606 = vrot.slane %v499, 1
      %v607 = vsel %vm594, %v605, %v606
      %v608 = vrot.slane %v500, 1
      %v609 = vsel %vm594, %v606, %v608
      %v610 = vrot.slane %v501, 1
      %v611 = vrot.slane %v502, 1
      %v612 = vsel %vm594, %v610, %v611
      %v613 = vrot.slane %v503, 1
      %v614 = vsel %vm594, %v611, %v613
      %v615 = vrot.slane %v504, 1
      %v616 = vrot.slane %v505, 1
      %v617 = vsel %vm594, %v615, %v616
      %v618 = vrot.slane %v506, 1
      %v619 = vsel %vm594, %v616, %v618
      %v620 = vrot.slane %v507, 1
      %v621 = vrot.slane %v508, 1
      %v622 = vsel %vm594, %v620, %v621
      %v623 = vrot.slane %v509, 1
      %v624 = vsel %vm594, %v621, %v623
      %v625 = vrot.slane %v510, 1
      %v626 = vrot.slane %v511, 1
      %v627 = vsel %vm594, %v625, %v626
      %v628 = vrot.slane %v512, 1
      %v629 = vsel %vm594, %v626, %v628
      %v630 = vrot.slane %v513, 1
      %v631 = vrot.slane %v514, 1
      %v632 = vsel %vm594, %v630, %v631
      %v633 = vrot.slane %v515, 1
      %v634 = vsel %vm594, %v631, %v633
      %v635 = vrot.slane %v516, 1
      %v636 = vrot.slane %v517, 1
      %v637 = vsel %vm594, %v635, %v636
      %v638 = vrot.slane %v518, 1
      %v639 = vsel %vm594, %v636, %v638
      %v640 = vrot.slane %v519, 1
      %v641 = vrot.slane %v520, 1
      %v642 = vsel %vm594, %v640, %v641
      %v643 = vrot.slane %v521, 1
      %v644 = vsel %vm594, %v641, %v643
      %v645 = vrot.slane %v522, 1
      %v646 = vrot.slane %v523, 1
      %v647 = vsel %vm594, %v645, %v646
      %v648 = vrot.slane %v524, 1
      %v649 = vsel %vm594, %v646, %v648
      %v650 = vrot.slane %v525, 1
      %v651 = vrot.slane %v526, 1
      %v652 = vsel %vm594, %v650, %v651
      %v653 = vrot.slane %v527, 1
      %v654 = vsel %vm594, %v651, %v653
      %v655 = vrot.slane %v528, 1
      %v656 = vrot.slane %v529, 1
      %v657 = vsel %vm594, %v655, %v656
      %v658 = vrot.slane %v530, 1
      %v659 = vsel %vm594, %v656, %v658
      %v660 = vrot.slane %v531, 1
      %v661 = vrot.slane %v532, 1
      %v662 = vsel %vm594, %v660, %v661
      %v663 = vrot.slane %v533, 1
      %v664 = vsel %vm594, %v661, %v663
      %v665 = vrot.slane %v534, 1
      %v666 = vrot.slane %v535, 1
      %v667 = vsel %vm594, %v665, %v666
      %v668 = vrot.slane %v536, 1
      %v669 = vsel %vm594, %v666, %v668
      %v670 = vrot.slane %v537, 1
      %v671 = vrot.slane %v538, 1
      %v672 = vsel %vm594, %v670, %v671
      %v673 = vrot.slane %v539, 1
      %v674 = vsel %vm594, %v671, %v673
      %vm675 = vcmask 1045504
      %v676 = vrot.slane %v492, 2
      %v677 = vrot.slane %v493, 2
      %v678 = vsel %vm675, %v676, %v677
      %v679 = vrot.slane %v494, 2
      %v680 = vsel %vm675, %v677, %v679
      %v681 = vrot.slane %v495, 2
      %v682 = vrot.slane %v496, 2
      %v683 = vsel %vm675, %v681, %v682
      %v684 = vrot.slane %v497, 2
      %v685 = vsel %vm675, %v682, %v684
      %v686 = vrot.slane %v498, 2
      %v687 = vrot.slane %v499, 2
      %v688 = vsel %vm675, %v686, %v687
      %v689 = vrot.slane %v500, 2
      %v690 = vsel %vm675, %v687, %v689
      %v691 = vrot.slane %v501, 2
      %v692 = vrot.slane %v502, 2
      %v693 = vsel %vm675, %v691, %v692
      %v694 = vrot.slane %v503, 2
      %v695 = vsel %vm675, %v692, %v694
      %v696 = vrot.slane %v504, 2
      %v697 = vrot.slane %v505, 2
      %v698 = vsel %vm675, %v696, %v697
      %v699 = vrot.slane %v506, 2
      %v700 = vsel %vm675, %v697, %v699
      %v701 = vrot.slane %v507, 2
      %v702 = vrot.slane %v508, 2
      %v703 = vsel %vm675, %v701, %v702
      %v704 = vrot.slane %v509, 2
      %v705 = vsel %vm675, %v702, %v704
      %v706 = vrot.slane %v510, 2
      %v707 = vrot.slane %v511, 2
      %v708 = vsel %vm675, %v706, %v707
      %v709 = vrot.slane %v512, 2
      %v710 = vsel %vm675, %v707, %v709
      %v711 = vrot.slane %v513, 2
      %v712 = vrot.slane %v514, 2
      %v713 = vsel %vm675, %v711, %v712
      %v714 = vrot.slane %v515, 2
      %v715 = vsel %vm675, %v712, %v714
      %v716 = vrot.slane %v516, 2
      %v717 = vrot.slane %v517, 2
      %v718 = vsel %vm675, %v716, %v717
      %v719 = vrot.slane %v518, 2
      %v720 = vsel %vm675, %v717, %v719
      %v721 = vrot.slane %v519, 2
      %v722 = vrot.slane %v520, 2
      %v723 = vsel %vm675, %v721, %v722
      %v724 = vrot.slane %v521, 2
      %v725 = vsel %vm675, %v722, %v724
      %v726 = vrot.slane %v522, 2
      %v727 = vrot.slane %v523, 2
      %v728 = vsel %vm675, %v726, %v727
      %v729 = vrot.slane %v524, 2
      %v730 = vsel %vm675, %v727, %v729
      %v731 = vrot.slane %v525, 2
      %v732 = vrot.slane %v526, 2
      %v733 = vsel %vm675, %v731, %v732
      %v734 = vrot.slane %v527, 2
      %v735 = vsel %vm675, %v732, %v734
      %v736 = vrot.slane %v528, 2
      %v737 = vrot.slane %v529, 2
      %v738 = vsel %vm675, %v736, %v737
      %v739 = vrot.slane %v530, 2
      %v740 = vsel %vm675, %v737, %v739
      %v741 = vrot.slane %v531, 2
      %v742 = vrot.slane %v532, 2
      %v743 = vsel %vm675, %v741, %v742
      %v744 = vrot.slane %v533, 2
      %v745 = vsel %vm675, %v742, %v744
      %v746 = vrot.slane %v534, 2
      %v747 = vrot.slane %v535, 2
      %v748 = vsel %vm675, %v746, %v747
      %v749 = vrot.slane %v536, 2
      %v750 = vsel %vm675, %v747, %v749
      %v751 = vrot.slane %v537, 2
      %v752 = vrot.slane %v538, 2
      %v753 = vsel %vm675, %v751, %v752
      %v754 = vrot.slane %v539, 2
      %v755 = vsel %vm675, %v752, %v754
      %v759 = vrot.slane %v540, 1
      %v760 = vrot.slane %v541, 1
      %v761 = vsel %vm594, %v759, %v760
      %v762 = vrot.slane %v542, 1
      %v763 = vsel %vm594, %v760, %v762
      %v764 = vrot.slane %v540, 2
      %v765 = vrot.slane %v541, 2
      %v766 = vsel %vm675, %v764, %v765
      %v767 = vrot.slane %v542, 2
      %v768 = vsel %vm675, %v765, %v767
      %v772 = vrot.slane %v543, 1
      %v773 = vrot.slane %v544, 1
      %v774 = vsel %vm594, %v772, %v773
      %v775 = vrot.slane %v545, 1
      %v776 = vsel %vm594, %v773, %v775
      %v777 = vrot.slane %v543, 2
      %v778 = vrot.slane %v544, 2
      %v779 = vsel %vm675, %v777, %v778
      %v780 = vrot.slane %v545, 2
      %v781 = vsel %vm675, %v778, %v780
      %782 = vrot.lane.b32.xlu0 %v597, 8
      %v783 = vpop.permute.xlu0 %782
      %784 = vrot.lane.b32.xlu0 %v599, 8
      %v785 = vpop.permute.xlu0 %784
      %786 = vrot.lane.b32.xlu0 %v602, 8
      %v787 = vpop.permute.xlu0 %786
      %788 = vrot.lane.b32.xlu0 %v604, 8
      %v789 = vpop.permute.xlu0 %788
      %790 = vrot.lane.b32.xlu0 %v607, 8
      %v791 = vpop.permute.xlu0 %790
      %792 = vrot.lane.b32.xlu0 %v609, 8
      %v793 = vpop.permute.xlu0 %792
      %794 = vrot.lane.b32.xlu0 %v612, 8
      %v795 = vpop.permute.xlu0 %794
      %796 = vrot.lane.b32.xlu0 %v614, 8
      %v797 = vpop.permute.xlu0 %796
      %798 = vrot.lane.b32.xlu0 %v617, 8
      %v799 = vpop.permute.xlu0 %798
      %800 = vrot.lane.b32.xlu0 %v619, 8
      %v801 = vpop.permute.xlu0 %800
      %802 = vrot.lane.b32.xlu0 %v622, 8
      %v803 = vpop.permute.xlu0 %802
      %804 = vrot.lane.b32.xlu0 %v624, 8
      %v805 = vpop.permute.xlu0 %804
      %806 = vrot.lane.b32.xlu0 %v627, 8
      %v807 = vpop.permute.xlu0 %806
      %808 = vrot.lane.b32.xlu0 %v629, 8
      %v809 = vpop.permute.xlu0 %808
      %810 = vrot.lane.b32.xlu0 %v632, 8
      %v811 = vpop.permute.xlu0 %810
      %812 = vrot.lane.b32.xlu0 %v634, 8
      %v813 = vpop.permute.xlu0 %812
      %814 = vrot.lane.b32.xlu0 %v637, 8
      %v815 = vpop.permute.xlu0 %814
      %816 = vrot.lane.b32.xlu0 %v639, 8
      %v817 = vpop.permute.xlu0 %816
      %818 = vrot.lane.b32.xlu0 %v642, 8
      %v819 = vpop.permute.xlu0 %818
      %820 = vrot.lane.b32.xlu0 %v644, 8
      %v821 = vpop.permute.xlu0 %820
      %822 = vrot.lane.b32.xlu0 %v647, 8
      %v823 = vpop.permute.xlu0 %822
      %824 = vrot.lane.b32.xlu0 %v649, 8
      %v825 = vpop.permute.xlu0 %824
      %826 = vrot.lane.b32.xlu0 %v652, 8
      %v827 = vpop.permute.xlu0 %826
      %828 = vrot.lane.b32.xlu0 %v654, 8
      %v829 = vpop.permute.xlu0 %828
      %830 = vrot.lane.b32.xlu0 %v657, 8
      %v831 = vpop.permute.xlu0 %830
      %832 = vrot.lane.b32.xlu0 %v659, 8
      %v833 = vpop.permute.xlu0 %832
      %834 = vrot.lane.b32.xlu0 %v662, 8
      %v835 = vpop.permute.xlu0 %834
      %836 = vrot.lane.b32.xlu0 %v664, 8
      %v837 = vpop.permute.xlu0 %836
      %838 = vrot.lane.b32.xlu0 %v667, 8
      %v839 = vpop.permute.xlu0 %838
      %840 = vrot.lane.b32.xlu0 %v669, 8
      %v841 = vpop.permute.xlu0 %840
      %842 = vrot.lane.b32.xlu0 %v672, 8
      %v843 = vpop.permute.xlu0 %842
      %844 = vrot.lane.b32.xlu0 %v674, 8
      %v845 = vpop.permute.xlu0 %844
      %878 = vrot.lane.b32.xlu0 %v678, 16
      %v879 = vpop.permute.xlu0 %878
      %880 = vrot.lane.b32.xlu0 %v680, 16
      %v881 = vpop.permute.xlu0 %880
      %882 = vrot.lane.b32.xlu0 %v683, 16
      %v883 = vpop.permute.xlu0 %882
      %884 = vrot.lane.b32.xlu0 %v685, 16
      %v885 = vpop.permute.xlu0 %884
      %886 = vrot.lane.b32.xlu0 %v688, 16
      %v887 = vpop.permute.xlu0 %886
      %888 = vrot.lane.b32.xlu0 %v690, 16
      %v889 = vpop.permute.xlu0 %888
      %890 = vrot.lane.b32.xlu0 %v693, 16
      %v891 = vpop.permute.xlu0 %890
      %892 = vrot.lane.b32.xlu0 %v695, 16
      %v893 = vpop.permute.xlu0 %892
      %894 = vrot.lane.b32.xlu0 %v698, 16
      %v895 = vpop.permute.xlu0 %894
      %896 = vrot.lane.b32.xlu0 %v700, 16
      %v897 = vpop.permute.xlu0 %896
      %898 = vrot.lane.b32.xlu0 %v703, 16
      %v899 = vpop.permute.xlu0 %898
      %900 = vrot.lane.b32.xlu0 %v705, 16
      %v901 = vpop.permute.xlu0 %900
      %902 = vrot.lane.b32.xlu0 %v708, 16
      %v903 = vpop.permute.xlu0 %902
      %904 = vrot.lane.b32.xlu0 %v710, 16
      %v905 = vpop.permute.xlu0 %904
      %906 = vrot.lane.b32.xlu0 %v713, 16
      %v907 = vpop.permute.xlu0 %906
      %908 = vrot.lane.b32.xlu0 %v715, 16
      %v909 = vpop.permute.xlu0 %908
      %910 = vrot.lane.b32.xlu0 %v718, 16
      %v911 = vpop.permute.xlu0 %910
      %912 = vrot.lane.b32.xlu0 %v720, 16
      %v913 = vpop.permute.xlu0 %912
      %914 = vrot.lane.b32.xlu0 %v723, 16
      %v915 = vpop.permute.xlu0 %914
      %916 = vrot.lane.b32.xlu0 %v725, 16
      %v917 = vpop.permute.xlu0 %916
      %918 = vrot.lane.b32.xlu0 %v728, 16
      %v919 = vpop.permute.xlu0 %918
      %920 = vrot.lane.b32.xlu0 %v730, 16
      %v921 = vpop.permute.xlu0 %920
      %922 = vrot.lane.b32.xlu0 %v733, 16
      %v923 = vpop.permute.xlu0 %922
      %924 = vrot.lane.b32.xlu0 %v735, 16
      %v925 = vpop.permute.xlu0 %924
      %926 = vrot.lane.b32.xlu0 %v738, 16
      %v927 = vpop.permute.xlu0 %926
      %928 = vrot.lane.b32.xlu0 %v740, 16
      %v929 = vpop.permute.xlu0 %928
      %930 = vrot.lane.b32.xlu0 %v743, 16
      %v931 = vpop.permute.xlu0 %930
      %932 = vrot.lane.b32.xlu0 %v745, 16
      %v933 = vpop.permute.xlu0 %932
      %934 = vrot.lane.b32.xlu0 %v748, 16
      %v935 = vpop.permute.xlu0 %934
      %936 = vrot.lane.b32.xlu0 %v750, 16
      %v937 = vpop.permute.xlu0 %936
      %938 = vrot.lane.b32.xlu0 %v753, 16
      %v939 = vpop.permute.xlu0 %938
      %940 = vrot.lane.b32.xlu0 %v755, 16
      %v941 = vpop.permute.xlu0 %940
      %974 = vrot.lane.b32.xlu0 %v495, 24
      %v975 = vpop.permute.xlu0 %974
      %976 = vrot.lane.b32.xlu0 %v496, 24
      %v977 = vpop.permute.xlu0 %976
      %978 = vrot.lane.b32.xlu0 %v498, 24
      %v979 = vpop.permute.xlu0 %978
      %980 = vrot.lane.b32.xlu0 %v499, 24
      %v981 = vpop.permute.xlu0 %980
      %982 = vrot.lane.b32.xlu0 %v501, 24
      %v983 = vpop.permute.xlu0 %982
      %984 = vrot.lane.b32.xlu0 %v502, 24
      %v985 = vpop.permute.xlu0 %984
      %986 = vrot.lane.b32.xlu0 %v504, 24
      %v987 = vpop.permute.xlu0 %986
      %988 = vrot.lane.b32.xlu0 %v505, 24
      %v989 = vpop.permute.xlu0 %988
      %990 = vrot.lane.b32.xlu0 %v507, 24
      %v991 = vpop.permute.xlu0 %990
      %992 = vrot.lane.b32.xlu0 %v508, 24
      %v993 = vpop.permute.xlu0 %992
      %994 = vrot.lane.b32.xlu0 %v510, 24
      %v995 = vpop.permute.xlu0 %994
      %996 = vrot.lane.b32.xlu0 %v511, 24
      %v997 = vpop.permute.xlu0 %996
      %998 = vrot.lane.b32.xlu0 %v513, 24
      %v999 = vpop.permute.xlu0 %998
      %1000 = vrot.lane.b32.xlu0 %v514, 24
      %v1001 = vpop.permute.xlu0 %1000
      %1002 = vrot.lane.b32.xlu0 %v516, 24
      %v1003 = vpop.permute.xlu0 %1002
      %1004 = vrot.lane.b32.xlu0 %v517, 24
      %v1005 = vpop.permute.xlu0 %1004
      %1006 = vrot.lane.b32.xlu0 %v519, 24
      %v1007 = vpop.permute.xlu0 %1006
      %1008 = vrot.lane.b32.xlu0 %v520, 24
      %v1009 = vpop.permute.xlu0 %1008
      %1010 = vrot.lane.b32.xlu0 %v522, 24
      %v1011 = vpop.permute.xlu0 %1010
      %1012 = vrot.lane.b32.xlu0 %v523, 24
      %v1013 = vpop.permute.xlu0 %1012
      %1014 = vrot.lane.b32.xlu0 %v525, 24
      %v1015 = vpop.permute.xlu0 %1014
      %1016 = vrot.lane.b32.xlu0 %v526, 24
      %v1017 = vpop.permute.xlu0 %1016
      %1018 = vrot.lane.b32.xlu0 %v528, 24
      %v1019 = vpop.permute.xlu0 %1018
      %1020 = vrot.lane.b32.xlu0 %v529, 24
      %v1021 = vpop.permute.xlu0 %1020
      %1022 = vrot.lane.b32.xlu0 %v531, 24
      %v1023 = vpop.permute.xlu0 %1022
      %1024 = vrot.lane.b32.xlu0 %v532, 24
      %v1025 = vpop.permute.xlu0 %1024
      %1026 = vrot.lane.b32.xlu0 %v534, 24
      %v1027 = vpop.permute.xlu0 %1026
      %1028 = vrot.lane.b32.xlu0 %v535, 24
      %v1029 = vpop.permute.xlu0 %1028
      %1030 = vrot.lane.b32.xlu0 %v537, 24
      %v1031 = vpop.permute.xlu0 %1030
      %1032 = vrot.lane.b32.xlu0 %v538, 24
      %v1033 = vpop.permute.xlu0 %1032
      %1034 = vrot.lane.b32.xlu0 %v540, 24
      %v1035 = vpop.permute.xlu0 %1034
      %1036 = vrot.lane.b32.xlu0 %v541, 24
      %v1037 = vpop.permute.xlu0 %1036
      %1070 = vrot.lane.b32.xlu0 %v602, 32
      %v1071 = vpop.permute.xlu0 %1070
      %1072 = vrot.lane.b32.xlu0 %v604, 32
      %v1073 = vpop.permute.xlu0 %1072
      %1074 = vrot.lane.b32.xlu0 %v607, 32
      %v1075 = vpop.permute.xlu0 %1074
      %1076 = vrot.lane.b32.xlu0 %v609, 32
      %v1077 = vpop.permute.xlu0 %1076
      %1078 = vrot.lane.b32.xlu0 %v612, 32
      %v1079 = vpop.permute.xlu0 %1078
      %1080 = vrot.lane.b32.xlu0 %v614, 32
      %v1081 = vpop.permute.xlu0 %1080
      %1082 = vrot.lane.b32.xlu0 %v617, 32
      %v1083 = vpop.permute.xlu0 %1082
      %1084 = vrot.lane.b32.xlu0 %v619, 32
      %v1085 = vpop.permute.xlu0 %1084
      %1086 = vrot.lane.b32.xlu0 %v622, 32
      %v1087 = vpop.permute.xlu0 %1086
      %1088 = vrot.lane.b32.xlu0 %v624, 32
      %v1089 = vpop.permute.xlu0 %1088
      %1090 = vrot.lane.b32.xlu0 %v627, 32
      %v1091 = vpop.permute.xlu0 %1090
      %1092 = vrot.lane.b32.xlu0 %v629, 32
      %v1093 = vpop.permute.xlu0 %1092
      %1094 = vrot.lane.b32.xlu0 %v632, 32
      %v1095 = vpop.permute.xlu0 %1094
      %1096 = vrot.lane.b32.xlu0 %v634, 32
      %v1097 = vpop.permute.xlu0 %1096
      %1098 = vrot.lane.b32.xlu0 %v637, 32
      %v1099 = vpop.permute.xlu0 %1098
      %1100 = vrot.lane.b32.xlu0 %v639, 32
      %v1101 = vpop.permute.xlu0 %1100
      %1102 = vrot.lane.b32.xlu0 %v642, 32
      %v1103 = vpop.permute.xlu0 %1102
      %1104 = vrot.lane.b32.xlu0 %v644, 32
      %v1105 = vpop.permute.xlu0 %1104
      %1106 = vrot.lane.b32.xlu0 %v647, 32
      %v1107 = vpop.permute.xlu0 %1106
      %1108 = vrot.lane.b32.xlu0 %v649, 32
      %v1109 = vpop.permute.xlu0 %1108
      %1110 = vrot.lane.b32.xlu0 %v652, 32
      %v1111 = vpop.permute.xlu0 %1110
      %1112 = vrot.lane.b32.xlu0 %v654, 32
      %v1113 = vpop.permute.xlu0 %1112
      %1114 = vrot.lane.b32.xlu0 %v657, 32
      %v1115 = vpop.permute.xlu0 %1114
      %1116 = vrot.lane.b32.xlu0 %v659, 32
      %v1117 = vpop.permute.xlu0 %1116
      %1118 = vrot.lane.b32.xlu0 %v662, 32
      %v1119 = vpop.permute.xlu0 %1118
      %1120 = vrot.lane.b32.xlu0 %v664, 32
      %v1121 = vpop.permute.xlu0 %1120
      %1122 = vrot.lane.b32.xlu0 %v667, 32
      %v1123 = vpop.permute.xlu0 %1122
      %1124 = vrot.lane.b32.xlu0 %v669, 32
      %v1125 = vpop.permute.xlu0 %1124
      %1126 = vrot.lane.b32.xlu0 %v672, 32
      %v1127 = vpop.permute.xlu0 %1126
      %1128 = vrot.lane.b32.xlu0 %v674, 32
      %v1129 = vpop.permute.xlu0 %1128
      %1130 = vrot.lane.b32.xlu0 %v761, 32
      %v1131 = vpop.permute.xlu0 %1130
      %1132 = vrot.lane.b32.xlu0 %v763, 32
      %v1133 = vpop.permute.xlu0 %1132
      %1166 = vrot.lane.b32.xlu0 %v683, 40
      %v1167 = vpop.permute.xlu0 %1166
      %1168 = vrot.lane.b32.xlu0 %v685, 40
      %v1169 = vpop.permute.xlu0 %1168
      %1170 = vrot.lane.b32.xlu0 %v688, 40
      %v1171 = vpop.permute.xlu0 %1170
      %1172 = vrot.lane.b32.xlu0 %v690, 40
      %v1173 = vpop.permute.xlu0 %1172
      %1174 = vrot.lane.b32.xlu0 %v693, 40
      %v1175 = vpop.permute.xlu0 %1174
      %1176 = vrot.lane.b32.xlu0 %v695, 40
      %v1177 = vpop.permute.xlu0 %1176
      %1178 = vrot.lane.b32.xlu0 %v698, 40
      %v1179 = vpop.permute.xlu0 %1178
      %1180 = vrot.lane.b32.xlu0 %v700, 40
      %v1181 = vpop.permute.xlu0 %1180
      %1182 = vrot.lane.b32.xlu0 %v703, 40
      %v1183 = vpop.permute.xlu0 %1182
      %1184 = vrot.lane.b32.xlu0 %v705, 40
      %v1185 = vpop.permute.xlu0 %1184
      %1186 = vrot.lane.b32.xlu0 %v708, 40
      %v1187 = vpop.permute.xlu0 %1186
      %1188 = vrot.lane.b32.xlu0 %v710, 40
      %v1189 = vpop.permute.xlu0 %1188
      %1190 = vrot.lane.b32.xlu0 %v713, 40
      %v1191 = vpop.permute.xlu0 %1190
      %1192 = vrot.lane.b32.xlu0 %v715, 40
      %v1193 = vpop.permute.xlu0 %1192
      %1194 = vrot.lane.b32.xlu0 %v718, 40
      %v1195 = vpop.permute.xlu0 %1194
      %1196 = vrot.lane.b32.xlu0 %v720, 40
      %v1197 = vpop.permute.xlu0 %1196
      %1198 = vrot.lane.b32.xlu0 %v723, 40
      %v1199 = vpop.permute.xlu0 %1198
      %1200 = vrot.lane.b32.xlu0 %v725, 40
      %v1201 = vpop.permute.xlu0 %1200
      %1202 = vrot.lane.b32.xlu0 %v728, 40
      %v1203 = vpop.permute.xlu0 %1202
      %1204 = vrot.lane.b32.xlu0 %v730, 40
      %v1205 = vpop.permute.xlu0 %1204
      %1206 = vrot.lane.b32.xlu0 %v733, 40
      %v1207 = vpop.permute.xlu0 %1206
      %1208 = vrot.lane.b32.xlu0 %v735, 40
      %v1209 = vpop.permute.xlu0 %1208
      %1210 = vrot.lane.b32.xlu0 %v738, 40
      %v1211 = vpop.permute.xlu0 %1210
      %1212 = vrot.lane.b32.xlu0 %v740, 40
      %v1213 = vpop.permute.xlu0 %1212
      %1214 = vrot.lane.b32.xlu0 %v743, 40
      %v1215 = vpop.permute.xlu0 %1214
      %1216 = vrot.lane.b32.xlu0 %v745, 40
      %v1217 = vpop.permute.xlu0 %1216
      %1218 = vrot.lane.b32.xlu0 %v748, 40
      %v1219 = vpop.permute.xlu0 %1218
      %1220 = vrot.lane.b32.xlu0 %v750, 40
      %v1221 = vpop.permute.xlu0 %1220
      %1222 = vrot.lane.b32.xlu0 %v753, 40
      %v1223 = vpop.permute.xlu0 %1222
      %1224 = vrot.lane.b32.xlu0 %v755, 40
      %v1225 = vpop.permute.xlu0 %1224
      %1226 = vrot.lane.b32.xlu0 %v766, 40
      %v1227 = vpop.permute.xlu0 %1226
      %1228 = vrot.lane.b32.xlu0 %v768, 40
      %v1229 = vpop.permute.xlu0 %1228
      %1262 = vrot.lane.b32.xlu0 %v498, 48
      %v1263 = vpop.permute.xlu0 %1262
      %1264 = vrot.lane.b32.xlu0 %v499, 48
      %v1265 = vpop.permute.xlu0 %1264
      %1266 = vrot.lane.b32.xlu0 %v501, 48
      %v1267 = vpop.permute.xlu0 %1266
      %1268 = vrot.lane.b32.xlu0 %v502, 48
      %v1269 = vpop.permute.xlu0 %1268
      %1270 = vrot.lane.b32.xlu0 %v504, 48
      %v1271 = vpop.permute.xlu0 %1270
      %1272 = vrot.lane.b32.xlu0 %v505, 48
      %v1273 = vpop.permute.xlu0 %1272
      %1274 = vrot.lane.b32.xlu0 %v507, 48
      %v1275 = vpop.permute.xlu0 %1274
      %1276 = vrot.lane.b32.xlu0 %v508, 48
      %v1277 = vpop.permute.xlu0 %1276
      %1278 = vrot.lane.b32.xlu0 %v510, 48
      %v1279 = vpop.permute.xlu0 %1278
      %1280 = vrot.lane.b32.xlu0 %v511, 48
      %v1281 = vpop.permute.xlu0 %1280
      %1282 = vrot.lane.b32.xlu0 %v513, 48
      %v1283 = vpop.permute.xlu0 %1282
      %1284 = vrot.lane.b32.xlu0 %v514, 48
      %v1285 = vpop.permute.xlu0 %1284
      %1286 = vrot.lane.b32.xlu0 %v516, 48
      %v1287 = vpop.permute.xlu0 %1286
      %1288 = vrot.lane.b32.xlu0 %v517, 48
      %v1289 = vpop.permute.xlu0 %1288
      %1290 = vrot.lane.b32.xlu0 %v519, 48
      %v1291 = vpop.permute.xlu0 %1290
      %1292 = vrot.lane.b32.xlu0 %v520, 48
      %v1293 = vpop.permute.xlu0 %1292
      %1294 = vrot.lane.b32.xlu0 %v522, 48
      %v1295 = vpop.permute.xlu0 %1294
      %1296 = vrot.lane.b32.xlu0 %v523, 48
      %v1297 = vpop.permute.xlu0 %1296
      %1298 = vrot.lane.b32.xlu0 %v525, 48
      %v1299 = vpop.permute.xlu0 %1298
      %1300 = vrot.lane.b32.xlu0 %v526, 48
      %v1301 = vpop.permute.xlu0 %1300
      %1302 = vrot.lane.b32.xlu0 %v528, 48
      %v1303 = vpop.permute.xlu0 %1302
      %1304 = vrot.lane.b32.xlu0 %v529, 48
      %v1305 = vpop.permute.xlu0 %1304
      %1306 = vrot.lane.b32.xlu0 %v531, 48
      %v1307 = vpop.permute.xlu0 %1306
      %1308 = vrot.lane.b32.xlu0 %v532, 48
      %v1309 = vpop.permute.xlu0 %1308
      %1310 = vrot.lane.b32.xlu0 %v534, 48
      %v1311 = vpop.permute.xlu0 %1310
      %1312 = vrot.lane.b32.xlu0 %v535, 48
      %v1313 = vpop.permute.xlu0 %1312
      %1314 = vrot.lane.b32.xlu0 %v537, 48
      %v1315 = vpop.permute.xlu0 %1314
      %1316 = vrot.lane.b32.xlu0 %v538, 48
      %v1317 = vpop.permute.xlu0 %1316
      %1318 = vrot.lane.b32.xlu0 %v540, 48
      %v1319 = vpop.permute.xlu0 %1318
      %1320 = vrot.lane.b32.xlu0 %v541, 48
      %v1321 = vpop.permute.xlu0 %1320
      %1322 = vrot.lane.b32.xlu0 %v543, 48
      %v1323 = vpop.permute.xlu0 %1322
      %1324 = vrot.lane.b32.xlu0 %v544, 48
      %v1325 = vpop.permute.xlu0 %1324
      %1358 = vrot.lane.b32.xlu0 %v607, 56
      %v1359 = vpop.permute.xlu0 %1358
      %1360 = vrot.lane.b32.xlu0 %v609, 56
      %v1361 = vpop.permute.xlu0 %1360
      %1362 = vrot.lane.b32.xlu0 %v612, 56
      %v1363 = vpop.permute.xlu0 %1362
      %1364 = vrot.lane.b32.xlu0 %v614, 56
      %v1365 = vpop.permute.xlu0 %1364
      %1366 = vrot.lane.b32.xlu0 %v617, 56
      %v1367 = vpop.permute.xlu0 %1366
      %1368 = vrot.lane.b32.xlu0 %v619, 56
      %v1369 = vpop.permute.xlu0 %1368
      %1370 = vrot.lane.b32.xlu0 %v622, 56
      %v1371 = vpop.permute.xlu0 %1370
      %1372 = vrot.lane.b32.xlu0 %v624, 56
      %v1373 = vpop.permute.xlu0 %1372
      %1374 = vrot.lane.b32.xlu0 %v627, 56
      %v1375 = vpop.permute.xlu0 %1374
      %1376 = vrot.lane.b32.xlu0 %v629, 56
      %v1377 = vpop.permute.xlu0 %1376
      %1378 = vrot.lane.b32.xlu0 %v632, 56
      %v1379 = vpop.permute.xlu0 %1378
      %1380 = vrot.lane.b32.xlu0 %v634, 56
      %v1381 = vpop.permute.xlu0 %1380
      %1382 = vrot.lane.b32.xlu0 %v637, 56
      %v1383 = vpop.permute.xlu0 %1382
      %1384 = vrot.lane.b32.xlu0 %v639, 56
      %v1385 = vpop.permute.xlu0 %1384
      %1386 = vrot.lane.b32.xlu0 %v642, 56
      %v1387 = vpop.permute.xlu0 %1386
      %1388 = vrot.lane.b32.xlu0 %v644, 56
      %v1389 = vpop.permute.xlu0 %1388
      %1390 = vrot.lane.b32.xlu0 %v647, 56
      %v1391 = vpop.permute.xlu0 %1390
      %1392 = vrot.lane.b32.xlu0 %v649, 56
      %v1393 = vpop.permute.xlu0 %1392
      %1394 = vrot.lane.b32.xlu0 %v652, 56
      %v1395 = vpop.permute.xlu0 %1394
      %1396 = vrot.lane.b32.xlu0 %v654, 56
      %v1397 = vpop.permute.xlu0 %1396
      %1398 = vrot.lane.b32.xlu0 %v657, 56
      %v1399 = vpop.permute.xlu0 %1398
      %1400 = vrot.lane.b32.xlu0 %v659, 56
      %v1401 = vpop.permute.xlu0 %1400
      %1402 = vrot.lane.b32.xlu0 %v662, 56
      %v1403 = vpop.permute.xlu0 %1402
      %1404 = vrot.lane.b32.xlu0 %v664, 56
      %v1405 = vpop.permute.xlu0 %1404
      %1406 = vrot.lane.b32.xlu0 %v667, 56
      %v1407 = vpop.permute.xlu0 %1406
      %1408 = vrot.lane.b32.xlu0 %v669, 56
      %v1409 = vpop.permute.xlu0 %1408
      %1410 = vrot.lane.b32.xlu0 %v672, 56
      %v1411 = vpop.permute.xlu0 %1410
      %1412 = vrot.lane.b32.xlu0 %v674, 56
      %v1413 = vpop.permute.xlu0 %1412
      %1414 = vrot.lane.b32.xlu0 %v761, 56
      %v1415 = vpop.permute.xlu0 %1414
      %1416 = vrot.lane.b32.xlu0 %v763, 56
      %v1417 = vpop.permute.xlu0 %1416
      %1418 = vrot.lane.b32.xlu0 %v774, 56
      %v1419 = vpop.permute.xlu0 %1418
      %1420 = vrot.lane.b32.xlu0 %v776, 56
      %v1421 = vpop.permute.xlu0 %1420
      %1454 = vrot.lane.b32.xlu0 %v688, 64
      %v1455 = vpop.permute.xlu0 %1454
      %1456 = vrot.lane.b32.xlu0 %v690, 64
      %v1457 = vpop.permute.xlu0 %1456
      %1458 = vrot.lane.b32.xlu0 %v693, 64
      %v1459 = vpop.permute.xlu0 %1458
      %1460 = vrot.lane.b32.xlu0 %v695, 64
      %v1461 = vpop.permute.xlu0 %1460
      %1462 = vrot.lane.b32.xlu0 %v698, 64
      %v1463 = vpop.permute.xlu0 %1462
      %1464 = vrot.lane.b32.xlu0 %v700, 64
      %v1465 = vpop.permute.xlu0 %1464
      %1466 = vrot.lane.b32.xlu0 %v703, 64
      %v1467 = vpop.permute.xlu0 %1466
      %1468 = vrot.lane.b32.xlu0 %v705, 64
      %v1469 = vpop.permute.xlu0 %1468
      %1470 = vrot.lane.b32.xlu0 %v708, 64
      %v1471 = vpop.permute.xlu0 %1470
      %1472 = vrot.lane.b32.xlu0 %v710, 64
      %v1473 = vpop.permute.xlu0 %1472
      %1474 = vrot.lane.b32.xlu0 %v713, 64
      %v1475 = vpop.permute.xlu0 %1474
      %1476 = vrot.lane.b32.xlu0 %v715, 64
      %v1477 = vpop.permute.xlu0 %1476
      %1478 = vrot.lane.b32.xlu0 %v718, 64
      %v1479 = vpop.permute.xlu0 %1478
      %1480 = vrot.lane.b32.xlu0 %v720, 64
      %v1481 = vpop.permute.xlu0 %1480
      %1482 = vrot.lane.b32.xlu0 %v723, 64
      %v1483 = vpop.permute.xlu0 %1482
      %1484 = vrot.lane.b32.xlu0 %v725, 64
      %v1485 = vpop.permute.xlu0 %1484
      %1486 = vrot.lane.b32.xlu0 %v728, 64
      %v1487 = vpop.permute.xlu0 %1486
      %1488 = vrot.lane.b32.xlu0 %v730, 64
      %v1489 = vpop.permute.xlu0 %1488
      %1490 = vrot.lane.b32.xlu0 %v733, 64
      %v1491 = vpop.permute.xlu0 %1490
      %1492 = vrot.lane.b32.xlu0 %v735, 64
      %v1493 = vpop.permute.xlu0 %1492
      %1494 = vrot.lane.b32.xlu0 %v738, 64
      %v1495 = vpop.permute.xlu0 %1494
      %1496 = vrot.lane.b32.xlu0 %v740, 64
      %v1497 = vpop.permute.xlu0 %1496
      %1498 = vrot.lane.b32.xlu0 %v743, 64
      %v1499 = vpop.permute.xlu0 %1498
      %1500 = vrot.lane.b32.xlu0 %v745, 64
      %v1501 = vpop.permute.xlu0 %1500
      %1502 = vrot.lane.b32.xlu0 %v748, 64
      %v1503 = vpop.permute.xlu0 %1502
      %1504 = vrot.lane.b32.xlu0 %v750, 64
      %v1505 = vpop.permute.xlu0 %1504
      %1506 = vrot.lane.b32.xlu0 %v753, 64
      %v1507 = vpop.permute.xlu0 %1506
      %1508 = vrot.lane.b32.xlu0 %v755, 64
      %v1509 = vpop.permute.xlu0 %1508
      %1510 = vrot.lane.b32.xlu0 %v766, 64
      %v1511 = vpop.permute.xlu0 %1510
      %1512 = vrot.lane.b32.xlu0 %v768, 64
      %v1513 = vpop.permute.xlu0 %1512
      %1514 = vrot.lane.b32.xlu0 %v779, 64
      %v1515 = vpop.permute.xlu0 %1514
      %1516 = vrot.lane.b32.xlu0 %v781, 64
      %v1517 = vpop.permute.xlu0 %1516
      %v1550 = vsel %vm459, %v492, %v783
      %v1551 = vsel %vm459, %v493, %v785
      %v1552 = vsel %vm459, %v495, %v787
      %v1553 = vsel %vm459, %v496, %v789
      %v1554 = vsel %vm459, %v498, %v791
      %v1555 = vsel %vm459, %v499, %v793
      %v1556 = vsel %vm459, %v501, %v795
      %v1557 = vsel %vm459, %v502, %v797
      %v1558 = vsel %vm459, %v504, %v799
      %v1559 = vsel %vm459, %v505, %v801
      %v1560 = vsel %vm459, %v507, %v803
      %v1561 = vsel %vm459, %v508, %v805
      %v1562 = vsel %vm459, %v510, %v807
      %v1563 = vsel %vm459, %v511, %v809
      %v1564 = vsel %vm459, %v513, %v811
      %v1565 = vsel %vm459, %v514, %v813
      %v1566 = vsel %vm459, %v516, %v815
      %v1567 = vsel %vm459, %v517, %v817
      %v1568 = vsel %vm459, %v519, %v819
      %v1569 = vsel %vm459, %v520, %v821
      %v1570 = vsel %vm459, %v522, %v823
      %v1571 = vsel %vm459, %v523, %v825
      %v1572 = vsel %vm459, %v525, %v827
      %v1573 = vsel %vm459, %v526, %v829
      %v1574 = vsel %vm459, %v528, %v831
      %v1575 = vsel %vm459, %v529, %v833
      %v1576 = vsel %vm459, %v531, %v835
      %v1577 = vsel %vm459, %v532, %v837
      %v1578 = vsel %vm459, %v534, %v839
      %v1579 = vsel %vm459, %v535, %v841
      %v1580 = vsel %vm459, %v537, %v843
      %v1581 = vsel %vm459, %v538, %v845
      %vm1582 = vcmask 130048
      %v1583 = vsel %vm1582, %v1550, %v879
      %v1584 = vsel %vm1582, %v1551, %v881
      %v1585 = vsel %vm1582, %v1552, %v883
      %v1586 = vsel %vm1582, %v1553, %v885
      %v1587 = vsel %vm1582, %v1554, %v887
      %v1588 = vsel %vm1582, %v1555, %v889
      %v1589 = vsel %vm1582, %v1556, %v891
      %v1590 = vsel %vm1582, %v1557, %v893
      %v1591 = vsel %vm1582, %v1558, %v895
      %v1592 = vsel %vm1582, %v1559, %v897
      %v1593 = vsel %vm1582, %v1560, %v899
      %v1594 = vsel %vm1582, %v1561, %v901
      %v1595 = vsel %vm1582, %v1562, %v903
      %v1596 = vsel %vm1582, %v1563, %v905
      %v1597 = vsel %vm1582, %v1564, %v907
      %v1598 = vsel %vm1582, %v1565, %v909
      %v1599 = vsel %vm1582, %v1566, %v911
      %v1600 = vsel %vm1582, %v1567, %v913
      %v1601 = vsel %vm1582, %v1568, %v915
      %v1602 = vsel %vm1582, %v1569, %v917
      %v1603 = vsel %vm1582, %v1570, %v919
      %v1604 = vsel %vm1582, %v1571, %v921
      %v1605 = vsel %vm1582, %v1572, %v923
      %v1606 = vsel %vm1582, %v1573, %v925
      %v1607 = vsel %vm1582, %v1574, %v927
      %v1608 = vsel %vm1582, %v1575, %v929
      %v1609 = vsel %vm1582, %v1576, %v931
      %v1610 = vsel %vm1582, %v1577, %v933
      %v1611 = vsel %vm1582, %v1578, %v935
      %v1612 = vsel %vm1582, %v1579, %v937
      %v1613 = vsel %vm1582, %v1580, %v939
      %v1614 = vsel %vm1582, %v1581, %v941
      %vm1615 = vcmask 195584
      %v1616 = vsel %vm1615, %v1583, %v975
      %v1617 = vsel %vm1615, %v1584, %v977
      %v1618 = vsel %vm1615, %v1585, %v979
      %v1619 = vsel %vm1615, %v1586, %v981
      %v1620 = vsel %vm1615, %v1587, %v983
      %v1621 = vsel %vm1615, %v1588, %v985
      %v1622 = vsel %vm1615, %v1589, %v987
      %v1623 = vsel %vm1615, %v1590, %v989
      %v1624 = vsel %vm1615, %v1591, %v991
      %v1625 = vsel %vm1615, %v1592, %v993
      %v1626 = vsel %vm1615, %v1593, %v995
      %v1627 = vsel %vm1615, %v1594, %v997
      %v1628 = vsel %vm1615, %v1595, %v999
      %v1629 = vsel %vm1615, %v1596, %v1001
      %v1630 = vsel %vm1615, %v1597, %v1003
      %v1631 = vsel %vm1615, %v1598, %v1005
      %v1632 = vsel %vm1615, %v1599, %v1007
      %v1633 = vsel %vm1615, %v1600, %v1009
      %v1634 = vsel %vm1615, %v1601, %v1011
      %v1635 = vsel %vm1615, %v1602, %v1013
      %v1636 = vsel %vm1615, %v1603, %v1015
      %v1637 = vsel %vm1615, %v1604, %v1017
      %v1638 = vsel %vm1615, %v1605, %v1019
      %v1639 = vsel %vm1615, %v1606, %v1021
      %v1640 = vsel %vm1615, %v1607, %v1023
      %v1641 = vsel %vm1615, %v1608, %v1025
      %v1642 = vsel %vm1615, %v1609, %v1027
      %v1643 = vsel %vm1615, %v1610, %v1029
      %v1644 = vsel %vm1615, %v1611, %v1031
      %v1645 = vsel %vm1615, %v1612, %v1033
      %v1646 = vsel %vm1615, %v1613, %v1035
      %v1647 = vsel %vm1615, %v1614, %v1037
      %vm1648 = vcmask 261120
      %v1649 = vsel %vm1648, %v1616, %v1071
      %v1650 = vsel %vm1648, %v1617, %v1073
      %v1651 = vsel %vm1648, %v1618, %v1075
      %v1652 = vsel %vm1648, %v1619, %v1077
      %v1653 = vsel %vm1648, %v1620, %v1079
      %v1654 = vsel %vm1648, %v1621, %v1081
      %v1655 = vsel %vm1648, %v1622, %v1083
      %v1656 = vsel %vm1648, %v1623, %v1085
      %v1657 = vsel %vm1648, %v1624, %v1087
      %v1658 = vsel %vm1648, %v1625, %v1089
      %v1659 = vsel %vm1648, %v1626, %v1091
      %v1660 = vsel %vm1648, %v1627, %v1093
      %v1661 = vsel %vm1648, %v1628, %v1095
      %v1662 = vsel %vm1648, %v1629, %v1097
      %v1663 = vsel %vm1648, %v1630, %v1099
      %v1664 = vsel %vm1648, %v1631, %v1101
      %v1665 = vsel %vm1648, %v1632, %v1103
      %v1666 = vsel %vm1648, %v1633, %v1105
      %v1667 = vsel %vm1648, %v1634, %v1107
      %v1668 = vsel %vm1648, %v1635, %v1109
      %v1669 = vsel %vm1648, %v1636, %v1111
      %v1670 = vsel %vm1648, %v1637, %v1113
      %v1671 = vsel %vm1648, %v1638, %v1115
      %v1672 = vsel %vm1648, %v1639, %v1117
      %v1673 = vsel %vm1648, %v1640, %v1119
      %v1674 = vsel %vm1648, %v1641, %v1121
      %v1675 = vsel %vm1648, %v1642, %v1123
      %v1676 = vsel %vm1648, %v1643, %v1125
      %v1677 = vsel %vm1648, %v1644, %v1127
      %v1678 = vsel %vm1648, %v1645, %v1129
      %v1679 = vsel %vm1648, %v1646, %v1131
      %v1680 = vsel %vm1648, %v1647, %v1133
      %vm1681 = vcmask 326656
      %v1682 = vsel %vm1681, %v1649, %v1167
      %v1683 = vsel %vm1681, %v1650, %v1169
      %v1684 = vsel %vm1681, %v1651, %v1171
      %v1685 = vsel %vm1681, %v1652, %v1173
      %v1686 = vsel %vm1681, %v1653, %v1175
      %v1687 = vsel %vm1681, %v1654, %v1177
      %v1688 = vsel %vm1681, %v1655, %v1179
      %v1689 = vsel %vm1681, %v1656, %v1181
      %v1690 = vsel %vm1681, %v1657, %v1183
      %v1691 = vsel %vm1681, %v1658, %v1185
      %v1692 = vsel %vm1681, %v1659, %v1187
      %v1693 = vsel %vm1681, %v1660, %v1189
      %v1694 = vsel %vm1681, %v1661, %v1191
      %v1695 = vsel %vm1681, %v1662, %v1193
      %v1696 = vsel %vm1681, %v1663, %v1195
      %v1697 = vsel %vm1681, %v1664, %v1197
      %v1698 = vsel %vm1681, %v1665, %v1199
      %v1699 = vsel %vm1681, %v1666, %v1201
      %v1700 = vsel %vm1681, %v1667, %v1203
      %v1701 = vsel %vm1681, %v1668, %v1205
      %v1702 = vsel %vm1681, %v1669, %v1207
      %v1703 = vsel %vm1681, %v1670, %v1209
      %v1704 = vsel %vm1681, %v1671, %v1211
      %v1705 = vsel %vm1681, %v1672, %v1213
      %v1706 = vsel %vm1681, %v1673, %v1215
      %v1707 = vsel %vm1681, %v1674, %v1217
      %v1708 = vsel %vm1681, %v1675, %v1219
      %v1709 = vsel %vm1681, %v1676, %v1221
      %v1710 = vsel %vm1681, %v1677, %v1223
      %v1711 = vsel %vm1681, %v1678, %v1225
      %v1712 = vsel %vm1681, %v1679, %v1227
      %v1713 = vsel %vm1681, %v1680, %v1229
      %vm1714 = vcmask 392192
      %v1715 = vsel %vm1714, %v1682, %v1263
      %v1716 = vsel %vm1714, %v1683, %v1265
      %v1717 = vsel %vm1714, %v1684, %v1267
      %v1718 = vsel %vm1714, %v1685, %v1269
      %v1719 = vsel %vm1714, %v1686, %v1271
      %v1720 = vsel %vm1714, %v1687, %v1273
      %v1721 = vsel %vm1714, %v1688, %v1275
      %v1722 = vsel %vm1714, %v1689, %v1277
      %v1723 = vsel %vm1714, %v1690, %v1279
      %v1724 = vsel %vm1714, %v1691, %v1281
      %v1725 = vsel %vm1714, %v1692, %v1283
      %v1726 = vsel %vm1714, %v1693, %v1285
      %v1727 = vsel %vm1714, %v1694, %v1287
      %v1728 = vsel %vm1714, %v1695, %v1289
      %v1729 = vsel %vm1714, %v1696, %v1291
      %v1730 = vsel %vm1714, %v1697, %v1293
      %v1731 = vsel %vm1714, %v1698, %v1295
      %v1732 = vsel %vm1714, %v1699, %v1297
      %v1733 = vsel %vm1714, %v1700, %v1299
      %v1734 = vsel %vm1714, %v1701, %v1301
      %v1735 = vsel %vm1714, %v1702, %v1303
      %v1736 = vsel %vm1714, %v1703, %v1305
      %v1737 = vsel %vm1714, %v1704, %v1307
      %v1738 = vsel %vm1714, %v1705, %v1309
      %v1739 = vsel %vm1714, %v1706, %v1311
      %v1740 = vsel %vm1714, %v1707, %v1313
      %v1741 = vsel %vm1714, %v1708, %v1315
      %v1742 = vsel %vm1714, %v1709, %v1317
      %v1743 = vsel %vm1714, %v1710, %v1319
      %v1744 = vsel %vm1714, %v1711, %v1321
      %v1745 = vsel %vm1714, %v1712, %v1323
      %v1746 = vsel %vm1714, %v1713, %v1325
      %vm1747 = vcmask 457728
      %v1748 = vsel %vm1747, %v1715, %v1359
      %v1749 = vsel %vm1747, %v1716, %v1361
      %v1750 = vsel %vm1747, %v1717, %v1363
      %v1751 = vsel %vm1747, %v1718, %v1365
      %v1752 = vsel %vm1747, %v1719, %v1367
      %v1753 = vsel %vm1747, %v1720, %v1369
      %v1754 = vsel %vm1747, %v1721, %v1371
      %v1755 = vsel %vm1747, %v1722, %v1373
      %v1756 = vsel %vm1747, %v1723, %v1375
      %v1757 = vsel %vm1747, %v1724, %v1377
      %v1758 = vsel %vm1747, %v1725, %v1379
      %v1759 = vsel %vm1747, %v1726, %v1381
      %v1760 = vsel %vm1747, %v1727, %v1383
      %v1761 = vsel %vm1747, %v1728, %v1385
      %v1762 = vsel %vm1747, %v1729, %v1387
      %v1763 = vsel %vm1747, %v1730, %v1389
      %v1764 = vsel %vm1747, %v1731, %v1391
      %v1765 = vsel %vm1747, %v1732, %v1393
      %v1766 = vsel %vm1747, %v1733, %v1395
      %v1767 = vsel %vm1747, %v1734, %v1397
      %v1768 = vsel %vm1747, %v1735, %v1399
      %v1769 = vsel %vm1747, %v1736, %v1401
      %v1770 = vsel %vm1747, %v1737, %v1403
      %v1771 = vsel %vm1747, %v1738, %v1405
      %v1772 = vsel %vm1747, %v1739, %v1407
      %v1773 = vsel %vm1747, %v1740, %v1409
      %v1774 = vsel %vm1747, %v1741, %v1411
      %v1775 = vsel %vm1747, %v1742, %v1413
      %v1776 = vsel %vm1747, %v1743, %v1415
      %v1777 = vsel %vm1747, %v1744, %v1417
      %v1778 = vsel %vm1747, %v1745, %v1419
      %v1779 = vsel %vm1747, %v1746, %v1421
      %vm1780 = vcmask 523264
      %v1781 = vsel %vm1780, %v1748, %v1455
      %v1782 = vsel %vm1780, %v1749, %v1457
      %v1783 = vsel %vm1780, %v1750, %v1459
      %v1784 = vsel %vm1780, %v1751, %v1461
      %v1785 = vsel %vm1780, %v1752, %v1463
      %v1786 = vsel %vm1780, %v1753, %v1465
      %v1787 = vsel %vm1780, %v1754, %v1467
      %v1788 = vsel %vm1780, %v1755, %v1469
      %v1789 = vsel %vm1780, %v1756, %v1471
      %v1790 = vsel %vm1780, %v1757, %v1473
      %v1791 = vsel %vm1780, %v1758, %v1475
      %v1792 = vsel %vm1780, %v1759, %v1477
      %v1793 = vsel %vm1780, %v1760, %v1479
      %v1794 = vsel %vm1780, %v1761, %v1481
      %v1795 = vsel %vm1780, %v1762, %v1483
      %v1796 = vsel %vm1780, %v1763, %v1485
      %v1797 = vsel %vm1780, %v1764, %v1487
      %v1798 = vsel %vm1780, %v1765, %v1489
      %v1799 = vsel %vm1780, %v1766, %v1491
      %v1800 = vsel %vm1780, %v1767, %v1493
      %v1801 = vsel %vm1780, %v1768, %v1495
      %v1802 = vsel %vm1780, %v1769, %v1497
      %v1803 = vsel %vm1780, %v1770, %v1499
      %v1804 = vsel %vm1780, %v1771, %v1501
      %v1805 = vsel %vm1780, %v1772, %v1503
      %v1806 = vsel %vm1780, %v1773, %v1505
      %v1807 = vsel %vm1780, %v1774, %v1507
      %v1808 = vsel %vm1780, %v1775, %v1509
      %v1809 = vsel %vm1780, %v1776, %v1511
      %v1810 = vsel %vm1780, %v1777, %v1513
      %v1811 = vsel %vm1780, %v1778, %v1515
      %v1812 = vsel %vm1780, %v1779, %v1517
      %v1813 = vpack.c.bf16 %v1782, %v1781
      %v1814 = vpack.c.bf16 %v1784, %v1783
      %v1815 = vpack.c.bf16 %v1786, %v1785
      %v1816 = vpack.c.bf16 %v1788, %v1787
      %v1817 = vpack.c.bf16 %v1790, %v1789
      %v1818 = vpack.c.bf16 %v1792, %v1791
      %v1819 = vpack.c.bf16 %v1794, %v1793
      %v1820 = vpack.c.bf16 %v1796, %v1795
      %v1821 = vpack.c.bf16 %v1798, %v1797
      %v1822 = vpack.c.bf16 %v1800, %v1799
      %v1823 = vpack.c.bf16 %v1802, %v1801
      %v1824 = vpack.c.bf16 %v1804, %v1803
      %v1825 = vpack.c.bf16 %v1806, %v1805
      %v1826 = vpack.c.bf16 %v1808, %v1807
      %v1827 = vpack.c.bf16 %v1810, %v1809
      %v1828 = vpack.c.bf16 %v1812, %v1811
      %v1829 = vld [vmem:[%s1] sm:$0xf]
      %v1830 = vld [vmem:[%s1 + $0x4] sm:$0xf]
      %v1831 = vld [vmem:[%s1 + $0x8] sm:$0xf]
      %v1832 = vld [vmem:[%s1 + $0xc] sm:$0xf]
      %v1833 = vld [vmem:[%s1 + $0x10] sm:$0xf]
      %v1834 = vld [vmem:[%s1 + $0x14] sm:$0xf]
      %v1835 = vld [vmem:[%s1 + $0x18] sm:$0xf]
      %v1836 = vld [vmem:[%s1 + $0x1c] sm:$0xf]
      %v1837 = vld [vmem:[%s1 + $0x20] sm:$0xf]
      %v1847 = vunpack.c.l.b16 %v1829
      %v1848 = vunpack.c.l.b16 %v1830
      %v1849 = vunpack.c.l.b16 %v1831
      %v1850 = vunpack.c.l.b16 %v1832
      %v1851 = vunpack.c.l.b16 %v1833
      %v1852 = vunpack.c.l.b16 %v1834
      %v1853 = vunpack.c.l.b16 %v1835
      %v1854 = vunpack.c.l.b16 %v1836
      %v1855 = vunpack.c.l.b16 %v1837
      %v1856 = vpack.c.b16 %v1848, %v1847
      %v1857 = vpack.c.b16 %v1850, %v1849
      %v1858 = vpack.c.b16 %v1852, %v1851
      %v1859 = vpack.c.b16 %v1854, %v1853
      %v1860 = vpack.c.b16 %v1855, %v1855
      %vm1865 = vcmask 588800
      %v1867 = vsel %vm1865, %v1813, 0
      %v1870 = vsel %vm1865, %v1814, 0
      %v1873 = vsel %vm1865, %v1815, 0
      %v1876 = vsel %vm1865, %v1816, 0
      %v1879 = vsel %vm1865, %v1817, 0
      %v1882 = vsel %vm1865, %v1818, 0
      %v1885 = vsel %vm1865, %v1819, 0
      %v1888 = vsel %vm1865, %v1820, 0
      %v1891 = vsel %vm1865, %v1821, 0
      %v1894 = vsel %vm1865, %v1822, 0
      %v1897 = vsel %vm1865, %v1823, 0
      %v1900 = vsel %vm1865, %v1824, 0
      %v1903 = vsel %vm1865, %v1825, 0
      %v1906 = vsel %vm1865, %v1826, 0
      %v1909 = vsel %vm1865, %v1827, 0
      %v1912 = vsel %vm1865, %v1828, 0
      %vm1914 = vcmask 1043456
      %v1916 = vsel %vm1914, %v1860, 0
      %1918 = vmatprep.subr.bf16.mxu0 0
      %1919 = vmatpush1.bf16.msra.mxu0 %v1856
      %1920 = vmatprep.subr.bf16.mxu0 0
      %1921 = vmatpush1.bf16.msra.mxu0 %v1857
      %1922 = vmatprep.subr.bf16.mxu0 0
      %1923 = vmatpush1.bf16.msra.mxu0 %v1858
      %1924 = vmatprep.subr.bf16.mxu0 0
      %1925 = vmatpush1.bf16.msra.mxu0 %v1859
      %1926 = vmatprep.subr.bf16.mxu0 0
      %1927 = vmatpush1.bf16.msra.mxu0 %v1916
      %1928 = vmatprep.subr.bf16.mxu0 0
      %1929 = vmatpush1.bf16.msra.mxu0 0
      %1930 = vmatprep.subr.bf16.mxu0 0
      %1931 = vmatpush1.bf16.msra.mxu0 0
      %1932 = vmatprep.subr.bf16.mxu0 0
      %1933 = vmatpush1.bf16.msra.mxu0 0
      %1934 = vmatprep.subr.bf16.mxu0 0
      %1935 = vmatpush1.bf16.msra.mxu0 0
      %1936 = vmatprep.subr.bf16.mxu0 0
      %1937 = vmatpush1.bf16.msra.mxu0 0
      %1938 = vmatprep.subr.bf16.mxu0 0
      %1939 = vmatpush1.bf16.msra.mxu0 0
      %1940 = vmatprep.subr.bf16.mxu0 0
      %1941 = vmatpush1.bf16.msra.mxu0 0
      %1942 = vmatprep.subr.bf16.mxu0 0
      %1943 = vmatpush1.bf16.msra.mxu0 0
      %1944 = vmatprep.subr.bf16.mxu0 0
      %1945 = vmatpush1.bf16.msra.mxu0 0
      %1946 = vmatprep.subr.bf16.mxu0 0
      %1947 = vmatpush1.bf16.msra.mxu0 0
      %1948 = vmatprep.subr.bf16.mxu0 0
      %1949 = vmatpush1.bf16.msra.mxu0 0
      %1950 = vmatprep.mubr.bf16.mxu0 0
      %1951 = vmatmul.mubr.bf16.gmra.mrb[0].mxu0 %v1867
      %v1952 = vpop.f32.mrb[0].mxu0
      %v1953 = vadd.f32 0.0, %v1952
      %v1954 = vpop.f32.mrb[0].mxu0
      %v1955 = vpop.f32.mrb[0].mxu0
      %v1956 = vadd.f32 0.0, %v1955
      %v1957 = vpop.f32.mrb[0].mxu0
      %1958 = vmatprep.mubr.bf16.mxu0 0
      %1959 = vmatmul.mubr.bf16.gmra.mrb[0].mxu0 %v1870
      %v1960 = vpop.f32.mrb[0].mxu0
      %v1961 = vadd.f32 0.0, %v1960
      %v1962 = vpop.f32.mrb[0].mxu0
      %v1963 = vpop.f32.mrb[0].mxu0
      %v1964 = vadd.f32 0.0, %v1963
      %v1965 = vpop.f32.mrb[0].mxu0
      %1966 = vmatprep.mubr.bf16.mxu0 0
      %1967 = vmatmul.mubr.bf16.gmra.mrb[0].mxu0 %v1873
      %v1968 = vpop.f32.mrb[0].mxu0
      %v1969 = vadd.f32 0.0, %v1968
      %v1970 = vpop.f32.mrb[0].mxu0
      %v1971 = vpop.f32.mrb[0].mxu0
      %v1972 = vadd.f32 0.0, %v1971
      %v1973 = vpop.f32.mrb[0].mxu0
      %1974 = vmatprep.mubr.bf16.mxu0 0
      %1975 = vmatmul.mubr.bf16.gmra.mrb[0].mxu0 %v1876
      %v1976 = vpop.f32.mrb[0].mxu0
      %v1977 = vadd.f32 0.0, %v1976
      %v1978 = vpop.f32.mrb[0].mxu0
      %v1979 = vpop.f32.mrb[0].mxu0
      %v1980 = vadd.f32 0.0, %v1979
      %v1981 = vpop.f32.mrb[0].mxu0
      %1982 = vmatprep.mubr.bf16.mxu0 0
      %1983 = vmatmul.mubr.bf16.gmra.mrb[0].mxu0 %v1879
      %v1984 = vpop.f32.mrb[0].mxu0
      %v1985 = vadd.f32 0.0, %v1984
      %v1986 = vpop.f32.mrb[0].mxu0
      %v1987 = vpop.f32.mrb[0].mxu0
      %v1988 = vadd.f32 0.0, %v1987
      %v1989 = vpop.f32.mrb[0].mxu0
      %1990 = vmatprep.mubr.bf16.mxu0 0
      %1991 = vmatmul.mubr.bf16.gmra.mrb[0].mxu0 %v1882
      %v1992 = vpop.f32.mrb[0].mxu0
      %v1993 = vadd.f32 0.0, %v1992
      %v1994 = vpop.f32.mrb[0].mxu0
      %v1995 = vpop.f32.mrb[0].mxu0
      %v1996 = vadd.f32 0.0, %v1995
      %v1997 = vpop.f32.mrb[0].mxu0
      %1998 = vmatprep.mubr.bf16.mxu0 0
      %1999 = vmatmul.mubr.bf16.gmra.mrb[0].mxu0 %v1885
      %v2000 = vpop.f32.mrb[0].mxu0
      %v2001 = vadd.f32 0.0, %v2000
      %v2002 = vpop.f32.mrb[0].mxu0
      %v2003 = vpop.f32.mrb[0].mxu0
      %v2004 = vadd.f32 0.0, %v2003
      %v2005 = vpop.f32.mrb[0].mxu0
      %2006 = vmatprep.mubr.bf16.mxu0 0
      %2007 = vmatmul.mubr.bf16.gmra.mrb[0].mxu0 %v1888
      %v2008 = vpop.f32.mrb[0].mxu0
      %v2009 = vadd.f32 0.0, %v2008
      %v2010 = vpop.f32.mrb[0].mxu0
      %v2011 = vpop.f32.mrb[0].mxu0
      %v2012 = vadd.f32 0.0, %v2011
      %v2013 = vpop.f32.mrb[0].mxu0
      %2014 = vmatprep.mubr.bf16.mxu0 0
      %2015 = vmatmul.mubr.bf16.gmra.mrb[0].mxu0 %v1891
      %v2016 = vpop.f32.mrb[0].mxu0
      %v2017 = vadd.f32 0.0, %v2016
      %v2018 = vpop.f32.mrb[0].mxu0
      %v2019 = vpop.f32.mrb[0].mxu0
      %v2020 = vadd.f32 0.0, %v2019
      %v2021 = vpop.f32.mrb[0].mxu0
      %2022 = vmatprep.mubr.bf16.mxu0 0
      %2023 = vmatmul.mubr.bf16.gmra.mrb[0].mxu0 %v1894
      %v2024 = vpop.f32.mrb[0].mxu0
      %v2025 = vadd.f32 0.0, %v2024
      %v2026 = vpop.f32.mrb[0].mxu0
      %v2027 = vpop.f32.mrb[0].mxu0
      %v2028 = vadd.f32 0.0, %v2027
      %v2029 = vpop.f32.mrb[0].mxu0
      %2030 = vmatprep.mubr.bf16.mxu0 0
      %2031 = vmatmul.mubr.bf16.gmra.mrb[0].mxu0 %v1897
      %v2032 = vpop.f32.mrb[0].mxu0
      %v2033 = vadd.f32 0.0, %v2032
      %v2034 = vpop.f32.mrb[0].mxu0
      %v2035 = vpop.f32.mrb[0].mxu0
      %v2036 = vadd.f32 0.0, %v2035
      %v2037 = vpop.f32.mrb[0].mxu0
      %2038 = vmatprep.mubr.bf16.mxu0 0
      %2039 = vmatmul.mubr.bf16.gmra.mrb[0].mxu0 %v1900
      %v2040 = vpop.f32.mrb[0].mxu0
      %v2041 = vadd.f32 0.0, %v2040
      %v2042 = vpop.f32.mrb[0].mxu0
      %v2043 = vpop.f32.mrb[0].mxu0
      %v2044 = vadd.f32 0.0, %v2043
      %v2045 = vpop.f32.mrb[0].mxu0
      %2046 = vmatprep.mubr.bf16.mxu0 0
      %2047 = vmatmul.mubr.bf16.gmra.mrb[0].mxu0 %v1903
      %v2048 = vpop.f32.mrb[0].mxu0
      %v2049 = vadd.f32 0.0, %v2048
      %v2050 = vpop.f32.mrb[0].mxu0
      %v2051 = vpop.f32.mrb[0].mxu0
      %v2052 = vadd.f32 0.0, %v2051
      %v2053 = vpop.f32.mrb[0].mxu0
      %2054 = vmatprep.mubr.bf16.mxu0 0
      %2055 = vmatmul.mubr.bf16.gmra.mrb[0].mxu0 %v1906
      %v2056 = vpop.f32.mrb[0].mxu0
      %v2057 = vadd.f32 0.0, %v2056
      %v2058 = vpop.f32.mrb[0].mxu0
      %v2059 = vpop.f32.mrb[0].mxu0
      %v2060 = vadd.f32 0.0, %v2059
      %v2061 = vpop.f32.mrb[0].mxu0
      %2062 = vmatprep.mubr.bf16.mxu0 0
      %2063 = vmatmul.mubr.bf16.gmra.mrb[0].mxu0 %v1909
      %v2064 = vpop.f32.mrb[0].mxu0
      %v2065 = vadd.f32 0.0, %v2064
      %v2066 = vpop.f32.mrb[0].mxu0
      %v2067 = vpop.f32.mrb[0].mxu0
      %v2068 = vadd.f32 0.0, %v2067
      %v2069 = vpop.f32.mrb[0].mxu0
      %2070 = vmatprep.mubr.bf16.mxu0 0
      %2071 = vmatmul.mubr.bf16.gmra.mrb[0].mxu0 %v1912
      %v2072 = vpop.f32.mrb[0].mxu0
      %v2073 = vadd.f32 0.0, %v2072
      %v2074 = vpop.f32.mrb[0].mxu0
      %v2075 = vpop.f32.mrb[0].mxu0
      %v2076 = vadd.f32 0.0, %v2075
      %v2077 = vpop.f32.mrb[0].mxu0
      %2078 = vdwg.mxu0
      %v2079 = vld [vmem:[%s3] sm:$0x1]
      %v2081 = vlaneseq
      %v2082 = vshrl.u32 %v2081, 7
      %v2083 = vsub.s32 0, %v2082
      %v2084 = vrot.slane %v2079, %v2083
      %v2086 = vmul.f32 %v1953, %v2084
      %v2087 = vmul.f32 %v1956, %v2084
      %v2088 = vmul.f32 %v1961, %v2084
      %v2089 = vmul.f32 %v1964, %v2084
      %v2090 = vmul.f32 %v1969, %v2084
      %v2091 = vmul.f32 %v1972, %v2084
      %v2092 = vmul.f32 %v1977, %v2084
      %v2093 = vmul.f32 %v1980, %v2084
      %v2094 = vmul.f32 %v1985, %v2084
      %v2095 = vmul.f32 %v1988, %v2084
      %v2096 = vmul.f32 %v1993, %v2084
      %v2097 = vmul.f32 %v1996, %v2084
      %v2098 = vmul.f32 %v2001, %v2084
      %v2099 = vmul.f32 %v2004, %v2084
      %v2100 = vmul.f32 %v2009, %v2084
      %v2101 = vmul.f32 %v2012, %v2084
      %v2102 = vmul.f32 %v2017, %v2084
      %v2103 = vmul.f32 %v2020, %v2084
      %v2104 = vmul.f32 %v2025, %v2084
      %v2105 = vmul.f32 %v2028, %v2084
      %v2106 = vmul.f32 %v2033, %v2084
      %v2107 = vmul.f32 %v2036, %v2084
      %v2108 = vmul.f32 %v2041, %v2084
      %v2109 = vmul.f32 %v2044, %v2084
      %v2110 = vmul.f32 %v2049, %v2084
      %v2111 = vmul.f32 %v2052, %v2084
      %v2112 = vmul.f32 %v2057, %v2084
      %v2113 = vmul.f32 %v2060, %v2084
      %v2114 = vmul.f32 %v2065, %v2084
      %v2115 = vmul.f32 %v2068, %v2084
      %v2116 = vmul.f32 %v2073, %v2084
      %v2117 = vmul.f32 %v2076, %v2084
      %v2118 = vld [vmem:[%s4] sm:$0x1]
      %v2120 = vlaneseq
      %v2121 = vshrl.u32 %v2120, 7
      %v2122 = vsub.s32 0, %v2121
      %v2123 = vrot.slane %v2118, %v2122
      %v2125 = vadd.f32 %v2086, %v2123
      %v2126 = vadd.f32 %v2087, %v2123
      %v2127 = vadd.f32 %v2088, %v2123
      %v2128 = vadd.f32 %v2089, %v2123
      %v2129 = vadd.f32 %v2090, %v2123
      %v2130 = vadd.f32 %v2091, %v2123
      %v2131 = vadd.f32 %v2092, %v2123
      %v2132 = vadd.f32 %v2093, %v2123
      %v2133 = vadd.f32 %v2094, %v2123
      %v2134 = vadd.f32 %v2095, %v2123
      %v2135 = vadd.f32 %v2096, %v2123
      %v2136 = vadd.f32 %v2097, %v2123
      %v2137 = vadd.f32 %v2098, %v2123
      %v2138 = vadd.f32 %v2099, %v2123
      %v2139 = vadd.f32 %v2100, %v2123
      %v2140 = vadd.f32 %v2101, %v2123
      %v2141 = vadd.f32 %v2102, %v2123
      %v2142 = vadd.f32 %v2103, %v2123
      %v2143 = vadd.f32 %v2104, %v2123
      %v2144 = vadd.f32 %v2105, %v2123
      %v2145 = vadd.f32 %v2106, %v2123
      %v2146 = vadd.f32 %v2107, %v2123
      %v2147 = vadd.f32 %v2108, %v2123
      %v2148 = vadd.f32 %v2109, %v2123
      %v2149 = vadd.f32 %v2110, %v2123
      %v2150 = vadd.f32 %v2111, %v2123
      %v2151 = vadd.f32 %v2112, %v2123
      %v2152 = vadd.f32 %v2113, %v2123
      %v2153 = vadd.f32 %v2114, %v2123
      %v2154 = vadd.f32 %v2115, %v2123
      %v2155 = vadd.f32 %v2116, %v2123
      %v2156 = vadd.f32 %v2117, %v2123
      %v2157 = vmax.f32 %v2125, 0.0
      %v2158 = vmax.f32 %v2126, 0.0
      %v2159 = vmax.f32 %v2127, 0.0
      %v2160 = vmax.f32 %v2128, 0.0
      %v2161 = vmax.f32 %v2129, 0.0
      %v2162 = vmax.f32 %v2130, 0.0
      %v2163 = vmax.f32 %v2131, 0.0
      %v2164 = vmax.f32 %v2132, 0.0
      %v2165 = vmax.f32 %v2133, 0.0
      %v2166 = vmax.f32 %v2134, 0.0
      %v2167 = vmax.f32 %v2135, 0.0
      %v2168 = vmax.f32 %v2136, 0.0
      %v2169 = vmax.f32 %v2137, 0.0
      %v2170 = vmax.f32 %v2138, 0.0
      %v2171 = vmax.f32 %v2139, 0.0
      %v2172 = vmax.f32 %v2140, 0.0
      %v2173 = vmax.f32 %v2141, 0.0
      %v2174 = vmax.f32 %v2142, 0.0
      %v2175 = vmax.f32 %v2143, 0.0
      %v2176 = vmax.f32 %v2144, 0.0
      %v2177 = vmax.f32 %v2145, 0.0
      %v2178 = vmax.f32 %v2146, 0.0
      %v2179 = vmax.f32 %v2147, 0.0
      %v2180 = vmax.f32 %v2148, 0.0
      %v2181 = vmax.f32 %v2149, 0.0
      %v2182 = vmax.f32 %v2150, 0.0
      %v2183 = vmax.f32 %v2151, 0.0
      %v2184 = vmax.f32 %v2152, 0.0
      %v2185 = vmax.f32 %v2153, 0.0
      %v2186 = vmax.f32 %v2154, 0.0
      %v2187 = vmax.f32 %v2155, 0.0
      %v2188 = vmax.f32 %v2156, 0.0
      %s2189 = scalar_lea.vmem [#allocation3], 24
      %2190 = vst [vmem:[%s2189 + $0x1] sm:$0xff] %v2157
      %2191 = vst [vmem:[%s2189 + $0x9] sm:$0xff] %v2158
      %2192 = vst [vmem:[%s2189 + $0x19] sm:$0xff] %v2159
      %2193 = vst [vmem:[%s2189 + $0x21] sm:$0xff] %v2160
      %2194 = vst [vmem:[%s2189 + $0x31] sm:$0xff] %v2161
      %2195 = vst [vmem:[%s2189 + $0x39] sm:$0xff] %v2162
      %2196 = vst [vmem:[%s2189 + $0x49] sm:$0xff] %v2163
      %2197 = vst [vmem:[%s2189 + $0x51] sm:$0xff] %v2164
      %2198 = vst [vmem:[%s2189 + $0x61] sm:$0xff] %v2165
      %2199 = vst [vmem:[%s2189 + $0x69] sm:$0xff] %v2166
      %2200 = vst [vmem:[%s2189 + $0x79] sm:$0xff] %v2167
      %2201 = vst [vmem:[%s2189 + $0x81] sm:$0xff] %v2168
      %2202 = vst [vmem:[%s2189 + $0x91] sm:$0xff] %v2169
      %2203 = vst [vmem:[%s2189 + $0x99] sm:$0xff] %v2170
      %2204 = vst [vmem:[%s2189 + $0xa9] sm:$0xff] %v2171
      %2205 = vst [vmem:[%s2189 + $0xb1] sm:$0xff] %v2172
      %2206 = vst [vmem:[%s2189 + $0xc1] sm:$0xff] %v2173
      %2207 = vst [vmem:[%s2189 + $0xc9] sm:$0xff] %v2174
      %2208 = vst [vmem:[%s2189 + $0xd9] sm:$0xff] %v2175
      %2209 = vst [vmem:[%s2189 + $0xe1] sm:$0xff] %v2176
      %2210 = vst [vmem:[%s2189 + $0xf1] sm:$0xff] %v2177
      %2211 = vst [vmem:[%s2189 + $0xf9] sm:$0xff] %v2178
      %2212 = vst [vmem:[%s2189 + $0x109] sm:$0xff] %v2179
      %2213 = vst [vmem:[%s2189 + $0x111] sm:$0xff] %v2180
      %2214 = vst [vmem:[%s2189 + $0x121] sm:$0xff] %v2181
      %2215 = vst [vmem:[%s2189 + $0x129] sm:$0xff] %v2182
      %2216 = vst [vmem:[%s2189 + $0x139] sm:$0xff] %v2183
      %2217 = vst [vmem:[%s2189 + $0x141] sm:$0xff] %v2184
      %2218 = vst [vmem:[%s2189 + $0x151] sm:$0xff] %v2185
      %2219 = vst [vmem:[%s2189 + $0x159] sm:$0xff] %v2186
      %2220 = vst [vmem:[%s2189 + $0x169] sm:$0xff] %v2187
      %2221 = vst [vmem:[%s2189 + $0x171] sm:$0xff] %v2188
      %v2222 = vld [vmem:[#allocation3] sm:$0xff]
      %v2223 = vld [vmem:[#allocation3 + $0x8] sm:$0xff]
      %v2224 = vld [vmem:[#allocation3 + $0x10] sm:$0x3]
      %v2225 = vld [vmem:[#allocation3 + $0x18] sm:$0xff]
      %v2226 = vld [vmem:[#allocation3 + $0x20] sm:$0xff]
      %v2227 = vld [vmem:[#allocation3 + $0x28] sm:$0x3]
      %v2228 = vld [vmem:[#allocation3 + $0x30] sm:$0xff]
      %v2229 = vld [vmem:[#allocation3 + $0x38] sm:$0xff]
      %v2230 = vld [vmem:[#allocation3 + $0x40] sm:$0x3]
      %v2231 = vld [vmem:[#allocation3 + $0x48] sm:$0xff]
      %v2232 = vld [vmem:[#allocation3 + $0x50] sm:$0xff]
      %v2233 = vld [vmem:[#allocation3 + $0x58] sm:$0x3]
      %v2234 = vld [vmem:[#allocation3 + $0x60] sm:$0xff]
      %v2235 = vld [vmem:[#allocation3 + $0x68] sm:$0xff]
      %v2236 = vld [vmem:[#allocation3 + $0x70] sm:$0x3]
      %v2237 = vld [vmem:[#allocation3 + $0x78] sm:$0xff]
      %v2238 = vld [vmem:[#allocation3 + $0x80] sm:$0xff]
      %v2239 = vld [vmem:[#allocation3 + $0x88] sm:$0x3]
      %v2240 = vld [vmem:[#allocation3 + $0x90] sm:$0xff]
      %v2241 = vld [vmem:[#allocation3 + $0x98] sm:$0xff]
      %v2242 = vld [vmem:[#allocation3 + $0xa0] sm:$0x3]
      %v2243 = vld [vmem:[#allocation3 + $0xa8] sm:$0xff]
      %v2244 = vld [vmem:[#allocation3 + $0xb0] sm:$0xff]
      %v2245 = vld [vmem:[#allocation3 + $0xb8] sm:$0x3]
      %v2246 = vld [vmem:[#allocation3 + $0xc0] sm:$0xff]
      %v2247 = vld [vmem:[#allocation3 + $0xc8] sm:$0xff]
      %v2248 = vld [vmem:[#allocation3 + $0xd0] sm:$0x3]
      %v2249 = vld [vmem:[#allocation3 + $0xd8] sm:$0xff]
      %v2250 = vld [vmem:[#allocation3 + $0xe0] sm:$0xff]
      %v2251 = vld [vmem:[#allocation3 + $0xe8] sm:$0x3]
      %v2252 = vld [vmem:[#allocation3 + $0xf0] sm:$0xff]
      %v2253 = vld [vmem:[#allocation3 + $0xf8] sm:$0xff]
      %v2254 = vld [vmem:[#allocation3 + $0x100] sm:$0x3]
      %v2255 = vld [vmem:[#allocation3 + $0x108] sm:$0xff]
      %v2256 = vld [vmem:[#allocation3 + $0x110] sm:$0xff]
      %v2257 = vld [vmem:[#allocation3 + $0x118] sm:$0x3]
      %v2258 = vld [vmem:[#allocation3 + $0x120] sm:$0xff]
      %v2259 = vld [vmem:[#allocation3 + $0x128] sm:$0xff]
      %v2260 = vld [vmem:[#allocation3 + $0x130] sm:$0x3]
      %v2261 = vld [vmem:[#allocation3 + $0x138] sm:$0xff]
      %v2262 = vld [vmem:[#allocation3 + $0x140] sm:$0xff]
      %v2263 = vld [vmem:[#allocation3 + $0x148] sm:$0x3]
      %v2264 = vld [vmem:[#allocation3 + $0x150] sm:$0xff]
      %v2265 = vld [vmem:[#allocation3 + $0x158] sm:$0xff]
      %v2266 = vld [vmem:[#allocation3 + $0x160] sm:$0x3]
      %v2267 = vld [vmem:[#allocation3 + $0x168] sm:$0xff]
      %v2268 = vld [vmem:[#allocation3 + $0x170] sm:$0xff]
      %v2269 = vld [vmem:[#allocation3 + $0x178] sm:$0x3]
      %v2270 = vld [vmem:[#allocation3 + $0x180] sm:$0xff]
      %v2271 = vld [vmem:[#allocation3 + $0x188] sm:$0xff]
      %v2272 = vld [vmem:[#allocation3 + $0x190] sm:$0x3]
      %v2273 = vld [vmem:[#allocation3 + $0x198] sm:$0xff]
      %v2274 = vld [vmem:[#allocation3 + $0x1a0] sm:$0xff]
      %v2275 = vld [vmem:[#allocation3 + $0x1a8] sm:$0x3]
      %v2276 = vld [vmem:[%s2] sm:$0xf]
      %v2277 = vld [vmem:[%s2 + $0x4] sm:$0xf]
      %v2278 = vld [vmem:[%s2 + $0x8] sm:$0xf]
      %v2279 = vld [vmem:[%s2 + $0xc] sm:$0xf]
      %v2280 = vld [vmem:[%s2 + $0x10] sm:$0xf]
      %v2281 = vld [vmem:[%s2 + $0x14] sm:$0xf]
      %v2282 = vld [vmem:[%s2 + $0x18] sm:$0xf]
      %v2283 = vld [vmem:[%s2 + $0x1c] sm:$0xf]
      %v2284 = vld [vmem:[%s2 + $0x20] sm:$0xf]
      %v2285 = vld [vmem:[%s2 + $0x24] sm:$0xf]
      %v2286 = vld [vmem:[%s2 + $0x28] sm:$0xf]
      %v2287 = vld [vmem:[%s2 + $0x2c] sm:$0xf]
      %v2288 = vld [vmem:[%s2 + $0x30] sm:$0xf]
      %v2289 = vld [vmem:[%s2 + $0x34] sm:$0xf]
      %v2290 = vld [vmem:[%s2 + $0x38] sm:$0xf]
      %v2291 = vld [vmem:[%s2 + $0x3c] sm:$0xf]
      %v2292 = vpack.c.bf16 %v2223, %v2222
      %v2293 = vpack.c.bf16 %v2226, %v2225
      %v2294 = vpack.c.bf16 %v2229, %v2228
      %v2295 = vpack.c.bf16 %v2232, %v2231
      %v2296 = vpack.c.bf16 %v2235, %v2234
      %v2297 = vpack.c.bf16 %v2238, %v2237
      %v2298 = vpack.c.bf16 %v2241, %v2240
      %v2299 = vpack.c.bf16 %v2244, %v2243
      %v2300 = vpack.c.bf16 %v2247, %v2246
      %v2301 = vpack.c.bf16 %v2250, %v2249
      %v2302 = vpack.c.bf16 %v2253, %v2252
      %v2303 = vpack.c.bf16 %v2256, %v2255
      %v2304 = vpack.c.bf16 %v2259, %v2258
      %v2305 = vpack.c.bf16 %v2262, %v2261
      %v2306 = vpack.c.bf16 %v2265, %v2264
      %v2307 = vpack.c.bf16 %v2268, %v2267
      %v2356 = vrot.slane %v2222, 1
      %v2357 = vrot.slane %v2223, 1
      %v2358 = vsel %vm594, %v2356, %v2357
      %v2359 = vrot.slane %v2224, 1
      %v2360 = vsel %vm594, %v2357, %v2359
      %v2361 = vrot.slane %v2225, 1
      %v2362 = vrot.slane %v2226, 1
      %v2363 = vsel %vm594, %v2361, %v2362
      %v2364 = vrot.slane %v2227, 1
      %v2365 = vsel %vm594, %v2362, %v2364
      %v2366 = vrot.slane %v2228, 1
      %v2367 = vrot.slane %v2229, 1
      %v2368 = vsel %vm594, %v2366, %v2367
      %v2369 = vrot.slane %v2230, 1
      %v2370 = vsel %vm594, %v2367, %v2369
      %v2371 = vrot.slane %v2231, 1
      %v2372 = vrot.slane %v2232, 1
      %v2373 = vsel %vm594, %v2371, %v2372
      %v2374 = vrot.slane %v2233, 1
      %v2375 = vsel %vm594, %v2372, %v2374
      %v2376 = vrot.slane %v2234, 1
      %v2377 = vrot.slane %v2235, 1
      %v2378 = vsel %vm594, %v2376, %v2377
      %v2379 = vrot.slane %v2236, 1
      %v2380 = vsel %vm594, %v2377, %v2379
      %v2381 = vrot.slane %v2237, 1
      %v2382 = vrot.slane %v2238, 1
      %v2383 = vsel %vm594, %v2381, %v2382
      %v2384 = vrot.slane %v2239, 1
      %v2385 = vsel %vm594, %v2382, %v2384
      %v2386 = vrot.slane %v2240, 1
      %v2387 = vrot.slane %v2241, 1
      %v2388 = vsel %vm594, %v2386, %v2387
      %v2389 = vrot.slane %v2242, 1
      %v2390 = vsel %vm594, %v2387, %v2389
      %v2391 = vrot.slane %v2243, 1
      %v2392 = vrot.slane %v2244, 1
      %v2393 = vsel %vm594, %v2391, %v2392
      %v2394 = vrot.slane %v2245, 1
      %v2395 = vsel %vm594, %v2392, %v2394
      %v2396 = vrot.slane %v2246, 1
      %v2397 = vrot.slane %v2247, 1
      %v2398 = vsel %vm594, %v2396, %v2397
      %v2399 = vrot.slane %v2248, 1
      %v2400 = vsel %vm594, %v2397, %v2399
      %v2401 = vrot.slane %v2249, 1
      %v2402 = vrot.slane %v2250, 1
      %v2403 = vsel %vm594, %v2401, %v2402
      %v2404 = vrot.slane %v2251, 1
      %v2405 = vsel %vm594, %v2402, %v2404
      %v2406 = vrot.slane %v2252, 1
      %v2407 = vrot.slane %v2253, 1
      %v2408 = vsel %vm594, %v2406, %v2407
      %v2409 = vrot.slane %v2254, 1
      %v2410 = vsel %vm594, %v2407, %v2409
      %v2411 = vrot.slane %v2255, 1
      %v2412 = vrot.slane %v2256, 1
      %v2413 = vsel %vm594, %v2411, %v2412
      %v2414 = vrot.slane %v2257, 1
      %v2415 = vsel %vm594, %v2412, %v2414
      %v2416 = vrot.slane %v2258, 1
      %v2417 = vrot.slane %v2259, 1
      %v2418 = vsel %vm594, %v2416, %v2417
      %v2419 = vrot.slane %v2260, 1
      %v2420 = vsel %vm594, %v2417, %v2419
      %v2421 = vrot.slane %v2261, 1
      %v2422 = vrot.slane %v2262, 1
      %v2423 = vsel %vm594, %v2421, %v2422
      %v2424 = vrot.slane %v2263, 1
      %v2425 = vsel %vm594, %v2422, %v2424
      %v2426 = vrot.slane %v2264, 1
      %v2427 = vrot.slane %v2265, 1
      %v2428 = vsel %vm594, %v2426, %v2427
      %v2429 = vrot.slane %v2266, 1
      %v2430 = vsel %vm594, %v2427, %v2429
      %v2431 = vrot.slane %v2267, 1
      %v2432 = vrot.slane %v2268, 1
      %v2433 = vsel %vm594, %v2431, %v2432
      %v2434 = vrot.slane %v2269, 1
      %v2435 = vsel %vm594, %v2432, %v2434
      %v2468 = vld [vmem:[%s2 + $0x40] sm:$0xf]
      %v2469 = vld [vmem:[%s2 + $0x44] sm:$0xf]
      %v2470 = vld [vmem:[%s2 + $0x48] sm:$0xf]
      %v2471 = vld [vmem:[%s2 + $0x4c] sm:$0xf]
      %v2472 = vld [vmem:[%s2 + $0x50] sm:$0xf]
      %v2473 = vld [vmem:[%s2 + $0x54] sm:$0xf]
      %v2474 = vld [vmem:[%s2 + $0x58] sm:$0xf]
      %v2475 = vld [vmem:[%s2 + $0x5c] sm:$0xf]
      %v2476 = vld [vmem:[%s2 + $0x60] sm:$0xf]
      %v2477 = vld [vmem:[%s2 + $0x64] sm:$0xf]
      %v2478 = vld [vmem:[%s2 + $0x68] sm:$0xf]
      %v2479 = vld [vmem:[%s2 + $0x6c] sm:$0xf]
      %v2480 = vld [vmem:[%s2 + $0x70] sm:$0xf]
      %v2481 = vld [vmem:[%s2 + $0x74] sm:$0xf]
      %v2482 = vld [vmem:[%s2 + $0x78] sm:$0xf]
      %v2483 = vld [vmem:[%s2 + $0x7c] sm:$0xf]
      %v2484 = vpack.c.bf16 %v2360, %v2358
      %v2485 = vpack.c.bf16 %v2365, %v2363
      %v2486 = vpack.c.bf16 %v2370, %v2368
      %v2487 = vpack.c.bf16 %v2375, %v2373
      %v2488 = vpack.c.bf16 %v2380, %v2378
      %v2489 = vpack.c.bf16 %v2385, %v2383
      %v2490 = vpack.c.bf16 %v2390, %v2388
      %v2491 = vpack.c.bf16 %v2395, %v2393
      %v2492 = vpack.c.bf16 %v2400, %v2398
      %v2493 = vpack.c.bf16 %v2405, %v2403
      %v2494 = vpack.c.bf16 %v2410, %v2408
      %v2495 = vpack.c.bf16 %v2415, %v2413
      %v2496 = vpack.c.bf16 %v2420, %v2418
      %v2497 = vpack.c.bf16 %v2425, %v2423
      %v2498 = vpack.c.bf16 %v2430, %v2428
      %v2499 = vpack.c.bf16 %v2435, %v2433
      %v2516 = vunpack.c.l.b16 %v2468
      %v2517 = vunpack.c.l.b16 %v2469
      %v2518 = vunpack.c.l.b16 %v2470
      %v2519 = vunpack.c.l.b16 %v2471
      %v2520 = vunpack.c.l.b16 %v2472
      %v2521 = vunpack.c.l.b16 %v2473
      %v2522 = vunpack.c.l.b16 %v2474
      %v2523 = vunpack.c.l.b16 %v2475
      %v2524 = vunpack.c.l.b16 %v2476
      %v2525 = vunpack.c.l.b16 %v2477
      %v2526 = vunpack.c.l.b16 %v2478
      %v2527 = vunpack.c.l.b16 %v2479
      %v2528 = vunpack.c.l.b16 %v2480
      %v2529 = vunpack.c.l.b16 %v2481
      %v2530 = vunpack.c.l.b16 %v2482
      %v2531 = vunpack.c.l.b16 %v2483
      %v2532 = vpack.c.b16 %v2517, %v2516
      %v2533 = vpack.c.b16 %v2519, %v2518
      %v2534 = vpack.c.b16 %v2521, %v2520
      %v2535 = vpack.c.b16 %v2523, %v2522
      %v2536 = vpack.c.b16 %v2525, %v2524
      %v2537 = vpack.c.b16 %v2527, %v2526
      %v2538 = vpack.c.b16 %v2529, %v2528
      %v2539 = vpack.c.b16 %v2531, %v2530
      %2548 = vmatprep.subr.bf16.mxu0 0
      %2549 = vmatpush1.bf16.msra.mxu0 %v2532
      %2550 = vmatprep.subr.bf16.mxu0 0
      %2551 = vmatpush1.bf16.msra.mxu0 %v2533
      %2552 = vmatprep.subr.bf16.mxu0 0
      %2553 = vmatpush1.bf16.msra.mxu0 %v2534
      %2554 = vmatprep.subr.bf16.mxu0 0
      %2555 = vmatpush1.bf16.msra.mxu0 %v2535
      %2556 = vmatprep.subr.bf16.mxu0 0
      %2557 = vmatpush1.bf16.msra.mxu0 %v2536
      %2558 = vmatprep.subr.bf16.mxu0 0
      %2559 = vmatpush1.bf16.msra.mxu0 %v2537
      %2560 = vmatprep.subr.bf16.mxu0 0
      %2561 = vmatpush1.bf16.msra.mxu0 %v2538
      %2562 = vmatprep.subr.bf16.mxu0 0
      %2563 = vmatpush1.bf16.msra.mxu0 %v2539
      %2564 = vmatprep.subr.bf16.mxu0 0
      %2565 = vmatpush1.bf16.msra.mxu0 0
      %2566 = vmatprep.subr.bf16.mxu0 0
      %2567 = vmatpush1.bf16.msra.mxu0 0
      %2568 = vmatprep.subr.bf16.mxu0 0
      %2569 = vmatpush1.bf16.msra.mxu0 0
      %2570 = vmatprep.subr.bf16.mxu0 0
      %2571 = vmatpush1.bf16.msra.mxu0 0
      %2572 = vmatprep.subr.bf16.mxu0 0
      %2573 = vmatpush1.bf16.msra.mxu0 0
      %2574 = vmatprep.subr.bf16.mxu0 0
      %2575 = vmatpush1.bf16.msra.mxu0 0
      %2576 = vmatprep.subr.bf16.mxu0 0
      %2577 = vmatpush1.bf16.msra.mxu0 0
      %2578 = vmatprep.subr.bf16.mxu0 0
      %2579 = vmatpush1.bf16.msra.mxu0 0
      %2580 = vmatprep.mubr.bf16.mxu0 0
      %2581 = vmatmul.mubr.bf16.gmra.mrb[0].mxu0 %v2484
      %v2582 = vpop.f32.mrb[0].mxu0
      %v2583 = vadd.f32 0.0, %v2582
      %v2584 = vpop.f32.mrb[0].mxu0
      %v2585 = vpop.f32.mrb[0].mxu0
      %v2586 = vadd.f32 0.0, %v2585
      %v2587 = vpop.f32.mrb[0].mxu0
      %2588 = vmatprep.mubr.bf16.mxu0 0
      %2589 = vmatmul.mubr.bf16.gmra.mrb[0].mxu0 %v2485
      %v2590 = vpop.f32.mrb[0].mxu0
      %v2591 = vadd.f32 0.0, %v2590
      %v2592 = vpop.f32.mrb[0].mxu0
      %v2593 = vpop.f32.mrb[0].mxu0
      %v2594 = vadd.f32 0.0, %v2593
      %v2595 = vpop.f32.mrb[0].mxu0
      %2596 = vmatprep.mubr.bf16.mxu0 0
      %2597 = vmatmul.mubr.bf16.gmra.mrb[0].mxu0 %v2486
      %v2598 = vpop.f32.mrb[0].mxu0
      %v2599 = vadd.f32 0.0, %v2598
      %v2600 = vpop.f32.mrb[0].mxu0
      %v2601 = vpop.f32.mrb[0].mxu0
      %v2602 = vadd.f32 0.0, %v2601
      %v2603 = vpop.f32.mrb[0].mxu0
      %2604 = vmatprep.mubr.bf16.mxu0 0
      %2605 = vmatmul.mubr.bf16.gmra.mrb[0].mxu0 %v2487
      %v2606 = vpop.f32.mrb[0].mxu0
      %v2607 = vadd.f32 0.0, %v2606
      %v2608 = vpop.f32.mrb[0].mxu0
      %v2609 = vpop.f32.mrb[0].mxu0
      %v2610 = vadd.f32 0.0, %v2609
      %v2611 = vpop.f32.mrb[0].mxu0
      %2612 = vmatprep.mubr.bf16.mxu0 0
      %2613 = vmatmul.mubr.bf16.gmra.mrb[0].mxu0 %v2488
      %v2614 = vpop.f32.mrb[0].mxu0
      %v2615 = vadd.f32 0.0, %v2614
      %v2616 = vpop.f32.mrb[0].mxu0
      %v2617 = vpop.f32.mrb[0].mxu0
      %v2618 = vadd.f32 0.0, %v2617
      %v2619 = vpop.f32.mrb[0].mxu0
      %2620 = vmatprep.mubr.bf16.mxu0 0
      %2621 = vmatmul.mubr.bf16.gmra.mrb[0].mxu0 %v2489
      %v2622 = vpop.f32.mrb[0].mxu0
      %v2623 = vadd.f32 0.0, %v2622
      %v2624 = vpop.f32.mrb[0].mxu0
      %v2625 = vpop.f32.mrb[0].mxu0
      %v2626 = vadd.f32 0.0, %v2625
      %v2627 = vpop.f32.mrb[0].mxu0
      %2628 = vmatprep.mubr.bf16.mxu0 0
      %2629 = vmatmul.mubr.bf16.gmra.mrb[0].mxu0 %v2490
      %v2630 = vpop.f32.mrb[0].mxu0
      %v2631 = vadd.f32 0.0, %v2630
      %v2632 = vpop.f32.mrb[0].mxu0
      %v2633 = vpop.f32.mrb[0].mxu0
      %v2634 = vadd.f32 0.0, %v2633
      %v2635 = vpop.f32.mrb[0].mxu0
      %2636 = vmatprep.mubr.bf16.mxu0 0
      %2637 = vmatmul.mubr.bf16.gmra.mrb[0].mxu0 %v2491
      %v2638 = vpop.f32.mrb[0].mxu0
      %v2639 = vadd.f32 0.0, %v2638
      %v2640 = vpop.f32.mrb[0].mxu0
      %v2641 = vpop.f32.mrb[0].mxu0
      %v2642 = vadd.f32 0.0, %v2641
      %v2643 = vpop.f32.mrb[0].mxu0
      %2644 = vmatprep.mubr.bf16.mxu0 0
      %2645 = vmatmul.mubr.bf16.gmra.mrb[0].mxu0 %v2492
      %v2646 = vpop.f32.mrb[0].mxu0
      %v2647 = vadd.f32 0.0, %v2646
      %v2648 = vpop.f32.mrb[0].mxu0
      %v2649 = vpop.f32.mrb[0].mxu0
      %v2650 = vadd.f32 0.0, %v2649
      %v2651 = vpop.f32.mrb[0].mxu0
      %2652 = vmatprep.mubr.bf16.mxu0 0
      %2653 = vmatmul.mubr.bf16.gmra.mrb[0].mxu0 %v2493
      %v2654 = vpop.f32.mrb[0].mxu0
      %v2655 = vadd.f32 0.0, %v2654
      %v2656 = vpop.f32.mrb[0].mxu0
      %v2657 = vpop.f32.mrb[0].mxu0
      %v2658 = vadd.f32 0.0, %v2657
      %v2659 = vpop.f32.mrb[0].mxu0
      %2660 = vmatprep.mubr.bf16.mxu0 0
      %2661 = vmatmul.mubr.bf16.gmra.mrb[0].mxu0 %v2494
      %v2662 = vpop.f32.mrb[0].mxu0
      %v2663 = vadd.f32 0.0, %v2662
      %v2664 = vpop.f32.mrb[0].mxu0
      %v2665 = vpop.f32.mrb[0].mxu0
      %v2666 = vadd.f32 0.0, %v2665
      %v2667 = vpop.f32.mrb[0].mxu0
      %2668 = vmatprep.mubr.bf16.mxu0 0
      %2669 = vmatmul.mubr.bf16.gmra.mrb[0].mxu0 %v2495
      %v2670 = vpop.f32.mrb[0].mxu0
      %v2671 = vadd.f32 0.0, %v2670
      %v2672 = vpop.f32.mrb[0].mxu0
      %v2673 = vpop.f32.mrb[0].mxu0
      %v2674 = vadd.f32 0.0, %v2673
      %v2675 = vpop.f32.mrb[0].mxu0
      %2676 = vmatprep.mubr.bf16.mxu0 0
      %2677 = vmatmul.mubr.bf16.gmra.mrb[0].mxu0 %v2496
      %v2678 = vpop.f32.mrb[0].mxu0
      %v2679 = vadd.f32 0.0, %v2678
      %v2680 = vpop.f32.mrb[0].mxu0
      %v2681 = vpop.f32.mrb[0].mxu0
      %v2682 = vadd.f32 0.0, %v2681
      %v2683 = vpop.f32.mrb[0].mxu0
      %2684 = vmatprep.mubr.bf16.mxu0 0
      %2685 = vmatmul.mubr.bf16.gmra.mrb[0].mxu0 %v2497
      %v2686 = vpop.f32.mrb[0].mxu0
      %v2687 = vadd.f32 0.0, %v2686
      %v2688 = vpop.f32.mrb[0].mxu0
      %v2689 = vpop.f32.mrb[0].mxu0
      %v2690 = vadd.f32 0.0, %v2689
      %v2691 = vpop.f32.mrb[0].mxu0
      %2692 = vmatprep.mubr.bf16.mxu0 0
      %2693 = vmatmul.mubr.bf16.gmra.mrb[0].mxu0 %v2498
      %v2694 = vpop.f32.mrb[0].mxu0
      %v2695 = vadd.f32 0.0, %v2694
      %v2696 = vpop.f32.mrb[0].mxu0
      %v2697 = vpop.f32.mrb[0].mxu0
      %v2698 = vadd.f32 0.0, %v2697
      %v2699 = vpop.f32.mrb[0].mxu0
      %2700 = vmatprep.mubr.bf16.mxu0 0
      %2701 = vmatmul.mubr.bf16.gmra.mrb[0].mxu0 %v2499
      %v2702 = vpop.f32.mrb[0].mxu0
      %v2703 = vadd.f32 0.0, %v2702
      %v2704 = vpop.f32.mrb[0].mxu0
      %v2705 = vpop.f32.mrb[0].mxu0
      %v2706 = vadd.f32 0.0, %v2705
      %v2707 = vpop.f32.mrb[0].mxu0
      %2708 = vdwg.mxu0
      %v2725 = vunpack.c.l.b16 %v2276
      %v2726 = vunpack.c.l.b16 %v2277
      %v2727 = vunpack.c.l.b16 %v2278
      %v2728 = vunpack.c.l.b16 %v2279
      %v2729 = vunpack.c.l.b16 %v2280
      %v2730 = vunpack.c.l.b16 %v2281
      %v2731 = vunpack.c.l.b16 %v2282
      %v2732 = vunpack.c.l.b16 %v2283
      %v2733 = vunpack.c.l.b16 %v2284
      %v2734 = vunpack.c.l.b16 %v2285
      %v2735 = vunpack.c.l.b16 %v2286
      %v2736 = vunpack.c.l.b16 %v2287
      %v2737 = vunpack.c.l.b16 %v2288
      %v2738 = vunpack.c.l.b16 %v2289
      %v2739 = vunpack.c.l.b16 %v2290
      %v2740 = vunpack.c.l.b16 %v2291
      %v2741 = vpack.c.b16 %v2726, %v2725
      %v2742 = vpack.c.b16 %v2728, %v2727
      %v2743 = vpack.c.b16 %v2730, %v2729
      %v2744 = vpack.c.b16 %v2732, %v2731
      %v2745 = vpack.c.b16 %v2734, %v2733
      %v2746 = vpack.c.b16 %v2736, %v2735
      %v2747 = vpack.c.b16 %v2738, %v2737
      %v2748 = vpack.c.b16 %v2740, %v2739
      %2757 = vmatprep.subr.bf16.mxu0 0
      %2758 = vmatpush1.bf16.msra.mxu0 %v2741
      %2759 = vmatprep.subr.bf16.mxu0 0
      %2760 = vmatpush1.bf16.msra.mxu0 %v2742
      %2761 = vmatprep.subr.bf16.mxu0 0
      %2762 = vmatpush1.bf16.msra.mxu0 %v2743
      %2763 = vmatprep.subr.bf16.mxu0 0
      %2764 = vmatpush1.bf16.msra.mxu0 %v2744
      %2765 = vmatprep.subr.bf16.mxu0 0
      %2766 = vmatpush1.bf16.msra.mxu0 %v2745
      %2767 = vmatprep.subr.bf16.mxu0 0
      %2768 = vmatpush1.bf16.msra.mxu0 %v2746
      %2769 = vmatprep.subr.bf16.mxu0 0
      %2770 = vmatpush1.bf16.msra.mxu0 %v2747
      %2771 = vmatprep.subr.bf16.mxu0 0
      %2772 = vmatpush1.bf16.msra.mxu0 %v2748
      %2773 = vmatprep.subr.bf16.mxu0 0
      %2774 = vmatpush1.bf16.msra.mxu0 0
      %2775 = vmatprep.subr.bf16.mxu0 0
      %2776 = vmatpush1.bf16.msra.mxu0 0
      %2777 = vmatprep.subr.bf16.mxu0 0
      %2778 = vmatpush1.bf16.msra.mxu0 0
      %2779 = vmatprep.subr.bf16.mxu0 0
      %2780 = vmatpush1.bf16.msra.mxu0 0
      %2781 = vmatprep.subr.bf16.mxu0 0
      %2782 = vmatpush1.bf16.msra.mxu0 0
      %2783 = vmatprep.subr.bf16.mxu0 0
      %2784 = vmatpush1.bf16.msra.mxu0 0
      %2785 = vmatprep.subr.bf16.mxu0 0
      %2786 = vmatpush1.bf16.msra.mxu0 0
      %2787 = vmatprep.subr.bf16.mxu0 0
      %2788 = vmatpush1.bf16.msra.mxu0 0
      %2789 = vmatprep.mubr.bf16.mxu0 0
      %2790 = vmatmul.mubr.bf16.gmra.mrb[0].mxu0 %v2292
      %v2791 = vpop.f32.mrb[0].mxu0
      %v2792 = vadd.f32 %v2583, %v2791
      %v2793 = vpop.f32.mrb[0].mxu0
      %v2794 = vpop.f32.mrb[0].mxu0
      %v2795 = vadd.f32 %v2586, %v2794
      %v2796 = vpop.f32.mrb[0].mxu0
      %2797 = vmatprep.mubr.bf16.mxu0 0
      %2798 = vmatmul.mubr.bf16.gmra.mrb[0].mxu0 %v2293
      %v2799 = vpop.f32.mrb[0].mxu0
      %v2800 = vadd.f32 %v2591, %v2799
      %v2801 = vpop.f32.mrb[0].mxu0
      %v2802 = vpop.f32.mrb[0].mxu0
      %v2803 = vadd.f32 %v2594, %v2802
      %v2804 = vpop.f32.mrb[0].mxu0
      %2805 = vmatprep.mubr.bf16.mxu0 0
      %2806 = vmatmul.mubr.bf16.gmra.mrb[0].mxu0 %v2294
      %v2807 = vpop.f32.mrb[0].mxu0
      %v2808 = vadd.f32 %v2599, %v2807
      %v2809 = vpop.f32.mrb[0].mxu0
      %v2810 = vpop.f32.mrb[0].mxu0
      %v2811 = vadd.f32 %v2602, %v2810
      %v2812 = vpop.f32.mrb[0].mxu0
      %2813 = vmatprep.mubr.bf16.mxu0 0
      %2814 = vmatmul.mubr.bf16.gmra.mrb[0].mxu0 %v2295
      %v2815 = vpop.f32.mrb[0].mxu0
      %v2816 = vadd.f32 %v2607, %v2815
      %v2817 = vpop.f32.mrb[0].mxu0
      %v2818 = vpop.f32.mrb[0].mxu0
      %v2819 = vadd.f32 %v2610, %v2818
      %v2820 = vpop.f32.mrb[0].mxu0
      %2821 = vmatprep.mubr.bf16.mxu0 0
      %2822 = vmatmul.mubr.bf16.gmra.mrb[0].mxu0 %v2296
      %v2823 = vpop.f32.mrb[0].mxu0
      %v2824 = vadd.f32 %v2615, %v2823
      %v2825 = vpop.f32.mrb[0].mxu0
      %v2826 = vpop.f32.mrb[0].mxu0
      %v2827 = vadd.f32 %v2618, %v2826
      %v2828 = vpop.f32.mrb[0].mxu0
      %2829 = vmatprep.mubr.bf16.mxu0 0
      %2830 = vmatmul.mubr.bf16.gmra.mrb[0].mxu0 %v2297
      %v2831 = vpop.f32.mrb[0].mxu0
      %v2832 = vadd.f32 %v2623, %v2831
      %v2833 = vpop.f32.mrb[0].mxu0
      %v2834 = vpop.f32.mrb[0].mxu0
      %v2835 = vadd.f32 %v2626, %v2834
      %v2836 = vpop.f32.mrb[0].mxu0
      %2837 = vmatprep.mubr.bf16.mxu0 0
      %2838 = vmatmul.mubr.bf16.gmra.mrb[0].mxu0 %v2298
      %v2839 = vpop.f32.mrb[0].mxu0
      %v2840 = vadd.f32 %v2631, %v2839
      %v2841 = vpop.f32.mrb[0].mxu0
      %v2842 = vpop.f32.mrb[0].mxu0
      %v2843 = vadd.f32 %v2634, %v2842
      %v2844 = vpop.f32.mrb[0].mxu0
      %2845 = vmatprep.mubr.bf16.mxu0 0
      %2846 = vmatmul.mubr.bf16.gmra.mrb[0].mxu0 %v2299
      %v2847 = vpop.f32.mrb[0].mxu0
      %v2848 = vadd.f32 %v2639, %v2847
      %v2849 = vpop.f32.mrb[0].mxu0
      %v2850 = vpop.f32.mrb[0].mxu0
      %v2851 = vadd.f32 %v2642, %v2850
      %v2852 = vpop.f32.mrb[0].mxu0
      %2853 = vmatprep.mubr.bf16.mxu0 0
      %2854 = vmatmul.mubr.bf16.gmra.mrb[0].mxu0 %v2300
      %v2855 = vpop.f32.mrb[0].mxu0
      %v2856 = vadd.f32 %v2647, %v2855
      %v2857 = vpop.f32.mrb[0].mxu0
      %v2858 = vpop.f32.mrb[0].mxu0
      %v2859 = vadd.f32 %v2650, %v2858
      %v2860 = vpop.f32.mrb[0].mxu0
      %2861 = vmatprep.mubr.bf16.mxu0 0
      %2862 = vmatmul.mubr.bf16.gmra.mrb[0].mxu0 %v2301
      %v2863 = vpop.f32.mrb[0].mxu0
      %v2864 = vadd.f32 %v2655, %v2863
      %v2865 = vpop.f32.mrb[0].mxu0
      %v2866 = vpop.f32.mrb[0].mxu0
      %v2867 = vadd.f32 %v2658, %v2866
      %v2868 = vpop.f32.mrb[0].mxu0
      %2869 = vmatprep.mubr.bf16.mxu0 0
      %2870 = vmatmul.mubr.bf16.gmra.mrb[0].mxu0 %v2302
      %v2871 = vpop.f32.mrb[0].mxu0
      %v2872 = vadd.f32 %v2663, %v2871
      %v2873 = vpop.f32.mrb[0].mxu0
      %v2874 = vpop.f32.mrb[0].mxu0
      %v2875 = vadd.f32 %v2666, %v2874
      %v2876 = vpop.f32.mrb[0].mxu0
      %2877 = vmatprep.mubr.bf16.mxu0 0
      %2878 = vmatmul.mubr.bf16.gmra.mrb[0].mxu0 %v2303
      %v2879 = vpop.f32.mrb[0].mxu0
      %v2880 = vadd.f32 %v2671, %v2879
      %v2881 = vpop.f32.mrb[0].mxu0
      %v2882 = vpop.f32.mrb[0].mxu0
      %v2883 = vadd.f32 %v2674, %v2882
      %v2884 = vpop.f32.mrb[0].mxu0
      %2885 = vmatprep.mubr.bf16.mxu0 0
      %2886 = vmatmul.mubr.bf16.gmra.mrb[0].mxu0 %v2304
      %v2887 = vpop.f32.mrb[0].mxu0
      %v2888 = vadd.f32 %v2679, %v2887
      %v2889 = vpop.f32.mrb[0].mxu0
      %v2890 = vpop.f32.mrb[0].mxu0
      %v2891 = vadd.f32 %v2682, %v2890
      %v2892 = vpop.f32.mrb[0].mxu0
      %2893 = vmatprep.mubr.bf16.mxu0 0
      %2894 = vmatmul.mubr.bf16.gmra.mrb[0].mxu0 %v2305
      %v2895 = vpop.f32.mrb[0].mxu0
      %v2896 = vadd.f32 %v2687, %v2895
      %v2897 = vpop.f32.mrb[0].mxu0
      %v2898 = vpop.f32.mrb[0].mxu0
      %v2899 = vadd.f32 %v2690, %v2898
      %v2900 = vpop.f32.mrb[0].mxu0
      %2901 = vmatprep.mubr.bf16.mxu0 0
      %2902 = vmatmul.mubr.bf16.gmra.mrb[0].mxu0 %v2306
      %v2903 = vpop.f32.mrb[0].mxu0
      %v2904 = vadd.f32 %v2695, %v2903
      %v2905 = vpop.f32.mrb[0].mxu0
      %v2906 = vpop.f32.mrb[0].mxu0
      %v2907 = vadd.f32 %v2698, %v2906
      %v2908 = vpop.f32.mrb[0].mxu0
      %2909 = vmatprep.mubr.bf16.mxu0 0
      %2910 = vmatmul.mubr.bf16.gmra.mrb[0].mxu0 %v2307
      %v2911 = vpop.f32.mrb[0].mxu0
      %v2912 = vadd.f32 %v2703, %v2911
      %v2913 = vpop.f32.mrb[0].mxu0
      %v2914 = vpop.f32.mrb[0].mxu0
      %v2915 = vadd.f32 %v2706, %v2914
      %v2916 = vpop.f32.mrb[0].mxu0
      %2917 = vdwg.mxu0
      %v2918 = vrot.slane %v2222, 2
      %v2919 = vrot.slane %v2223, 2
      %v2920 = vsel %vm675, %v2918, %v2919
      %v2921 = vrot.slane %v2224, 2
      %v2922 = vsel %vm675, %v2919, %v2921
      %v2923 = vrot.slane %v2225, 2
      %v2924 = vrot.slane %v2226, 2
      %v2925 = vsel %vm675, %v2923, %v2924
      %v2926 = vrot.slane %v2227, 2
      %v2927 = vsel %vm675, %v2924, %v2926
      %v2928 = vrot.slane %v2228, 2
      %v2929 = vrot.slane %v2229, 2
      %v2930 = vsel %vm675, %v2928, %v2929
      %v2931 = vrot.slane %v2230, 2
      %v2932 = vsel %vm675, %v2929, %v2931
      %v2933 = vrot.slane %v2231, 2
      %v2934 = vrot.slane %v2232, 2
      %v2935 = vsel %vm675, %v2933, %v2934
      %v2936 = vrot.slane %v2233, 2
      %v2937 = vsel %vm675, %v2934, %v2936
      %v2938 = vrot.slane %v2234, 2
      %v2939 = vrot.slane %v2235, 2
      %v2940 = vsel %vm675, %v2938, %v2939
      %v2941 = vrot.slane %v2236, 2
      %v2942 = vsel %vm675, %v2939, %v2941
      %v2943 = vrot.slane %v2237, 2
      %v2944 = vrot.slane %v2238, 2
      %v2945 = vsel %vm675, %v2943, %v2944
      %v2946 = vrot.slane %v2239, 2
      %v2947 = vsel %vm675, %v2944, %v2946
      %v2948 = vrot.slane %v2240, 2
      %v2949 = vrot.slane %v2241, 2
      %v2950 = vsel %vm675, %v2948, %v2949
      %v2951 = vrot.slane %v2242, 2
      %v2952 = vsel %vm675, %v2949, %v2951
      %v2953 = vrot.slane %v2243, 2
      %v2954 = vrot.slane %v2244, 2
      %v2955 = vsel %vm675, %v2953, %v2954
      %v2956 = vrot.slane %v2245, 2
      %v2957 = vsel %vm675, %v2954, %v2956
      %v2958 = vrot.slane %v2246, 2
      %v2959 = vrot.slane %v2247, 2
      %v2960 = vsel %vm675, %v2958, %v2959
      %v2961 = vrot.slane %v2248, 2
      %v2962 = vsel %vm675, %v2959, %v2961
      %v2963 = vrot.slane %v2249, 2
      %v2964 = vrot.slane %v2250, 2
      %v2965 = vsel %vm675, %v2963, %v2964
      %v2966 = vrot.slane %v2251, 2
      %v2967 = vsel %vm675, %v2964, %v2966
      %v2968 = vrot.slane %v2252, 2
      %v2969 = vrot.slane %v2253, 2
      %v2970 = vsel %vm675, %v2968, %v2969
      %v2971 = vrot.slane %v2254, 2
      %v2972 = vsel %vm675, %v2969, %v2971
      %v2973 = vrot.slane %v2255, 2
      %v2974 = vrot.slane %v2256, 2
      %v2975 = vsel %vm675, %v2973, %v2974
      %v2976 = vrot.slane %v2257, 2
      %v2977 = vsel %vm675, %v2974, %v2976
      %v2978 = vrot.slane %v2258, 2
      %v2979 = vrot.slane %v2259, 2
      %v2980 = vsel %vm675, %v2978, %v2979
      %v2981 = vrot.slane %v2260, 2
      %v2982 = vsel %vm675, %v2979, %v2981
      %v2983 = vrot.slane %v2261, 2
      %v2984 = vrot.slane %v2262, 2
      %v2985 = vsel %vm675, %v2983, %v2984
      %v2986 = vrot.slane %v2263, 2
      %v2987 = vsel %vm675, %v2984, %v2986
      %v2988 = vrot.slane %v2264, 2
      %v2989 = vrot.slane %v2265, 2
      %v2990 = vsel %vm675, %v2988, %v2989
      %v2991 = vrot.slane %v2266, 2
      %v2992 = vsel %vm675, %v2989, %v2991
      %v2993 = vrot.slane %v2267, 2
      %v2994 = vrot.slane %v2268, 2
      %v2995 = vsel %vm675, %v2993, %v2994
      %v2996 = vrot.slane %v2269, 2
      %v2997 = vsel %vm675, %v2994, %v2996
      %v3030 = vld [vmem:[%s2 + $0x80] sm:$0xf]
      %v3031 = vld [vmem:[%s2 + $0x84] sm:$0xf]
      %v3032 = vld [vmem:[%s2 + $0x88] sm:$0xf]
      %v3033 = vld [vmem:[%s2 + $0x8c] sm:$0xf]
      %v3034 = vld [vmem:[%s2 + $0x90] sm:$0xf]
      %v3035 = vld [vmem:[%s2 + $0x94] sm:$0xf]
      %v3036 = vld [vmem:[%s2 + $0x98] sm:$0xf]
      %v3037 = vld [vmem:[%s2 + $0x9c] sm:$0xf]
      %v3038 = vld [vmem:[%s2 + $0xa0] sm:$0xf]
      %v3039 = vld [vmem:[%s2 + $0xa4] sm:$0xf]
      %v3040 = vld [vmem:[%s2 + $0xa8] sm:$0xf]
      %v3041 = vld [vmem:[%s2 + $0xac] sm:$0xf]
      %v3042 = vld [vmem:[%s2 + $0xb0] sm:$0xf]
      %v3043 = vld [vmem:[%s2 + $0xb4] sm:$0xf]
      %v3044 = vld [vmem:[%s2 + $0xb8] sm:$0xf]
      %v3045 = vld [vmem:[%s2 + $0xbc] sm:$0xf]
      %v3046 = vpack.c.bf16 %v2922, %v2920
      %v3047 = vpack.c.bf16 %v2927, %v2925
      %v3048 = vpack.c.bf16 %v2932, %v2930
      %v3049 = vpack.c.bf16 %v2937, %v2935
      %v3050 = vpack.c.bf16 %v2942, %v2940
      %v3051 = vpack.c.bf16 %v2947, %v2945
      %v3052 = vpack.c.bf16 %v2952, %v2950
      %v3053 = vpack.c.bf16 %v2957, %v2955
      %v3054 = vpack.c.bf16 %v2962, %v2960
      %v3055 = vpack.c.bf16 %v2967, %v2965
      %v3056 = vpack.c.bf16 %v2972, %v2970
      %v3057 = vpack.c.bf16 %v2977, %v2975
      %v3058 = vpack.c.bf16 %v2982, %v2980
      %v3059 = vpack.c.bf16 %v2987, %v2985
      %v3060 = vpack.c.bf16 %v2992, %v2990
      %v3061 = vpack.c.bf16 %v2997, %v2995
      %v3078 = vunpack.c.l.b16 %v3030
      %v3079 = vunpack.c.l.b16 %v3031
      %v3080 = vunpack.c.l.b16 %v3032
      %v3081 = vunpack.c.l.b16 %v3033
      %v3082 = vunpack.c.l.b16 %v3034
      %v3083 = vunpack.c.l.b16 %v3035
      %v3084 = vunpack.c.l.b16 %v3036
      %v3085 = vunpack.c.l.b16 %v3037
      %v3086 = vunpack.c.l.b16 %v3038
      %v3087 = vunpack.c.l.b16 %v3039
      %v3088 = vunpack.c.l.b16 %v3040
      %v3089 = vunpack.c.l.b16 %v3041
      %v3090 = vunpack.c.l.b16 %v3042
      %v3091 = vunpack.c.l.b16 %v3043
      %v3092 = vunpack.c.l.b16 %v3044
      %v3093 = vunpack.c.l.b16 %v3045
      %v3094 = vpack.c.b16 %v3079, %v3078
      %v3095 = vpack.c.b16 %v3081, %v3080
      %v3096 = vpack.c.b16 %v3083, %v3082
      %v3097 = vpack.c.b16 %v3085, %v3084
      %v3098 = vpack.c.b16 %v3087, %v3086
      %v3099 = vpack.c.b16 %v3089, %v3088
      %v3100 = vpack.c.b16 %v3091, %v3090
      %v3101 = vpack.c.b16 %v3093, %v3092
      %3110 = vmatprep.subr.bf16.mxu0 0
      %3111 = vmatpush1.bf16.msra.mxu0 %v3094
      %3112 = vmatprep.subr.bf16.mxu0 0
      %3113 = vmatpush1.bf16.msra.mxu0 %v3095
      %3114 = vmatprep.subr.bf16.mxu0 0
      %3115 = vmatpush1.bf16.msra.mxu0 %v3096
      %3116 = vmatprep.subr.bf16.mxu0 0
      %3117 = vmatpush1.bf16.msra.mxu0 %v3097
      %3118 = vmatprep.subr.bf16.mxu0 0
      %3119 = vmatpush1.bf16.msra.mxu0 %v3098
      %3120 = vmatprep.subr.bf16.mxu0 0
      %3121 = vmatpush1.bf16.msra.mxu0 %v3099
      %3122 = vmatprep.subr.bf16.mxu0 0
      %3123 = vmatpush1.bf16.msra.mxu0 %v3100
      %3124 = vmatprep.subr.bf16.mxu0 0
      %3125 = vmatpush1.bf16.msra.mxu0 %v3101
      %3126 = vmatprep.subr.bf16.mxu0 0
      %3127 = vmatpush1.bf16.msra.mxu0 0
      %3128 = vmatprep.subr.bf16.mxu0 0
      %3129 = vmatpush1.bf16.msra.mxu0 0
      %3130 = vmatprep.subr.bf16.mxu0 0
      %3131 = vmatpush1.bf16.msra.mxu0 0
      %3132 = vmatprep.subr.bf16.mxu0 0
      %3133 = vmatpush1.bf16.msra.mxu0 0
      %3134 = vmatprep.subr.bf16.mxu0 0
      %3135 = vmatpush1.bf16.msra.mxu0 0
      %3136 = vmatprep.subr.bf16.mxu0 0
      %3137 = vmatpush1.bf16.msra.mxu0 0
      %3138 = vmatprep.subr.bf16.mxu0 0
      %3139 = vmatpush1.bf16.msra.mxu0 0
      %3140 = vmatprep.subr.bf16.mxu0 0
      %3141 = vmatpush1.bf16.msra.mxu0 0
      %3142 = vmatprep.mubr.bf16.mxu0 0
      %3143 = vmatmul.mubr.bf16.gmra.mrb[0].mxu0 %v3046
      %v3144 = vpop.f32.mrb[0].mxu0
      %v3145 = vadd.f32 0.0, %v3144
      %v3146 = vpop.f32.mrb[0].mxu0
      %v3147 = vpop.f32.mrb[0].mxu0
      %v3148 = vadd.f32 0.0, %v3147
      %v3149 = vpop.f32.mrb[0].mxu0
      %3150 = vmatprep.mubr.bf16.mxu0 0
      %3151 = vmatmul.mubr.bf16.gmra.mrb[0].mxu0 %v3047
      %v3152 = vpop.f32.mrb[0].mxu0
      %v3153 = vadd.f32 0.0, %v3152
      %v3154 = vpop.f32.mrb[0].mxu0
      %v3155 = vpop.f32.mrb[0].mxu0
      %v3156 = vadd.f32 0.0, %v3155
      %v3157 = vpop.f32.mrb[0].mxu0
      %3158 = vmatprep.mubr.bf16.mxu0 0
      %3159 = vmatmul.mubr.bf16.gmra.mrb[0].mxu0 %v3048
      %v3160 = vpop.f32.mrb[0].mxu0
      %v3161 = vadd.f32 0.0, %v3160
      %v3162 = vpop.f32.mrb[0].mxu0
      %v3163 = vpop.f32.mrb[0].mxu0
      %v3164 = vadd.f32 0.0, %v3163
      %v3165 = vpop.f32.mrb[0].mxu0
      %3166 = vmatprep.mubr.bf16.mxu0 0
      %3167 = vmatmul.mubr.bf16.gmra.mrb[0].mxu0 %v3049
      %v3168 = vpop.f32.mrb[0].mxu0
      %v3169 = vadd.f32 0.0, %v3168
      %v3170 = vpop.f32.mrb[0].mxu0
      %v3171 = vpop.f32.mrb[0].mxu0
      %v3172 = vadd.f32 0.0, %v3171
      %v3173 = vpop.f32.mrb[0].mxu0
      %3174 = vmatprep.mubr.bf16.mxu0 0
      %3175 = vmatmul.mubr.bf16.gmra.mrb[0].mxu0 %v3050
      %v3176 = vpop.f32.mrb[0].mxu0
      %v3177 = vadd.f32 0.0, %v3176
      %v3178 = vpop.f32.mrb[0].mxu0
      %v3179 = vpop.f32.mrb[0].mxu0
      %v3180 = vadd.f32 0.0, %v3179
      %v3181 = vpop.f32.mrb[0].mxu0
      %3182 = vmatprep.mubr.bf16.mxu0 0
      %3183 = vmatmul.mubr.bf16.gmra.mrb[0].mxu0 %v3051
      %v3184 = vpop.f32.mrb[0].mxu0
      %v3185 = vadd.f32 0.0, %v3184
      %v3186 = vpop.f32.mrb[0].mxu0
      %v3187 = vpop.f32.mrb[0].mxu0
      %v3188 = vadd.f32 0.0, %v3187
      %v3189 = vpop.f32.mrb[0].mxu0
      %3190 = vmatprep.mubr.bf16.mxu0 0
      %3191 = vmatmul.mubr.bf16.gmra.mrb[0].mxu0 %v3052
      %v3192 = vpop.f32.mrb[0].mxu0
      %v3193 = vadd.f32 0.0, %v3192
      %v3194 = vpop.f32.mrb[0].mxu0
      %v3195 = vpop.f32.mrb[0].mxu0
      %v3196 = vadd.f32 0.0, %v3195
      %v3197 = vpop.f32.mrb[0].mxu0
      %3198 = vmatprep.mubr.bf16.mxu0 0
      %3199 = vmatmul.mubr.bf16.gmra.mrb[0].mxu0 %v3053
      %v3200 = vpop.f32.mrb[0].mxu0
      %v3201 = vadd.f32 0.0, %v3200
      %v3202 = vpop.f32.mrb[0].mxu0
      %v3203 = vpop.f32.mrb[0].mxu0
      %v3204 = vadd.f32 0.0, %v3203
      %v3205 = vpop.f32.mrb[0].mxu0
      %3206 = vmatprep.mubr.bf16.mxu0 0
      %3207 = vmatmul.mubr.bf16.gmra.mrb[0].mxu0 %v3054
      %v3208 = vpop.f32.mrb[0].mxu0
      %v3209 = vadd.f32 0.0, %v3208
      %v3210 = vpop.f32.mrb[0].mxu0
      %v3211 = vpop.f32.mrb[0].mxu0
      %v3212 = vadd.f32 0.0, %v3211
      %v3213 = vpop.f32.mrb[0].mxu0
      %3214 = vmatprep.mubr.bf16.mxu0 0
      %3215 = vmatmul.mubr.bf16.gmra.mrb[0].mxu0 %v3055
      %v3216 = vpop.f32.mrb[0].mxu0
      %v3217 = vadd.f32 0.0, %v3216
      %v3218 = vpop.f32.mrb[0].mxu0
      %v3219 = vpop.f32.mrb[0].mxu0
      %v3220 = vadd.f32 0.0, %v3219
      %v3221 = vpop.f32.mrb[0].mxu0
      %3222 = vmatprep.mubr.bf16.mxu0 0
      %3223 = vmatmul.mubr.bf16.gmra.mrb[0].mxu0 %v3056
      %v3224 = vpop.f32.mrb[0].mxu0
      %v3225 = vadd.f32 0.0, %v3224
      %v3226 = vpop.f32.mrb[0].mxu0
      %v3227 = vpop.f32.mrb[0].mxu0
      %v3228 = vadd.f32 0.0, %v3227
      %v3229 = vpop.f32.mrb[0].mxu0
      %3230 = vmatprep.mubr.bf16.mxu0 0
      %3231 = vmatmul.mubr.bf16.gmra.mrb[0].mxu0 %v3057
      %v3232 = vpop.f32.mrb[0].mxu0
      %v3233 = vadd.f32 0.0, %v3232
      %v3234 = vpop.f32.mrb[0].mxu0
      %v3235 = vpop.f32.mrb[0].mxu0
      %v3236 = vadd.f32 0.0, %v3235
      %v3237 = vpop.f32.mrb[0].mxu0
      %3238 = vmatprep.mubr.bf16.mxu0 0
      %3239 = vmatmul.mubr.bf16.gmra.mrb[0].mxu0 %v3058
      %v3240 = vpop.f32.mrb[0].mxu0
      %v3241 = vadd.f32 0.0, %v3240
      %v3242 = vpop.f32.mrb[0].mxu0
      %v3243 = vpop.f32.mrb[0].mxu0
      %v3244 = vadd.f32 0.0, %v3243
      %v3245 = vpop.f32.mrb[0].mxu0
      %3246 = vmatprep.mubr.bf16.mxu0 0
      %3247 = vmatmul.mubr.bf16.gmra.mrb[0].mxu0 %v3059
      %v3248 = vpop.f32.mrb[0].mxu0
      %v3249 = vadd.f32 0.0, %v3248
      %v3250 = vpop.f32.mrb[0].mxu0
      %v3251 = vpop.f32.mrb[0].mxu0
      %v3252 = vadd.f32 0.0, %v3251
      %v3253 = vpop.f32.mrb[0].mxu0
      %3254 = vmatprep.mubr.bf16.mxu0 0
      %3255 = vmatmul.mubr.bf16.gmra.mrb[0].mxu0 %v3060
      %v3256 = vpop.f32.mrb[0].mxu0
      %v3257 = vadd.f32 0.0, %v3256
      %v3258 = vpop.f32.mrb[0].mxu0
      %v3259 = vpop.f32.mrb[0].mxu0
      %v3260 = vadd.f32 0.0, %v3259
      %v3261 = vpop.f32.mrb[0].mxu0
      %3262 = vmatprep.mubr.bf16.mxu0 0
      %3263 = vmatmul.mubr.bf16.gmra.mrb[0].mxu0 %v3061
      %v3264 = vpop.f32.mrb[0].mxu0
      %v3265 = vadd.f32 0.0, %v3264
      %v3266 = vpop.f32.mrb[0].mxu0
      %v3267 = vpop.f32.mrb[0].mxu0
      %v3268 = vadd.f32 0.0, %v3267
      %v3269 = vpop.f32.mrb[0].mxu0
      %3270 = vdwg.mxu0
      %v3271 = vadd.f32 %v2792, %v3145
      %v3272 = vadd.f32 %v2795, %v3148
      %v3273 = vadd.f32 %v2800, %v3153
      %v3274 = vadd.f32 %v2803, %v3156
      %v3275 = vadd.f32 %v2808, %v3161
      %v3276 = vadd.f32 %v2811, %v3164
      %v3277 = vadd.f32 %v2816, %v3169
      %v3278 = vadd.f32 %v2819, %v3172
      %v3279 = vadd.f32 %v2824, %v3177
      %v3280 = vadd.f32 %v2827, %v3180
      %v3281 = vadd.f32 %v2832, %v3185
      %v3282 = vadd.f32 %v2835, %v3188
      %v3283 = vadd.f32 %v2840, %v3193
      %v3284 = vadd.f32 %v2843, %v3196
      %v3285 = vadd.f32 %v2848, %v3201
      %v3286 = vadd.f32 %v2851, %v3204
      %v3287 = vadd.f32 %v2856, %v3209
      %v3288 = vadd.f32 %v2859, %v3212
      %v3289 = vadd.f32 %v2864, %v3217
      %v3290 = vadd.f32 %v2867, %v3220
      %v3291 = vadd.f32 %v2872, %v3225
      %v3292 = vadd.f32 %v2875, %v3228
      %v3293 = vadd.f32 %v2880, %v3233
      %v3294 = vadd.f32 %v2883, %v3236
      %v3295 = vadd.f32 %v2888, %v3241
      %v3296 = vadd.f32 %v2891, %v3244
      %v3297 = vadd.f32 %v2896, %v3249
      %v3298 = vadd.f32 %v2899, %v3252
      %v3299 = vadd.f32 %v2904, %v3257
      %v3300 = vadd.f32 %v2907, %v3260
      %v3301 = vadd.f32 %v2912, %v3265
      %v3302 = vadd.f32 %v2915, %v3268
      %v3303 = vld [vmem:[%s2 + $0xc0] sm:$0xf]
      %v3304 = vld [vmem:[%s2 + $0xc4] sm:$0xf]
      %v3305 = vld [vmem:[%s2 + $0xc8] sm:$0xf]
      %v3306 = vld [vmem:[%s2 + $0xcc] sm:$0xf]
      %v3307 = vld [vmem:[%s2 + $0xd0] sm:$0xf]
      %v3308 = vld [vmem:[%s2 + $0xd4] sm:$0xf]
      %v3309 = vld [vmem:[%s2 + $0xd8] sm:$0xf]
      %v3310 = vld [vmem:[%s2 + $0xdc] sm:$0xf]
      %v3311 = vld [vmem:[%s2 + $0xe0] sm:$0xf]
      %v3312 = vld [vmem:[%s2 + $0xe4] sm:$0xf]
      %v3313 = vld [vmem:[%s2 + $0xe8] sm:$0xf]
      %v3314 = vld [vmem:[%s2 + $0xec] sm:$0xf]
      %v3315 = vld [vmem:[%s2 + $0xf0] sm:$0xf]
      %v3316 = vld [vmem:[%s2 + $0xf4] sm:$0xf]
      %v3317 = vld [vmem:[%s2 + $0xf8] sm:$0xf]
      %v3318 = vld [vmem:[%s2 + $0xfc] sm:$0xf]
      %v3319 = vpack.c.bf16 %v2271, %v2270
      %v3336 = vunpack.c.l.b16 %v3303
      %v3337 = vunpack.c.l.b16 %v3304
      %v3338 = vunpack.c.l.b16 %v3305
      %v3339 = vunpack.c.l.b16 %v3306
      %v3340 = vunpack.c.l.b16 %v3307
      %v3341 = vunpack.c.l.b16 %v3308
      %v3342 = vunpack.c.l.b16 %v3309
      %v3343 = vunpack.c.l.b16 %v3310
      %v3344 = vunpack.c.l.b16 %v3311
      %v3345 = vunpack.c.l.b16 %v3312
      %v3346 = vunpack.c.l.b16 %v3313
      %v3347 = vunpack.c.l.b16 %v3314
      %v3348 = vunpack.c.l.b16 %v3315
      %v3349 = vunpack.c.l.b16 %v3316
      %v3350 = vunpack.c.l.b16 %v3317
      %v3351 = vunpack.c.l.b16 %v3318
      %v3352 = vpack.c.b16 %v3337, %v3336
      %v3353 = vpack.c.b16 %v3339, %v3338
      %v3354 = vpack.c.b16 %v3341, %v3340
      %v3355 = vpack.c.b16 %v3343, %v3342
      %v3356 = vpack.c.b16 %v3345, %v3344
      %v3357 = vpack.c.b16 %v3347, %v3346
      %v3358 = vpack.c.b16 %v3349, %v3348
      %v3359 = vpack.c.b16 %v3351, %v3350
      %3368 = vmatprep.subr.bf16.mxu0 0
      %3369 = vmatpush1.bf16.msra.mxu0 %v3352
      %3370 = vmatprep.subr.bf16.mxu0 0
      %3371 = vmatpush1.bf16.msra.mxu0 %v3353
      %3372 = vmatprep.subr.bf16.mxu0 0
      %3373 = vmatpush1.bf16.msra.mxu0 %v3354
      %3374 = vmatprep.subr.bf16.mxu0 0
      %3375 = vmatpush1.bf16.msra.mxu0 %v3355
      %3376 = vmatprep.subr.bf16.mxu0 0
      %3377 = vmatpush1.bf16.msra.mxu0 %v3356
      %3378 = vmatprep.subr.bf16.mxu0 0
      %3379 = vmatpush1.bf16.msra.mxu0 %v3357
      %3380 = vmatprep.subr.bf16.mxu0 0
      %3381 = vmatpush1.bf16.msra.mxu0 %v3358
      %3382 = vmatprep.subr.bf16.mxu0 0
      %3383 = vmatpush1.bf16.msra.mxu0 %v3359
      %3384 = vmatprep.subr.bf16.mxu0 0
      %3385 = vmatpush1.bf16.msra.mxu0 0
      %3386 = vmatprep.subr.bf16.mxu0 0
      %3387 = vmatpush1.bf16.msra.mxu0 0
      %3388 = vmatprep.subr.bf16.mxu0 0
      %3389 = vmatpush1.bf16.msra.mxu0 0
      %3390 = vmatprep.subr.bf16.mxu0 0
      %3391 = vmatpush1.bf16.msra.mxu0 0
      %3392 = vmatprep.subr.bf16.mxu0 0
      %3393 = vmatpush1.bf16.msra.mxu0 0
      %3394 = vmatprep.subr.bf16.mxu0 0
      %3395 = vmatpush1.bf16.msra.mxu0 0
      %3396 = vmatprep.subr.bf16.mxu0 0
      %3397 = vmatpush1.bf16.msra.mxu0 0
      %3398 = vmatprep.subr.bf16.mxu0 0
      %3399 = vmatpush1.bf16.msra.mxu0 0
      %3400 = vmatprep.mubr.bf16.mxu0 0
      %3401 = vmatmul.mubr.bf16.gmra.mrb[0].mxu0 %v2293
      %v3402 = vpop.f32.mrb[0].mxu0
      %v3403 = vadd.f32 0.0, %v3402
      %v3404 = vpop.f32.mrb[0].mxu0
      %v3405 = vpop.f32.mrb[0].mxu0
      %v3406 = vadd.f32 0.0, %v3405
      %v3407 = vpop.f32.mrb[0].mxu0
      %3408 = vmatprep.mubr.bf16.mxu0 0
      %3409 = vmatmul.mubr.bf16.gmra.mrb[0].mxu0 %v2294
      %v3410 = vpop.f32.mrb[0].mxu0
      %v3411 = vadd.f32 0.0, %v3410
      %v3412 = vpop.f32.mrb[0].mxu0
      %v3413 = vpop.f32.mrb[0].mxu0
      %v3414 = vadd.f32 0.0, %v3413
      %v3415 = vpop.f32.mrb[0].mxu0
      %3416 = vmatprep.mubr.bf16.mxu0 0
      %3417 = vmatmul.mubr.bf16.gmra.mrb[0].mxu0 %v2295
      %v3418 = vpop.f32.mrb[0].mxu0
      %v3419 = vadd.f32 0.0, %v3418
      %v3420 = vpop.f32.mrb[0].mxu0
      %v3421 = vpop.f32.mrb[0].mxu0
      %v3422 = vadd.f32 0.0, %v3421
      %v3423 = vpop.f32.mrb[0].mxu0
      %3424 = vmatprep.mubr.bf16.mxu0 0
      %3425 = vmatmul.mubr.bf16.gmra.mrb[0].mxu0 %v2296
      %v3426 = vpop.f32.mrb[0].mxu0
      %v3427 = vadd.f32 0.0, %v3426
      %v3428 = vpop.f32.mrb[0].mxu0
      %v3429 = vpop.f32.mrb[0].mxu0
      %v3430 = vadd.f32 0.0, %v3429
      %v3431 = vpop.f32.mrb[0].mxu0
      %3432 = vmatprep.mubr.bf16.mxu0 0
      %3433 = vmatmul.mubr.bf16.gmra.mrb[0].mxu0 %v2297
      %v3434 = vpop.f32.mrb[0].mxu0
      %v3435 = vadd.f32 0.0, %v3434
      %v3436 = vpop.f32.mrb[0].mxu0
      %v3437 = vpop.f32.mrb[0].mxu0
      %v3438 = vadd.f32 0.0, %v3437
      %v3439 = vpop.f32.mrb[0].mxu0
      %3440 = vmatprep.mubr.bf16.mxu0 0
      %3441 = vmatmul.mubr.bf16.gmra.mrb[0].mxu0 %v2298
      %v3442 = vpop.f32.mrb[0].mxu0
      %v3443 = vadd.f32 0.0, %v3442
      %v3444 = vpop.f32.mrb[0].mxu0
      %v3445 = vpop.f32.mrb[0].mxu0
      %v3446 = vadd.f32 0.0, %v3445
      %v3447 = vpop.f32.mrb[0].mxu0
      %3448 = vmatprep.mubr.bf16.mxu0 0
      %3449 = vmatmul.mubr.bf16.gmra.mrb[0].mxu0 %v2299
      %v3450 = vpop.f32.mrb[0].mxu0
      %v3451 = vadd.f32 0.0, %v3450
      %v3452 = vpop.f32.mrb[0].mxu0
      %v3453 = vpop.f32.mrb[0].mxu0
      %v3454 = vadd.f32 0.0, %v3453
      %v3455 = vpop.f32.mrb[0].mxu0
      %3456 = vmatprep.mubr.bf16.mxu0 0
      %3457 = vmatmul.mubr.bf16.gmra.mrb[0].mxu0 %v2300
      %v3458 = vpop.f32.mrb[0].mxu0
      %v3459 = vadd.f32 0.0, %v3458
      %v3460 = vpop.f32.mrb[0].mxu0
      %v3461 = vpop.f32.mrb[0].mxu0
      %v3462 = vadd.f32 0.0, %v3461
      %v3463 = vpop.f32.mrb[0].mxu0
      %3464 = vmatprep.mubr.bf16.mxu0 0
      %3465 = vmatmul.mubr.bf16.gmra.mrb[0].mxu0 %v2301
      %v3466 = vpop.f32.mrb[0].mxu0
      %v3467 = vadd.f32 0.0, %v3466
      %v3468 = vpop.f32.mrb[0].mxu0
      %v3469 = vpop.f32.mrb[0].mxu0
      %v3470 = vadd.f32 0.0, %v3469
      %v3471 = vpop.f32.mrb[0].mxu0
      %3472 = vmatprep.mubr.bf16.mxu0 0
      %3473 = vmatmul.mubr.bf16.gmra.mrb[0].mxu0 %v2302
      %v3474 = vpop.f32.mrb[0].mxu0
      %v3475 = vadd.f32 0.0, %v3474
      %v3476 = vpop.f32.mrb[0].mxu0
      %v3477 = vpop.f32.mrb[0].mxu0
      %v3478 = vadd.f32 0.0, %v3477
      %v3479 = vpop.f32.mrb[0].mxu0
      %3480 = vmatprep.mubr.bf16.mxu0 0
      %3481 = vmatmul.mubr.bf16.gmra.mrb[0].mxu0 %v2303
      %v3482 = vpop.f32.mrb[0].mxu0
      %v3483 = vadd.f32 0.0, %v3482
      %v3484 = vpop.f32.mrb[0].mxu0
      %v3485 = vpop.f32.mrb[0].mxu0
      %v3486 = vadd.f32 0.0, %v3485
      %v3487 = vpop.f32.mrb[0].mxu0
      %3488 = vmatprep.mubr.bf16.mxu0 0
      %3489 = vmatmul.mubr.bf16.gmra.mrb[0].mxu0 %v2304
      %v3490 = vpop.f32.mrb[0].mxu0
      %v3491 = vadd.f32 0.0, %v3490
      %v3492 = vpop.f32.mrb[0].mxu0
      %v3493 = vpop.f32.mrb[0].mxu0
      %v3494 = vadd.f32 0.0, %v3493
      %v3495 = vpop.f32.mrb[0].mxu0
      %3496 = vmatprep.mubr.bf16.mxu0 0
      %3497 = vmatmul.mubr.bf16.gmra.mrb[0].mxu0 %v2305
      %v3498 = vpop.f32.mrb[0].mxu0
      %v3499 = vadd.f32 0.0, %v3498
      %v3500 = vpop.f32.mrb[0].mxu0
      %v3501 = vpop.f32.mrb[0].mxu0
      %v3502 = vadd.f32 0.0, %v3501
      %v3503 = vpop.f32.mrb[0].mxu0
      %3504 = vmatprep.mubr.bf16.mxu0 0
      %3505 = vmatmul.mubr.bf16.gmra.mrb[0].mxu0 %v2306
      %v3506 = vpop.f32.mrb[0].mxu0
      %v3507 = vadd.f32 0.0, %v3506
      %v3508 = vpop.f32.mrb[0].mxu0
      %v3509 = vpop.f32.mrb[0].mxu0
      %v3510 = vadd.f32 0.0, %v3509
      %v3511 = vpop.f32.mrb[0].mxu0
      %3512 = vmatprep.mubr.bf16.mxu0 0
      %3513 = vmatmul.mubr.bf16.gmra.mrb[0].mxu0 %v2307
      %v3514 = vpop.f32.mrb[0].mxu0
      %v3515 = vadd.f32 0.0, %v3514
      %v3516 = vpop.f32.mrb[0].mxu0
      %v3517 = vpop.f32.mrb[0].mxu0
      %v3518 = vadd.f32 0.0, %v3517
      %v3519 = vpop.f32.mrb[0].mxu0
      %3520 = vmatprep.mubr.bf16.mxu0 0
      %3521 = vmatmul.mubr.bf16.gmra.mrb[0].mxu0 %v3319
      %v3522 = vpop.f32.mrb[0].mxu0
      %v3523 = vadd.f32 0.0, %v3522
      %v3524 = vpop.f32.mrb[0].mxu0
      %v3525 = vpop.f32.mrb[0].mxu0
      %v3526 = vadd.f32 0.0, %v3525
      %v3527 = vpop.f32.mrb[0].mxu0
      %3528 = vdwg.mxu0
      %v3529 = vadd.f32 %v3271, %v3403
      %v3530 = vadd.f32 %v3272, %v3406
      %v3531 = vadd.f32 %v3273, %v3411
      %v3532 = vadd.f32 %v3274, %v3414
      %v3533 = vadd.f32 %v3275, %v3419
      %v3534 = vadd.f32 %v3276, %v3422
      %v3535 = vadd.f32 %v3277, %v3427
      %v3536 = vadd.f32 %v3278, %v3430
      %v3537 = vadd.f32 %v3279, %v3435
      %v3538 = vadd.f32 %v3280, %v3438
      %v3539 = vadd.f32 %v3281, %v3443
      %v3540 = vadd.f32 %v3282, %v3446
      %v3541 = vadd.f32 %v3283, %v3451
      %v3542 = vadd.f32 %v3284, %v3454
      %v3543 = vadd.f32 %v3285, %v3459
      %v3544 = vadd.f32 %v3286, %v3462
      %v3545 = vadd.f32 %v3287, %v3467
      %v3546 = vadd.f32 %v3288, %v3470
      %v3547 = vadd.f32 %v3289, %v3475
      %v3548 = vadd.f32 %v3290, %v3478
      %v3549 = vadd.f32 %v3291, %v3483
      %v3550 = vadd.f32 %v3292, %v3486
      %v3551 = vadd.f32 %v3293, %v3491
      %v3552 = vadd.f32 %v3294, %v3494
      %v3553 = vadd.f32 %v3295, %v3499
      %v3554 = vadd.f32 %v3296, %v3502
      %v3555 = vadd.f32 %v3297, %v3507
      %v3556 = vadd.f32 %v3298, %v3510
      %v3557 = vadd.f32 %v3299, %v3515
      %v3558 = vadd.f32 %v3300, %v3518
      %v3559 = vadd.f32 %v3301, %v3523
      %v3560 = vadd.f32 %v3302, %v3526
      %v3564 = vrot.slane %v2270, 1
      %v3565 = vrot.slane %v2271, 1
      %v3566 = vsel %vm594, %v3564, %v3565
      %v3567 = vrot.slane %v2272, 1
      %v3568 = vsel %vm594, %v3565, %v3567
      %v3571 = vld [vmem:[%s2 + $0x100] sm:$0xf]
      %v3572 = vld [vmem:[%s2 + $0x104] sm:$0xf]
      %v3573 = vld [vmem:[%s2 + $0x108] sm:$0xf]
      %v3574 = vld [vmem:[%s2 + $0x10c] sm:$0xf]
      %v3575 = vld [vmem:[%s2 + $0x110] sm:$0xf]
      %v3576 = vld [vmem:[%s2 + $0x114] sm:$0xf]
      %v3577 = vld [vmem:[%s2 + $0x118] sm:$0xf]
      %v3578 = vld [vmem:[%s2 + $0x11c] sm:$0xf]
      %v3579 = vld [vmem:[%s2 + $0x120] sm:$0xf]
      %v3580 = vld [vmem:[%s2 + $0x124] sm:$0xf]
      %v3581 = vld [vmem:[%s2 + $0x128] sm:$0xf]
      %v3582 = vld [vmem:[%s2 + $0x12c] sm:$0xf]
      %v3583 = vld [vmem:[%s2 + $0x130] sm:$0xf]
      %v3584 = vld [vmem:[%s2 + $0x134] sm:$0xf]
      %v3585 = vld [vmem:[%s2 + $0x138] sm:$0xf]
      %v3586 = vld [vmem:[%s2 + $0x13c] sm:$0xf]
      %v3587 = vpack.c.bf16 %v3568, %v3566
      %v3604 = vunpack.c.l.b16 %v3571
      %v3605 = vunpack.c.l.b16 %v3572
      %v3606 = vunpack.c.l.b16 %v3573
      %v3607 = vunpack.c.l.b16 %v3574
      %v3608 = vunpack.c.l.b16 %v3575
      %v3609 = vunpack.c.l.b16 %v3576
      %v3610 = vunpack.c.l.b16 %v3577
      %v3611 = vunpack.c.l.b16 %v3578
      %v3612 = vunpack.c.l.b16 %v3579
      %v3613 = vunpack.c.l.b16 %v3580
      %v3614 = vunpack.c.l.b16 %v3581
      %v3615 = vunpack.c.l.b16 %v3582
      %v3616 = vunpack.c.l.b16 %v3583
      %v3617 = vunpack.c.l.b16 %v3584
      %v3618 = vunpack.c.l.b16 %v3585
      %v3619 = vunpack.c.l.b16 %v3586
      %v3620 = vpack.c.b16 %v3605, %v3604
      %v3621 = vpack.c.b16 %v3607, %v3606
      %v3622 = vpack.c.b16 %v3609, %v3608
      %v3623 = vpack.c.b16 %v3611, %v3610
      %v3624 = vpack.c.b16 %v3613, %v3612
      %v3625 = vpack.c.b16 %v3615, %v3614
      %v3626 = vpack.c.b16 %v3617, %v3616
      %v3627 = vpack.c.b16 %v3619, %v3618
      %3636 = vmatprep.subr.bf16.mxu0 0
      %3637 = vmatpush1.bf16.msra.mxu0 %v3620
      %3638 = vmatprep.subr.bf16.mxu0 0
      %3639 = vmatpush1.bf16.msra.mxu0 %v3621
      %3640 = vmatprep.subr.bf16.mxu0 0
      %3641 = vmatpush1.bf16.msra.mxu0 %v3622
      %3642 = vmatprep.subr.bf16.mxu0 0
      %3643 = vmatpush1.bf16.msra.mxu0 %v3623
      %3644 = vmatprep.subr.bf16.mxu0 0
      %3645 = vmatpush1.bf16.msra.mxu0 %v3624
      %3646 = vmatprep.subr.bf16.mxu0 0
      %3647 = vmatpush1.bf16.msra.mxu0 %v3625
      %3648 = vmatprep.subr.bf16.mxu0 0
      %3649 = vmatpush1.bf16.msra.mxu0 %v3626
      %3650 = vmatprep.subr.bf16.mxu0 0
      %3651 = vmatpush1.bf16.msra.mxu0 %v3627
      %3652 = vmatprep.subr.bf16.mxu0 0
      %3653 = vmatpush1.bf16.msra.mxu0 0
      %3654 = vmatprep.subr.bf16.mxu0 0
      %3655 = vmatpush1.bf16.msra.mxu0 0
      %3656 = vmatprep.subr.bf16.mxu0 0
      %3657 = vmatpush1.bf16.msra.mxu0 0
      %3658 = vmatprep.subr.bf16.mxu0 0
      %3659 = vmatpush1.bf16.msra.mxu0 0
      %3660 = vmatprep.subr.bf16.mxu0 0
      %3661 = vmatpush1.bf16.msra.mxu0 0
      %3662 = vmatprep.subr.bf16.mxu0 0
      %3663 = vmatpush1.bf16.msra.mxu0 0
      %3664 = vmatprep.subr.bf16.mxu0 0
      %3665 = vmatpush1.bf16.msra.mxu0 0
      %3666 = vmatprep.subr.bf16.mxu0 0
      %3667 = vmatpush1.bf16.msra.mxu0 0
      %3668 = vmatprep.mubr.bf16.mxu0 0
      %3669 = vmatmul.mubr.bf16.gmra.mrb[0].mxu0 %v2485
      %v3670 = vpop.f32.mrb[0].mxu0
      %v3671 = vadd.f32 0.0, %v3670
      %v3672 = vpop.f32.mrb[0].mxu0
      %v3673 = vpop.f32.mrb[0].mxu0
      %v3674 = vadd.f32 0.0, %v3673
      %v3675 = vpop.f32.mrb[0].mxu0
      %3676 = vmatprep.mubr.bf16.mxu0 0
      %3677 = vmatmul.mubr.bf16.gmra.mrb[0].mxu0 %v2486
      %v3678 = vpop.f32.mrb[0].mxu0
      %v3679 = vadd.f32 0.0, %v3678
      %v3680 = vpop.f32.mrb[0].mxu0
      %v3681 = vpop.f32.mrb[0].mxu0
      %v3682 = vadd.f32 0.0, %v3681
      %v3683 = vpop.f32.mrb[0].mxu0
      %3684 = vmatprep.mubr.bf16.mxu0 0
      %3685 = vmatmul.mubr.bf16.gmra.mrb[0].mxu0 %v2487
      %v3686 = vpop.f32.mrb[0].mxu0
      %v3687 = vadd.f32 0.0, %v3686
      %v3688 = vpop.f32.mrb[0].mxu0
      %v3689 = vpop.f32.mrb[0].mxu0
      %v3690 = vadd.f32 0.0, %v3689
      %v3691 = vpop.f32.mrb[0].mxu0
      %3692 = vmatprep.mubr.bf16.mxu0 0
      %3693 = vmatmul.mubr.bf16.gmra.mrb[0].mxu0 %v2488
      %v3694 = vpop.f32.mrb[0].mxu0
      %v3695 = vadd.f32 0.0, %v3694
      %v3696 = vpop.f32.mrb[0].mxu0
      %v3697 = vpop.f32.mrb[0].mxu0
      %v3698 = vadd.f32 0.0, %v3697
      %v3699 = vpop.f32.mrb[0].mxu0
      %3700 = vmatprep.mubr.bf16.mxu0 0
      %3701 = vmatmul.mubr.bf16.gmra.mrb[0].mxu0 %v2489
      %v3702 = vpop.f32.mrb[0].mxu0
      %v3703 = vadd.f32 0.0, %v3702
      %v3704 = vpop.f32.mrb[0].mxu0
      %v3705 = vpop.f32.mrb[0].mxu0
      %v3706 = vadd.f32 0.0, %v3705
      %v3707 = vpop.f32.mrb[0].mxu0
      %3708 = vmatprep.mubr.bf16.mxu0 0
      %3709 = vmatmul.mubr.bf16.gmra.mrb[0].mxu0 %v2490
      %v3710 = vpop.f32.mrb[0].mxu0
      %v3711 = vadd.f32 0.0, %v3710
      %v3712 = vpop.f32.mrb[0].mxu0
      %v3713 = vpop.f32.mrb[0].mxu0
      %v3714 = vadd.f32 0.0, %v3713
      %v3715 = vpop.f32.mrb[0].mxu0
      %3716 = vmatprep.mubr.bf16.mxu0 0
      %3717 = vmatmul.mubr.bf16.gmra.mrb[0].mxu0 %v2491
      %v3718 = vpop.f32.mrb[0].mxu0
      %v3719 = vadd.f32 0.0, %v3718
      %v3720 = vpop.f32.mrb[0].mxu0
      %v3721 = vpop.f32.mrb[0].mxu0
      %v3722 = vadd.f32 0.0, %v3721
      %v3723 = vpop.f32.mrb[0].mxu0
      %3724 = vmatprep.mubr.bf16.mxu0 0
      %3725 = vmatmul.mubr.bf16.gmra.mrb[0].mxu0 %v2492
      %v3726 = vpop.f32.mrb[0].mxu0
      %v3727 = vadd.f32 0.0, %v3726
      %v3728 = vpop.f32.mrb[0].mxu0
      %v3729 = vpop.f32.mrb[0].mxu0
      %v3730 = vadd.f32 0.0, %v3729
      %v3731 = vpop.f32.mrb[0].mxu0
      %3732 = vmatprep.mubr.bf16.mxu0 0
      %3733 = vmatmul.mubr.bf16.gmra.mrb[0].mxu0 %v2493
      %v3734 = vpop.f32.mrb[0].mxu0
      %v3735 = vadd.f32 0.0, %v3734
      %v3736 = vpop.f32.mrb[0].mxu0
      %v3737 = vpop.f32.mrb[0].mxu0
      %v3738 = vadd.f32 0.0, %v3737
      %v3739 = vpop.f32.mrb[0].mxu0
      %3740 = vmatprep.mubr.bf16.mxu0 0
      %3741 = vmatmul.mubr.bf16.gmra.mrb[0].mxu0 %v2494
      %v3742 = vpop.f32.mrb[0].mxu0
      %v3743 = vadd.f32 0.0, %v3742
      %v3744 = vpop.f32.mrb[0].mxu0
      %v3745 = vpop.f32.mrb[0].mxu0
      %v3746 = vadd.f32 0.0, %v3745
      %v3747 = vpop.f32.mrb[0].mxu0
      %3748 = vmatprep.mubr.bf16.mxu0 0
      %3749 = vmatmul.mubr.bf16.gmra.mrb[0].mxu0 %v2495
      %v3750 = vpop.f32.mrb[0].mxu0
      %v3751 = vadd.f32 0.0, %v3750
      %v3752 = vpop.f32.mrb[0].mxu0
      %v3753 = vpop.f32.mrb[0].mxu0
      %v3754 = vadd.f32 0.0, %v3753
      %v3755 = vpop.f32.mrb[0].mxu0
      %3756 = vmatprep.mubr.bf16.mxu0 0
      %3757 = vmatmul.mubr.bf16.gmra.mrb[0].mxu0 %v2496
      %v3758 = vpop.f32.mrb[0].mxu0
      %v3759 = vadd.f32 0.0, %v3758
      %v3760 = vpop.f32.mrb[0].mxu0
      %v3761 = vpop.f32.mrb[0].mxu0
      %v3762 = vadd.f32 0.0, %v3761
      %v3763 = vpop.f32.mrb[0].mxu0
      %3764 = vmatprep.mubr.bf16.mxu0 0
      %3765 = vmatmul.mubr.bf16.gmra.mrb[0].mxu0 %v2497
      %v3766 = vpop.f32.mrb[0].mxu0
      %v3767 = vadd.f32 0.0, %v3766
      %v3768 = vpop.f32.mrb[0].mxu0
      %v3769 = vpop.f32.mrb[0].mxu0
      %v3770 = vadd.f32 0.0, %v3769
      %v3771 = vpop.f32.mrb[0].mxu0
      %3772 = vmatprep.mubr.bf16.mxu0 0
      %3773 = vmatmul.mubr.bf16.gmra.mrb[0].mxu0 %v2498
      %v3774 = vpop.f32.mrb[0].mxu0
      %v3775 = vadd.f32 0.0, %v3774
      %v3776 = vpop.f32.mrb[0].mxu0
      %v3777 = vpop.f32.mrb[0].mxu0
      %v3778 = vadd.f32 0.0, %v3777
      %v3779 = vpop.f32.mrb[0].mxu0
      %3780 = vmatprep.mubr.bf16.mxu0 0
      %3781 = vmatmul.mubr.bf16.gmra.mrb[0].mxu0 %v2499
      %v3782 = vpop.f32.mrb[0].mxu0
      %v3783 = vadd.f32 0.0, %v3782
      %v3784 = vpop.f32.mrb[0].mxu0
      %v3785 = vpop.f32.mrb[0].mxu0
      %v3786 = vadd.f32 0.0, %v3785
      %v3787 = vpop.f32.mrb[0].mxu0
      %3788 = vmatprep.mubr.bf16.mxu0 0
      %3789 = vmatmul.mubr.bf16.gmra.mrb[0].mxu0 %v3587
      %v3790 = vpop.f32.mrb[0].mxu0
      %v3791 = vadd.f32 0.0, %v3790
      %v3792 = vpop.f32.mrb[0].mxu0
      %v3793 = vpop.f32.mrb[0].mxu0
      %v3794 = vadd.f32 0.0, %v3793
      %v3795 = vpop.f32.mrb[0].mxu0
      %3796 = vdwg.mxu0
      %v3797 = vadd.f32 %v3529, %v3671
      %v3798 = vadd.f32 %v3530, %v3674
      %v3799 = vadd.f32 %v3531, %v3679
      %v3800 = vadd.f32 %v3532, %v3682
      %v3801 = vadd.f32 %v3533, %v3687
      %v3802 = vadd.f32 %v3534, %v3690
      %v3803 = vadd.f32 %v3535, %v3695
      %v3804 = vadd.f32 %v3536, %v3698
      %v3805 = vadd.f32 %v3537, %v3703
      %v3806 = vadd.f32 %v3538, %v3706
      %v3807 = vadd.f32 %v3539, %v3711
      %v3808 = vadd.f32 %v3540, %v3714
      %v3809 = vadd.f32 %v3541, %v3719
      %v3810 = vadd.f32 %v3542, %v3722
      %v3811 = vadd.f32 %v3543, %v3727
      %v3812 = vadd.f32 %v3544, %v3730
      %v3813 = vadd.f32 %v3545, %v3735
      %v3814 = vadd.f32 %v3546, %v3738
      %v3815 = vadd.f32 %v3547, %v3743
      %v3816 = vadd.f32 %v3548, %v3746
      %v3817 = vadd.f32 %v3549, %v3751
      %v3818 = vadd.f32 %v3550, %v3754
      %v3819 = vadd.f32 %v3551, %v3759
      %v3820 = vadd.f32 %v3552, %v3762
      %v3821 = vadd.f32 %v3553, %v3767
      %v3822 = vadd.f32 %v3554, %v3770
      %v3823 = vadd.f32 %v3555, %v3775
      %v3824 = vadd.f32 %v3556, %v3778
      %v3825 = vadd.f32 %v3557, %v3783
      %v3826 = vadd.f32 %v3558, %v3786
      %v3827 = vadd.f32 %v3559, %v3791
      %v3828 = vadd.f32 %v3560, %v3794
      %v3829 = vrot.slane %v2270, 2
      %v3830 = vrot.slane %v2271, 2
      %v3831 = vsel %vm675, %v3829, %v3830
      %v3832 = vrot.slane %v2272, 2
      %v3833 = vsel %vm675, %v3830, %v3832
      %v3836 = vld [vmem:[%s2 + $0x140] sm:$0xf]
      %v3837 = vld [vmem:[%s2 + $0x144] sm:$0xf]
      %v3838 = vld [vmem:[%s2 + $0x148] sm:$0xf]
      %v3839 = vld [vmem:[%s2 + $0x14c] sm:$0xf]
      %v3840 = vld [vmem:[%s2 + $0x150] sm:$0xf]
      %v3841 = vld [vmem:[%s2 + $0x154] sm:$0xf]
      %v3842 = vld [vmem:[%s2 + $0x158] sm:$0xf]
      %v3843 = vld [vmem:[%s2 + $0x15c] sm:$0xf]
      %v3844 = vld [vmem:[%s2 + $0x160] sm:$0xf]
      %v3845 = vld [vmem:[%s2 + $0x164] sm:$0xf]
      %v3846 = vld [vmem:[%s2 + $0x168] sm:$0xf]
      %v3847 = vld [vmem:[%s2 + $0x16c] sm:$0xf]
      %v3848 = vld [vmem:[%s2 + $0x170] sm:$0xf]
      %v3849 = vld [vmem:[%s2 + $0x174] sm:$0xf]
      %v3850 = vld [vmem:[%s2 + $0x178] sm:$0xf]
      %v3851 = vld [vmem:[%s2 + $0x17c] sm:$0xf]
      %v3852 = vpack.c.bf16 %v3833, %v3831
      %v3869 = vunpack.c.l.b16 %v3836
      %v3870 = vunpack.c.l.b16 %v3837
      %v3871 = vunpack.c.l.b16 %v3838
      %v3872 = vunpack.c.l.b16 %v3839
      %v3873 = vunpack.c.l.b16 %v3840
      %v3874 = vunpack.c.l.b16 %v3841
      %v3875 = vunpack.c.l.b16 %v3842
      %v3876 = vunpack.c.l.b16 %v3843
      %v3877 = vunpack.c.l.b16 %v3844
      %v3878 = vunpack.c.l.b16 %v3845
      %v3879 = vunpack.c.l.b16 %v3846
      %v3880 = vunpack.c.l.b16 %v3847
      %v3881 = vunpack.c.l.b16 %v3848
      %v3882 = vunpack.c.l.b16 %v3849
      %v3883 = vunpack.c.l.b16 %v3850
      %v3884 = vunpack.c.l.b16 %v3851
      %v3885 = vpack.c.b16 %v3870, %v3869
      %v3886 = vpack.c.b16 %v3872, %v3871
      %v3887 = vpack.c.b16 %v3874, %v3873
      %v3888 = vpack.c.b16 %v3876, %v3875
      %v3889 = vpack.c.b16 %v3878, %v3877
      %v3890 = vpack.c.b16 %v3880, %v3879
      %v3891 = vpack.c.b16 %v3882, %v3881
      %v3892 = vpack.c.b16 %v3884, %v3883
      %3901 = vmatprep.subr.bf16.mxu0 0
      %3902 = vmatpush1.bf16.msra.mxu0 %v3885
      %3903 = vmatprep.subr.bf16.mxu0 0
      %3904 = vmatpush1.bf16.msra.mxu0 %v3886
      %3905 = vmatprep.subr.bf16.mxu0 0
      %3906 = vmatpush1.bf16.msra.mxu0 %v3887
      %3907 = vmatprep.subr.bf16.mxu0 0
      %3908 = vmatpush1.bf16.msra.mxu0 %v3888
      %3909 = vmatprep.subr.bf16.mxu0 0
      %3910 = vmatpush1.bf16.msra.mxu0 %v3889
      %3911 = vmatprep.subr.bf16.mxu0 0
      %3912 = vmatpush1.bf16.msra.mxu0 %v3890
      %3913 = vmatprep.subr.bf16.mxu0 0
      %3914 = vmatpush1.bf16.msra.mxu0 %v3891
      %3915 = vmatprep.subr.bf16.mxu0 0
      %3916 = vmatpush1.bf16.msra.mxu0 %v3892
      %3917 = vmatprep.subr.bf16.mxu0 0
      %3918 = vmatpush1.bf16.msra.mxu0 0
      %3919 = vmatprep.subr.bf16.mxu0 0
      %3920 = vmatpush1.bf16.msra.mxu0 0
      %3921 = vmatprep.subr.bf16.mxu0 0
      %3922 = vmatpush1.bf16.msra.mxu0 0
      %3923 = vmatprep.subr.bf16.mxu0 0
      %3924 = vmatpush1.bf16.msra.mxu0 0
      %3925 = vmatprep.subr.bf16.mxu0 0
      %3926 = vmatpush1.bf16.msra.mxu0 0
      %3927 = vmatprep.subr.bf16.mxu0 0
      %3928 = vmatpush1.bf16.msra.mxu0 0
      %3929 = vmatprep.subr.bf16.mxu0 0
      %3930 = vmatpush1.bf16.msra.mxu0 0
      %3931 = vmatprep.subr.bf16.mxu0 0
      %3932 = vmatpush1.bf16.msra.mxu0 0
      %3933 = vmatprep.mubr.bf16.mxu0 0
      %3934 = vmatmul.mubr.bf16.gmra.mrb[0].mxu0 %v3047
      %v3935 = vpop.f32.mrb[0].mxu0
      %v3936 = vadd.f32 0.0, %v3935
      %v3937 = vpop.f32.mrb[0].mxu0
      %v3938 = vpop.f32.mrb[0].mxu0
      %v3939 = vadd.f32 0.0, %v3938
      %v3940 = vpop.f32.mrb[0].mxu0
      %3941 = vmatprep.mubr.bf16.mxu0 0
      %3942 = vmatmul.mubr.bf16.gmra.mrb[0].mxu0 %v3048
      %v3943 = vpop.f32.mrb[0].mxu0
      %v3944 = vadd.f32 0.0, %v3943
      %v3945 = vpop.f32.mrb[0].mxu0
      %v3946 = vpop.f32.mrb[0].mxu0
      %v3947 = vadd.f32 0.0, %v3946
      %v3948 = vpop.f32.mrb[0].mxu0
      %3949 = vmatprep.mubr.bf16.mxu0 0
      %3950 = vmatmul.mubr.bf16.gmra.mrb[0].mxu0 %v3049
      %v3951 = vpop.f32.mrb[0].mxu0
      %v3952 = vadd.f32 0.0, %v3951
      %v3953 = vpop.f32.mrb[0].mxu0
      %v3954 = vpop.f32.mrb[0].mxu0
      %v3955 = vadd.f32 0.0, %v3954
      %v3956 = vpop.f32.mrb[0].mxu0
      %3957 = vmatprep.mubr.bf16.mxu0 0
      %3958 = vmatmul.mubr.bf16.gmra.mrb[0].mxu0 %v3050
      %v3959 = vpop.f32.mrb[0].mxu0
      %v3960 = vadd.f32 0.0, %v3959
      %v3961 = vpop.f32.mrb[0].mxu0
      %v3962 = vpop.f32.mrb[0].mxu0
      %v3963 = vadd.f32 0.0, %v3962
      %v3964 = vpop.f32.mrb[0].mxu0
      %3965 = vmatprep.mubr.bf16.mxu0 0
      %3966 = vmatmul.mubr.bf16.gmra.mrb[0].mxu0 %v3051
      %v3967 = vpop.f32.mrb[0].mxu0
      %v3968 = vadd.f32 0.0, %v3967
      %v3969 = vpop.f32.mrb[0].mxu0
      %v3970 = vpop.f32.mrb[0].mxu0
      %v3971 = vadd.f32 0.0, %v3970
      %v3972 = vpop.f32.mrb[0].mxu0
      %3973 = vmatprep.mubr.bf16.mxu0 0
      %3974 = vmatmul.mubr.bf16.gmra.mrb[0].mxu0 %v3052
      %v3975 = vpop.f32.mrb[0].mxu0
      %v3976 = vadd.f32 0.0, %v3975
      %v3977 = vpop.f32.mrb[0].mxu0
      %v3978 = vpop.f32.mrb[0].mxu0
      %v3979 = vadd.f32 0.0, %v3978
      %v3980 = vpop.f32.mrb[0].mxu0
      %3981 = vmatprep.mubr.bf16.mxu0 0
      %3982 = vmatmul.mubr.bf16.gmra.mrb[0].mxu0 %v3053
      %v3983 = vpop.f32.mrb[0].mxu0
      %v3984 = vadd.f32 0.0, %v3983
      %v3985 = vpop.f32.mrb[0].mxu0
      %v3986 = vpop.f32.mrb[0].mxu0
      %v3987 = vadd.f32 0.0, %v3986
      %v3988 = vpop.f32.mrb[0].mxu0
      %3989 = vmatprep.mubr.bf16.mxu0 0
      %3990 = vmatmul.mubr.bf16.gmra.mrb[0].mxu0 %v3054
      %v3991 = vpop.f32.mrb[0].mxu0
      %v3992 = vadd.f32 0.0, %v3991
      %v3993 = vpop.f32.mrb[0].mxu0
      %v3994 = vpop.f32.mrb[0].mxu0
      %v3995 = vadd.f32 0.0, %v3994
      %v3996 = vpop.f32.mrb[0].mxu0
      %3997 = vmatprep.mubr.bf16.mxu0 0
      %3998 = vmatmul.mubr.bf16.gmra.mrb[0].mxu0 %v3055
      %v3999 = vpop.f32.mrb[0].mxu0
      %v4000 = vadd.f32 0.0, %v3999
      %v4001 = vpop.f32.mrb[0].mxu0
      %v4002 = vpop.f32.mrb[0].mxu0
      %v4003 = vadd.f32 0.0, %v4002
      %v4004 = vpop.f32.mrb[0].mxu0
      %4005 = vmatprep.mubr.bf16.mxu0 0
      %4006 = vmatmul.mubr.bf16.gmra.mrb[0].mxu0 %v3056
      %v4007 = vpop.f32.mrb[0].mxu0
      %v4008 = vadd.f32 0.0, %v4007
      %v4009 = vpop.f32.mrb[0].mxu0
      %v4010 = vpop.f32.mrb[0].mxu0
      %v4011 = vadd.f32 0.0, %v4010
      %v4012 = vpop.f32.mrb[0].mxu0
      %4013 = vmatprep.mubr.bf16.mxu0 0
      %4014 = vmatmul.mubr.bf16.gmra.mrb[0].mxu0 %v3057
      %v4015 = vpop.f32.mrb[0].mxu0
      %v4016 = vadd.f32 0.0, %v4015
      %v4017 = vpop.f32.mrb[0].mxu0
      %v4018 = vpop.f32.mrb[0].mxu0
      %v4019 = vadd.f32 0.0, %v4018
      %v4020 = vpop.f32.mrb[0].mxu0
      %4021 = vmatprep.mubr.bf16.mxu0 0
      %4022 = vmatmul.mubr.bf16.gmra.mrb[0].mxu0 %v3058
      %v4023 = vpop.f32.mrb[0].mxu0
      %v4024 = vadd.f32 0.0, %v4023
      %v4025 = vpop.f32.mrb[0].mxu0
      %v4026 = vpop.f32.mrb[0].mxu0
      %v4027 = vadd.f32 0.0, %v4026
      %v4028 = vpop.f32.mrb[0].mxu0
      %4029 = vmatprep.mubr.bf16.mxu0 0
      %4030 = vmatmul.mubr.bf16.gmra.mrb[0].mxu0 %v3059
      %v4031 = vpop.f32.mrb[0].mxu0
      %v4032 = vadd.f32 0.0, %v4031
      %v4033 = vpop.f32.mrb[0].mxu0
      %v4034 = vpop.f32.mrb[0].mxu0
      %v4035 = vadd.f32 0.0, %v4034
      %v4036 = vpop.f32.mrb[0].mxu0
      %4037 = vmatprep.mubr.bf16.mxu0 0
      %4038 = vmatmul.mubr.bf16.gmra.mrb[0].mxu0 %v3060
      %v4039 = vpop.f32.mrb[0].mxu0
      %v4040 = vadd.f32 0.0, %v4039
      %v4041 = vpop.f32.mrb[0].mxu0
      %v4042 = vpop.f32.mrb[0].mxu0
      %v4043 = vadd.f32 0.0, %v4042
      %v4044 = vpop.f32.mrb[0].mxu0
      %4045 = vmatprep.mubr.bf16.mxu0 0
      %4046 = vmatmul.mubr.bf16.gmra.mrb[0].mxu0 %v3061
      %v4047 = vpop.f32.mrb[0].mxu0
      %v4048 = vadd.f32 0.0, %v4047
      %v4049 = vpop.f32.mrb[0].mxu0
      %v4050 = vpop.f32.mrb[0].mxu0
      %v4051 = vadd.f32 0.0, %v4050
      %v4052 = vpop.f32.mrb[0].mxu0
      %4053 = vmatprep.mubr.bf16.mxu0 0
      %4054 = vmatmul.mubr.bf16.gmra.mrb[0].mxu0 %v3852
      %v4055 = vpop.f32.mrb[0].mxu0
      %v4056 = vadd.f32 0.0, %v4055
      %v4057 = vpop.f32.mrb[0].mxu0
      %v4058 = vpop.f32.mrb[0].mxu0
      %v4059 = vadd.f32 0.0, %v4058
      %v4060 = vpop.f32.mrb[0].mxu0
      %4061 = vdwg.mxu0
      %v4062 = vadd.f32 %v3797, %v3936
      %v4063 = vadd.f32 %v3798, %v3939
      %v4064 = vadd.f32 %v3799, %v3944
      %v4065 = vadd.f32 %v3800, %v3947
      %v4066 = vadd.f32 %v3801, %v3952
      %v4067 = vadd.f32 %v3802, %v3955
      %v4068 = vadd.f32 %v3803, %v3960
      %v4069 = vadd.f32 %v3804, %v3963
      %v4070 = vadd.f32 %v3805, %v3968
      %v4071 = vadd.f32 %v3806, %v3971
      %v4072 = vadd.f32 %v3807, %v3976
      %v4073 = vadd.f32 %v3808, %v3979
      %v4074 = vadd.f32 %v3809, %v3984
      %v4075 = vadd.f32 %v3810, %v3987
      %v4076 = vadd.f32 %v3811, %v3992
      %v4077 = vadd.f32 %v3812, %v3995
      %v4078 = vadd.f32 %v3813, %v4000
      %v4079 = vadd.f32 %v3814, %v4003
      %v4080 = vadd.f32 %v3815, %v4008
      %v4081 = vadd.f32 %v3816, %v4011
      %v4082 = vadd.f32 %v3817, %v4016
      %v4083 = vadd.f32 %v3818, %v4019
      %v4084 = vadd.f32 %v3819, %v4024
      %v4085 = vadd.f32 %v3820, %v4027
      %v4086 = vadd.f32 %v3821, %v4032
      %v4087 = vadd.f32 %v3822, %v4035
      %v4088 = vadd.f32 %v3823, %v4040
      %v4089 = vadd.f32 %v3824, %v4043
      %v4090 = vadd.f32 %v3825, %v4048
      %v4091 = vadd.f32 %v3826, %v4051
      %v4092 = vadd.f32 %v3827, %v4056
      %v4093 = vadd.f32 %v3828, %v4059
      %v4094 = vld [vmem:[%s2 + $0x180] sm:$0xf]
      %v4095 = vld [vmem:[%s2 + $0x184] sm:$0xf]
      %v4096 = vld [vmem:[%s2 + $0x188] sm:$0xf]
      %v4097 = vld [vmem:[%s2 + $0x18c] sm:$0xf]
      %v4098 = vld [vmem:[%s2 + $0x190] sm:$0xf]
      %v4099 = vld [vmem:[%s2 + $0x194] sm:$0xf]
      %v4100 = vld [vmem:[%s2 + $0x198] sm:$0xf]
      %v4101 = vld [vmem:[%s2 + $0x19c] sm:$0xf]
      %v4102 = vld [vmem:[%s2 + $0x1a0] sm:$0xf]
      %v4103 = vld [vmem:[%s2 + $0x1a4] sm:$0xf]
      %v4104 = vld [vmem:[%s2 + $0x1a8] sm:$0xf]
      %v4105 = vld [vmem:[%s2 + $0x1ac] sm:$0xf]
      %v4106 = vld [vmem:[%s2 + $0x1b0] sm:$0xf]
      %v4107 = vld [vmem:[%s2 + $0x1b4] sm:$0xf]
      %v4108 = vld [vmem:[%s2 + $0x1b8] sm:$0xf]
      %v4109 = vld [vmem:[%s2 + $0x1bc] sm:$0xf]
      %v4110 = vpack.c.bf16 %v2274, %v2273
      %v4127 = vunpack.c.l.b16 %v4094
      %v4128 = vunpack.c.l.b16 %v4095
      %v4129 = vunpack.c.l.b16 %v4096
      %v4130 = vunpack.c.l.b16 %v4097
      %v4131 = vunpack.c.l.b16 %v4098
      %v4132 = vunpack.c.l.b16 %v4099
      %v4133 = vunpack.c.l.b16 %v4100
      %v4134 = vunpack.c.l.b16 %v4101
      %v4135 = vunpack.c.l.b16 %v4102
      %v4136 = vunpack.c.l.b16 %v4103
      %v4137 = vunpack.c.l.b16 %v4104
      %v4138 = vunpack.c.l.b16 %v4105
      %v4139 = vunpack.c.l.b16 %v4106
      %v4140 = vunpack.c.l.b16 %v4107
      %v4141 = vunpack.c.l.b16 %v4108
      %v4142 = vunpack.c.l.b16 %v4109
      %v4143 = vpack.c.b16 %v4128, %v4127
      %v4144 = vpack.c.b16 %v4130, %v4129
      %v4145 = vpack.c.b16 %v4132, %v4131
      %v4146 = vpack.c.b16 %v4134, %v4133
      %v4147 = vpack.c.b16 %v4136, %v4135
      %v4148 = vpack.c.b16 %v4138, %v4137
      %v4149 = vpack.c.b16 %v4140, %v4139
      %v4150 = vpack.c.b16 %v4142, %v4141
      %4159 = vmatprep.subr.bf16.mxu0 0
      %4160 = vmatpush1.bf16.msra.mxu0 %v4143
      %4161 = vmatprep.subr.bf16.mxu0 0
      %4162 = vmatpush1.bf16.msra.mxu0 %v4144
      %4163 = vmatprep.subr.bf16.mxu0 0
      %4164 = vmatpush1.bf16.msra.mxu0 %v4145
      %4165 = vmatprep.subr.bf16.mxu0 0
      %4166 = vmatpush1.bf16.msra.mxu0 %v4146
      %4167 = vmatprep.subr.bf16.mxu0 0
      %4168 = vmatpush1.bf16.msra.mxu0 %v4147
      %4169 = vmatprep.subr.bf16.mxu0 0
      %4170 = vmatpush1.bf16.msra.mxu0 %v4148
      %4171 = vmatprep.subr.bf16.mxu0 0
      %4172 = vmatpush1.bf16.msra.mxu0 %v4149
      %4173 = vmatprep.subr.bf16.mxu0 0
      %4174 = vmatpush1.bf16.msra.mxu0 %v4150
      %4175 = vmatprep.subr.bf16.mxu0 0
      %4176 = vmatpush1.bf16.msra.mxu0 0
      %4177 = vmatprep.subr.bf16.mxu0 0
      %4178 = vmatpush1.bf16.msra.mxu0 0
      %4179 = vmatprep.subr.bf16.mxu0 0
      %4180 = vmatpush1.bf16.msra.mxu0 0
      %4181 = vmatprep.subr.bf16.mxu0 0
      %4182 = vmatpush1.bf16.msra.mxu0 0
      %4183 = vmatprep.subr.bf16.mxu0 0
      %4184 = vmatpush1.bf16.msra.mxu0 0
      %4185 = vmatprep.subr.bf16.mxu0 0
      %4186 = vmatpush1.bf16.msra.mxu0 0
      %4187 = vmatprep.subr.bf16.mxu0 0
      %4188 = vmatpush1.bf16.msra.mxu0 0
      %4189 = vmatprep.subr.bf16.mxu0 0
      %4190 = vmatpush1.bf16.msra.mxu0 0
      %4191 = vmatprep.mubr.bf16.mxu0 0
      %4192 = vmatmul.mubr.bf16.gmra.mrb[0].mxu0 %v2294
      %v4193 = vpop.f32.mrb[0].mxu0
      %v4194 = vadd.f32 0.0, %v4193
      %v4195 = vpop.f32.mrb[0].mxu0
      %v4196 = vpop.f32.mrb[0].mxu0
      %v4197 = vadd.f32 0.0, %v4196
      %v4198 = vpop.f32.mrb[0].mxu0
      %4199 = vmatprep.mubr.bf16.mxu0 0
      %4200 = vmatmul.mubr.bf16.gmra.mrb[0].mxu0 %v2295
      %v4201 = vpop.f32.mrb[0].mxu0
      %v4202 = vadd.f32 0.0, %v4201
      %v4203 = vpop.f32.mrb[0].mxu0
      %v4204 = vpop.f32.mrb[0].mxu0
      %v4205 = vadd.f32 0.0, %v4204
      %v4206 = vpop.f32.mrb[0].mxu0
      %4207 = vmatprep.mubr.bf16.mxu0 0
      %4208 = vmatmul.mubr.bf16.gmra.mrb[0].mxu0 %v2296
      %v4209 = vpop.f32.mrb[0].mxu0
      %v4210 = vadd.f32 0.0, %v4209
      %v4211 = vpop.f32.mrb[0].mxu0
      %v4212 = vpop.f32.mrb[0].mxu0
      %v4213 = vadd.f32 0.0, %v4212
      %v4214 = vpop.f32.mrb[0].mxu0
      %4215 = vmatprep.mubr.bf16.mxu0 0
      %4216 = vmatmul.mubr.bf16.gmra.mrb[0].mxu0 %v2297
      %v4217 = vpop.f32.mrb[0].mxu0
      %v4218 = vadd.f32 0.0, %v4217
      %v4219 = vpop.f32.mrb[0].mxu0
      %v4220 = vpop.f32.mrb[0].mxu0
      %v4221 = vadd.f32 0.0, %v4220
      %v4222 = vpop.f32.mrb[0].mxu0
      %4223 = vmatprep.mubr.bf16.mxu0 0
      %4224 = vmatmul.mubr.bf16.gmra.mrb[0].mxu0 %v2298
      %v4225 = vpop.f32.mrb[0].mxu0
      %v4226 = vadd.f32 0.0, %v4225
      %v4227 = vpop.f32.mrb[0].mxu0
      %v4228 = vpop.f32.mrb[0].mxu0
      %v4229 = vadd.f32 0.0, %v4228
      %v4230 = vpop.f32.mrb[0].mxu0
      %4231 = vmatprep.mubr.bf16.mxu0 0
      %4232 = vmatmul.mubr.bf16.gmra.mrb[0].mxu0 %v2299
      %v4233 = vpop.f32.mrb[0].mxu0
      %v4234 = vadd.f32 0.0, %v4233
      %v4235 = vpop.f32.mrb[0].mxu0
      %v4236 = vpop.f32.mrb[0].mxu0
      %v4237 = vadd.f32 0.0, %v4236
      %v4238 = vpop.f32.mrb[0].mxu0
      %4239 = vmatprep.mubr.bf16.mxu0 0
      %4240 = vmatmul.mubr.bf16.gmra.mrb[0].mxu0 %v2300
      %v4241 = vpop.f32.mrb[0].mxu0
      %v4242 = vadd.f32 0.0, %v4241
      %v4243 = vpop.f32.mrb[0].mxu0
      %v4244 = vpop.f32.mrb[0].mxu0
      %v4245 = vadd.f32 0.0, %v4244
      %v4246 = vpop.f32.mrb[0].mxu0
      %4247 = vmatprep.mubr.bf16.mxu0 0
      %4248 = vmatmul.mubr.bf16.gmra.mrb[0].mxu0 %v2301
      %v4249 = vpop.f32.mrb[0].mxu0
      %v4250 = vadd.f32 0.0, %v4249
      %v4251 = vpop.f32.mrb[0].mxu0
      %v4252 = vpop.f32.mrb[0].mxu0
      %v4253 = vadd.f32 0.0, %v4252
      %v4254 = vpop.f32.mrb[0].mxu0
      %4255 = vmatprep.mubr.bf16.mxu0 0
      %4256 = vmatmul.mubr.bf16.gmra.mrb[0].mxu0 %v2302
      %v4257 = vpop.f32.mrb[0].mxu0
      %v4258 = vadd.f32 0.0, %v4257
      %v4259 = vpop.f32.mrb[0].mxu0
      %v4260 = vpop.f32.mrb[0].mxu0
      %v4261 = vadd.f32 0.0, %v4260
      %v4262 = vpop.f32.mrb[0].mxu0
      %4263 = vmatprep.mubr.bf16.mxu0 0
      %4264 = vmatmul.mubr.bf16.gmra.mrb[0].mxu0 %v2303
      %v4265 = vpop.f32.mrb[0].mxu0
      %v4266 = vadd.f32 0.0, %v4265
      %v4267 = vpop.f32.mrb[0].mxu0
      %v4268 = vpop.f32.mrb[0].mxu0
      %v4269 = vadd.f32 0.0, %v4268
      %v4270 = vpop.f32.mrb[0].mxu0
      %4271 = vmatprep.mubr.bf16.mxu0 0
      %4272 = vmatmul.mubr.bf16.gmra.mrb[0].mxu0 %v2304
      %v4273 = vpop.f32.mrb[0].mxu0
      %v4274 = vadd.f32 0.0, %v4273
      %v4275 = vpop.f32.mrb[0].mxu0
      %v4276 = vpop.f32.mrb[0].mxu0
      %v4277 = vadd.f32 0.0, %v4276
      %v4278 = vpop.f32.mrb[0].mxu0
      %4279 = vmatprep.mubr.bf16.mxu0 0
      %4280 = vmatmul.mubr.bf16.gmra.mrb[0].mxu0 %v2305
      %v4281 = vpop.f32.mrb[0].mxu0
      %v4282 = vadd.f32 0.0, %v4281
      %v4283 = vpop.f32.mrb[0].mxu0
      %v4284 = vpop.f32.mrb[0].mxu0
      %v4285 = vadd.f32 0.0, %v4284
      %v4286 = vpop.f32.mrb[0].mxu0
      %4287 = vmatprep.mubr.bf16.mxu0 0
      %4288 = vmatmul.mubr.bf16.gmra.mrb[0].mxu0 %v2306
      %v4289 = vpop.f32.mrb[0].mxu0
      %v4290 = vadd.f32 0.0, %v4289
      %v4291 = vpop.f32.mrb[0].mxu0
      %v4292 = vpop.f32.mrb[0].mxu0
      %v4293 = vadd.f32 0.0, %v4292
      %v4294 = vpop.f32.mrb[0].mxu0
      %4295 = vmatprep.mubr.bf16.mxu0 0
      %4296 = vmatmul.mubr.bf16.gmra.mrb[0].mxu0 %v2307
      %v4297 = vpop.f32.mrb[0].mxu0
      %v4298 = vadd.f32 0.0, %v4297
      %v4299 = vpop.f32.mrb[0].mxu0
      %v4300 = vpop.f32.mrb[0].mxu0
      %v4301 = vadd.f32 0.0, %v4300
      %v4302 = vpop.f32.mrb[0].mxu0
      %4303 = vmatprep.mubr.bf16.mxu0 0
      %4304 = vmatmul.mubr.bf16.gmra.mrb[0].mxu0 %v3319
      %v4305 = vpop.f32.mrb[0].mxu0
      %v4306 = vadd.f32 0.0, %v4305
      %v4307 = vpop.f32.mrb[0].mxu0
      %v4308 = vpop.f32.mrb[0].mxu0
      %v4309 = vadd.f32 0.0, %v4308
      %v4310 = vpop.f32.mrb[0].mxu0
      %4311 = vmatprep.mubr.bf16.mxu0 0
      %4312 = vmatmul.mubr.bf16.gmra.mrb[0].mxu0 %v4110
      %v4313 = vpop.f32.mrb[0].mxu0
      %v4314 = vadd.f32 0.0, %v4313
      %v4315 = vpop.f32.mrb[0].mxu0
      %v4316 = vpop.f32.mrb[0].mxu0
      %v4317 = vadd.f32 0.0, %v4316
      %v4318 = vpop.f32.mrb[0].mxu0
      %4319 = vdwg.mxu0
      %v4320 = vadd.f32 %v4062, %v4194
      %v4321 = vadd.f32 %v4063, %v4197
      %v4322 = vadd.f32 %v4064, %v4202
      %v4323 = vadd.f32 %v4065, %v4205
      %v4324 = vadd.f32 %v4066, %v4210
      %v4325 = vadd.f32 %v4067, %v4213
      %v4326 = vadd.f32 %v4068, %v4218
      %v4327 = vadd.f32 %v4069, %v4221
      %v4328 = vadd.f32 %v4070, %v4226
      %v4329 = vadd.f32 %v4071, %v4229
      %v4330 = vadd.f32 %v4072, %v4234
      %v4331 = vadd.f32 %v4073, %v4237
      %v4332 = vadd.f32 %v4074, %v4242
      %v4333 = vadd.f32 %v4075, %v4245
      %v4334 = vadd.f32 %v4076, %v4250
      %v4335 = vadd.f32 %v4077, %v4253
      %v4336 = vadd.f32 %v4078, %v4258
      %v4337 = vadd.f32 %v4079, %v4261
      %v4338 = vadd.f32 %v4080, %v4266
      %v4339 = vadd.f32 %v4081, %v4269
      %v4340 = vadd.f32 %v4082, %v4274
      %v4341 = vadd.f32 %v4083, %v4277
      %v4342 = vadd.f32 %v4084, %v4282
      %v4343 = vadd.f32 %v4085, %v4285
      %v4344 = vadd.f32 %v4086, %v4290
      %v4345 = vadd.f32 %v4087, %v4293
      %v4346 = vadd.f32 %v4088, %v4298
      %v4347 = vadd.f32 %v4089, %v4301
      %v4348 = vadd.f32 %v4090, %v4306
      %v4349 = vadd.f32 %v4091, %v4309
      %v4350 = vadd.f32 %v4092, %v4314
      %v4351 = vadd.f32 %v4093, %v4317
      %v4355 = vrot.slane %v2273, 1
      %v4356 = vrot.slane %v2274, 1
      %v4357 = vsel %vm594, %v4355, %v4356
      %v4358 = vrot.slane %v2275, 1
      %v4359 = vsel %vm594, %v4356, %v4358
      %v4362 = vld [vmem:[%s2 + $0x1c0] sm:$0xf]
      %v4363 = vld [vmem:[%s2 + $0x1c4] sm:$0xf]
      %v4364 = vld [vmem:[%s2 + $0x1c8] sm:$0xf]
      %v4365 = vld [vmem:[%s2 + $0x1cc] sm:$0xf]
      %v4366 = vld [vmem:[%s2 + $0x1d0] sm:$0xf]
      %v4367 = vld [vmem:[%s2 + $0x1d4] sm:$0xf]
      %v4368 = vld [vmem:[%s2 + $0x1d8] sm:$0xf]
      %v4369 = vld [vmem:[%s2 + $0x1dc] sm:$0xf]
      %v4370 = vld [vmem:[%s2 + $0x1e0] sm:$0xf]
      %v4371 = vld [vmem:[%s2 + $0x1e4] sm:$0xf]
      %v4372 = vld [vmem:[%s2 + $0x1e8] sm:$0xf]
      %v4373 = vld [vmem:[%s2 + $0x1ec] sm:$0xf]
      %v4374 = vld [vmem:[%s2 + $0x1f0] sm:$0xf]
      %v4375 = vld [vmem:[%s2 + $0x1f4] sm:$0xf]
      %v4376 = vld [vmem:[%s2 + $0x1f8] sm:$0xf]
      %v4377 = vld [vmem:[%s2 + $0x1fc] sm:$0xf]
      %v4378 = vpack.c.bf16 %v4359, %v4357
      %v4395 = vunpack.c.l.b16 %v4362
      %v4396 = vunpack.c.l.b16 %v4363
      %v4397 = vunpack.c.l.b16 %v4364
      %v4398 = vunpack.c.l.b16 %v4365
      %v4399 = vunpack.c.l.b16 %v4366
      %v4400 = vunpack.c.l.b16 %v4367
      %v4401 = vunpack.c.l.b16 %v4368
      %v4402 = vunpack.c.l.b16 %v4369
      %v4403 = vunpack.c.l.b16 %v4370
      %v4404 = vunpack.c.l.b16 %v4371
      %v4405 = vunpack.c.l.b16 %v4372
      %v4406 = vunpack.c.l.b16 %v4373
      %v4407 = vunpack.c.l.b16 %v4374
      %v4408 = vunpack.c.l.b16 %v4375
      %v4409 = vunpack.c.l.b16 %v4376
      %v4410 = vunpack.c.l.b16 %v4377
      %v4411 = vpack.c.b16 %v4396, %v4395
      %v4412 = vpack.c.b16 %v4398, %v4397
      %v4413 = vpack.c.b16 %v4400, %v4399
      %v4414 = vpack.c.b16 %v4402, %v4401
      %v4415 = vpack.c.b16 %v4404, %v4403
      %v4416 = vpack.c.b16 %v4406, %v4405
      %v4417 = vpack.c.b16 %v4408, %v4407
      %v4418 = vpack.c.b16 %v4410, %v4409
      %4427 = vmatprep.subr.bf16.mxu0 0
      %4428 = vmatpush1.bf16.msra.mxu0 %v4411
      %4429 = vmatprep.subr.bf16.mxu0 0
      %4430 = vmatpush1.bf16.msra.mxu0 %v4412
      %4431 = vmatprep.subr.bf16.mxu0 0
      %4432 = vmatpush1.bf16.msra.mxu0 %v4413
      %4433 = vmatprep.subr.bf16.mxu0 0
      %4434 = vmatpush1.bf16.msra.mxu0 %v4414
      %4435 = vmatprep.subr.bf16.mxu0 0
      %4436 = vmatpush1.bf16.msra.mxu0 %v4415
      %4437 = vmatprep.subr.bf16.mxu0 0
      %4438 = vmatpush1.bf16.msra.mxu0 %v4416
      %4439 = vmatprep.subr.bf16.mxu0 0
      %4440 = vmatpush1.bf16.msra.mxu0 %v4417
      %4441 = vmatprep.subr.bf16.mxu0 0
      %4442 = vmatpush1.bf16.msra.mxu0 %v4418
      %4443 = vmatprep.subr.bf16.mxu0 0
      %4444 = vmatpush1.bf16.msra.mxu0 0
      %4445 = vmatprep.subr.bf16.mxu0 0
      %4446 = vmatpush1.bf16.msra.mxu0 0
      %4447 = vmatprep.subr.bf16.mxu0 0
      %4448 = vmatpush1.bf16.msra.mxu0 0
      %4449 = vmatprep.subr.bf16.mxu0 0
      %4450 = vmatpush1.bf16.msra.mxu0 0
      %4451 = vmatprep.subr.bf16.mxu0 0
      %4452 = vmatpush1.bf16.msra.mxu0 0
      %4453 = vmatprep.subr.bf16.mxu0 0
      %4454 = vmatpush1.bf16.msra.mxu0 0
      %4455 = vmatprep.subr.bf16.mxu0 0
      %4456 = vmatpush1.bf16.msra.mxu0 0
      %4457 = vmatprep.subr.bf16.mxu0 0
      %4458 = vmatpush1.bf16.msra.mxu0 0
      %4459 = vmatprep.mubr.bf16.mxu0 0
      %4460 = vmatmul.mubr.bf16.gmra.mrb[0].mxu0 %v2486
      %v4461 = vpop.f32.mrb[0].mxu0
      %v4462 = vadd.f32 0.0, %v4461
      %v4463 = vpop.f32.mrb[0].mxu0
      %v4464 = vpop.f32.mrb[0].mxu0
      %v4465 = vadd.f32 0.0, %v4464
      %v4466 = vpop.f32.mrb[0].mxu0
      %4467 = vmatprep.mubr.bf16.mxu0 0
      %4468 = vmatmul.mubr.bf16.gmra.mrb[0].mxu0 %v2487
      %v4469 = vpop.f32.mrb[0].mxu0
      %v4470 = vadd.f32 0.0, %v4469
      %v4471 = vpop.f32.mrb[0].mxu0
      %v4472 = vpop.f32.mrb[0].mxu0
      %v4473 = vadd.f32 0.0, %v4472
      %v4474 = vpop.f32.mrb[0].mxu0
      %4475 = vmatprep.mubr.bf16.mxu0 0
      %4476 = vmatmul.mubr.bf16.gmra.mrb[0].mxu0 %v2488
      %v4477 = vpop.f32.mrb[0].mxu0
      %v4478 = vadd.f32 0.0, %v4477
      %v4479 = vpop.f32.mrb[0].mxu0
      %v4480 = vpop.f32.mrb[0].mxu0
      %v4481 = vadd.f32 0.0, %v4480
      %v4482 = vpop.f32.mrb[0].mxu0
      %4483 = vmatprep.mubr.bf16.mxu0 0
      %4484 = vmatmul.mubr.bf16.gmra.mrb[0].mxu0 %v2489
      %v4485 = vpop.f32.mrb[0].mxu0
      %v4486 = vadd.f32 0.0, %v4485
      %v4487 = vpop.f32.mrb[0].mxu0
      %v4488 = vpop.f32.mrb[0].mxu0
      %v4489 = vadd.f32 0.0, %v4488
      %v4490 = vpop.f32.mrb[0].mxu0
      %4491 = vmatprep.mubr.bf16.mxu0 0
      %4492 = vmatmul.mubr.bf16.gmra.mrb[0].mxu0 %v2490
      %v4493 = vpop.f32.mrb[0].mxu0
      %v4494 = vadd.f32 0.0, %v4493
      %v4495 = vpop.f32.mrb[0].mxu0
      %v4496 = vpop.f32.mrb[0].mxu0
      %v4497 = vadd.f32 0.0, %v4496
      %v4498 = vpop.f32.mrb[0].mxu0
      %4499 = vmatprep.mubr.bf16.mxu0 0
      %4500 = vmatmul.mubr.bf16.gmra.mrb[0].mxu0 %v2491
      %v4501 = vpop.f32.mrb[0].mxu0
      %v4502 = vadd.f32 0.0, %v4501
      %v4503 = vpop.f32.mrb[0].mxu0
      %v4504 = vpop.f32.mrb[0].mxu0
      %v4505 = vadd.f32 0.0, %v4504
      %v4506 = vpop.f32.mrb[0].mxu0
      %4507 = vmatprep.mubr.bf16.mxu0 0
      %4508 = vmatmul.mubr.bf16.gmra.mrb[0].mxu0 %v2492
      %v4509 = vpop.f32.mrb[0].mxu0
      %v4510 = vadd.f32 0.0, %v4509
      %v4511 = vpop.f32.mrb[0].mxu0
      %v4512 = vpop.f32.mrb[0].mxu0
      %v4513 = vadd.f32 0.0, %v4512
      %v4514 = vpop.f32.mrb[0].mxu0
      %4515 = vmatprep.mubr.bf16.mxu0 0
      %4516 = vmatmul.mubr.bf16.gmra.mrb[0].mxu0 %v2493
      %v4517 = vpop.f32.mrb[0].mxu0
      %v4518 = vadd.f32 0.0, %v4517
      %v4519 = vpop.f32.mrb[0].mxu0
      %v4520 = vpop.f32.mrb[0].mxu0
      %v4521 = vadd.f32 0.0, %v4520
      %v4522 = vpop.f32.mrb[0].mxu0
      %4523 = vmatprep.mubr.bf16.mxu0 0
      %4524 = vmatmul.mubr.bf16.gmra.mrb[0].mxu0 %v2494
      %v4525 = vpop.f32.mrb[0].mxu0
      %v4526 = vadd.f32 0.0, %v4525
      %v4527 = vpop.f32.mrb[0].mxu0
      %v4528 = vpop.f32.mrb[0].mxu0
      %v4529 = vadd.f32 0.0, %v4528
      %v4530 = vpop.f32.mrb[0].mxu0
      %4531 = vmatprep.mubr.bf16.mxu0 0
      %4532 = vmatmul.mubr.bf16.gmra.mrb[0].mxu0 %v2495
      %v4533 = vpop.f32.mrb[0].mxu0
      %v4534 = vadd.f32 0.0, %v4533
      %v4535 = vpop.f32.mrb[0].mxu0
      %v4536 = vpop.f32.mrb[0].mxu0
      %v4537 = vadd.f32 0.0, %v4536
      %v4538 = vpop.f32.mrb[0].mxu0
      %4539 = vmatprep.mubr.bf16.mxu0 0
      %4540 = vmatmul.mubr.bf16.gmra.mrb[0].mxu0 %v2496
      %v4541 = vpop.f32.mrb[0].mxu0
      %v4542 = vadd.f32 0.0, %v4541
      %v4543 = vpop.f32.mrb[0].mxu0
      %v4544 = vpop.f32.mrb[0].mxu0
      %v4545 = vadd.f32 0.0, %v4544
      %v4546 = vpop.f32.mrb[0].mxu0
      %4547 = vmatprep.mubr.bf16.mxu0 0
      %4548 = vmatmul.mubr.bf16.gmra.mrb[0].mxu0 %v2497
      %v4549 = vpop.f32.mrb[0].mxu0
      %v4550 = vadd.f32 0.0, %v4549
      %v4551 = vpop.f32.mrb[0].mxu0
      %v4552 = vpop.f32.mrb[0].mxu0
      %v4553 = vadd.f32 0.0, %v4552
      %v4554 = vpop.f32.mrb[0].mxu0
      %4555 = vmatprep.mubr.bf16.mxu0 0
      %4556 = vmatmul.mubr.bf16.gmra.mrb[0].mxu0 %v2498
      %v4557 = vpop.f32.mrb[0].mxu0
      %v4558 = vadd.f32 0.0, %v4557
      %v4559 = vpop.f32.mrb[0].mxu0
      %v4560 = vpop.f32.mrb[0].mxu0
      %v4561 = vadd.f32 0.0, %v4560
      %v4562 = vpop.f32.mrb[0].mxu0
      %4563 = vmatprep.mubr.bf16.mxu0 0
      %4564 = vmatmul.mubr.bf16.gmra.mrb[0].mxu0 %v2499
      %v4565 = vpop.f32.mrb[0].mxu0
      %v4566 = vadd.f32 0.0, %v4565
      %v4567 = vpop.f32.mrb[0].mxu0
      %v4568 = vpop.f32.mrb[0].mxu0
      %v4569 = vadd.f32 0.0, %v4568
      %v4570 = vpop.f32.mrb[0].mxu0
      %4571 = vmatprep.mubr.bf16.mxu0 0
      %4572 = vmatmul.mubr.bf16.gmra.mrb[0].mxu0 %v3587
      %v4573 = vpop.f32.mrb[0].mxu0
      %v4574 = vadd.f32 0.0, %v4573
      %v4575 = vpop.f32.mrb[0].mxu0
      %v4576 = vpop.f32.mrb[0].mxu0
      %v4577 = vadd.f32 0.0, %v4576
      %v4578 = vpop.f32.mrb[0].mxu0
      %4579 = vmatprep.mubr.bf16.mxu0 0
      %4580 = vmatmul.mubr.bf16.gmra.mrb[0].mxu0 %v4378
      %v4581 = vpop.f32.mrb[0].mxu0
      %v4582 = vadd.f32 0.0, %v4581
      %v4583 = vpop.f32.mrb[0].mxu0
      %v4584 = vpop.f32.mrb[0].mxu0
      %v4585 = vadd.f32 0.0, %v4584
      %v4586 = vpop.f32.mrb[0].mxu0
      %4587 = vdwg.mxu0
      %v4588 = vadd.f32 %v4320, %v4462
      %v4589 = vadd.f32 %v4321, %v4465
      %v4590 = vadd.f32 %v4322, %v4470
      %v4591 = vadd.f32 %v4323, %v4473
      %v4592 = vadd.f32 %v4324, %v4478
      %v4593 = vadd.f32 %v4325, %v4481
      %v4594 = vadd.f32 %v4326, %v4486
      %v4595 = vadd.f32 %v4327, %v4489
      %v4596 = vadd.f32 %v4328, %v4494
      %v4597 = vadd.f32 %v4329, %v4497
      %v4598 = vadd.f32 %v4330, %v4502
      %v4599 = vadd.f32 %v4331, %v4505
      %v4600 = vadd.f32 %v4332, %v4510
      %v4601 = vadd.f32 %v4333, %v4513
      %v4602 = vadd.f32 %v4334, %v4518
      %v4603 = vadd.f32 %v4335, %v4521
      %v4604 = vadd.f32 %v4336, %v4526
      %v4605 = vadd.f32 %v4337, %v4529
      %v4606 = vadd.f32 %v4338, %v4534
      %v4607 = vadd.f32 %v4339, %v4537
      %v4608 = vadd.f32 %v4340, %v4542
      %v4609 = vadd.f32 %v4341, %v4545
      %v4610 = vadd.f32 %v4342, %v4550
      %v4611 = vadd.f32 %v4343, %v4553
      %v4612 = vadd.f32 %v4344, %v4558
      %v4613 = vadd.f32 %v4345, %v4561
      %v4614 = vadd.f32 %v4346, %v4566
      %v4615 = vadd.f32 %v4347, %v4569
      %v4616 = vadd.f32 %v4348, %v4574
      %v4617 = vadd.f32 %v4349, %v4577
      %v4618 = vadd.f32 %v4350, %v4582
      %v4619 = vadd.f32 %v4351, %v4585
      %v4620 = vrot.slane %v2273, 2
      %v4621 = vrot.slane %v2274, 2
      %v4622 = vsel %vm675, %v4620, %v4621
      %v4623 = vrot.slane %v2275, 2
      %v4624 = vsel %vm675, %v4621, %v4623
      %v4627 = vld [vmem:[%s2 + $0x200] sm:$0xf]
      %v4628 = vld [vmem:[%s2 + $0x204] sm:$0xf]
      %v4629 = vld [vmem:[%s2 + $0x208] sm:$0xf]
      %v4630 = vld [vmem:[%s2 + $0x20c] sm:$0xf]
      %v4631 = vld [vmem:[%s2 + $0x210] sm:$0xf]
      %v4632 = vld [vmem:[%s2 + $0x214] sm:$0xf]
      %v4633 = vld [vmem:[%s2 + $0x218] sm:$0xf]
      %v4634 = vld [vmem:[%s2 + $0x21c] sm:$0xf]
      %v4635 = vld [vmem:[%s2 + $0x220] sm:$0xf]
      %v4636 = vld [vmem:[%s2 + $0x224] sm:$0xf]
      %v4637 = vld [vmem:[%s2 + $0x228] sm:$0xf]
      %v4638 = vld [vmem:[%s2 + $0x22c] sm:$0xf]
      %v4639 = vld [vmem:[%s2 + $0x230] sm:$0xf]
      %v4640 = vld [vmem:[%s2 + $0x234] sm:$0xf]
      %v4641 = vld [vmem:[%s2 + $0x238] sm:$0xf]
      %v4642 = vld [vmem:[%s2 + $0x23c] sm:$0xf]
      %v4643 = vpack.c.bf16 %v4624, %v4622
      %v4660 = vunpack.c.l.b16 %v4627
      %v4661 = vunpack.c.l.b16 %v4628
      %v4662 = vunpack.c.l.b16 %v4629
      %v4663 = vunpack.c.l.b16 %v4630
      %v4664 = vunpack.c.l.b16 %v4631
      %v4665 = vunpack.c.l.b16 %v4632
      %v4666 = vunpack.c.l.b16 %v4633
      %v4667 = vunpack.c.l.b16 %v4634
      %v4668 = vunpack.c.l.b16 %v4635
      %v4669 = vunpack.c.l.b16 %v4636
      %v4670 = vunpack.c.l.b16 %v4637
      %v4671 = vunpack.c.l.b16 %v4638
      %v4672 = vunpack.c.l.b16 %v4639
      %v4673 = vunpack.c.l.b16 %v4640
      %v4674 = vunpack.c.l.b16 %v4641
      %v4675 = vunpack.c.l.b16 %v4642
      %v4676 = vpack.c.b16 %v4661, %v4660
      %v4677 = vpack.c.b16 %v4663, %v4662
      %v4678 = vpack.c.b16 %v4665, %v4664
      %v4679 = vpack.c.b16 %v4667, %v4666
      %v4680 = vpack.c.b16 %v4669, %v4668
      %v4681 = vpack.c.b16 %v4671, %v4670
      %v4682 = vpack.c.b16 %v4673, %v4672
      %v4683 = vpack.c.b16 %v4675, %v4674
      %4692 = vmatprep.subr.bf16.mxu0 0
      %4693 = vmatpush1.bf16.msra.mxu0 %v4676
      %4694 = vmatprep.subr.bf16.mxu0 0
      %4695 = vmatpush1.bf16.msra.mxu0 %v4677
      %4696 = vmatprep.subr.bf16.mxu0 0
      %4697 = vmatpush1.bf16.msra.mxu0 %v4678
      %4698 = vmatprep.subr.bf16.mxu0 0
      %4699 = vmatpush1.bf16.msra.mxu0 %v4679
      %4700 = vmatprep.subr.bf16.mxu0 0
      %4701 = vmatpush1.bf16.msra.mxu0 %v4680
      %4702 = vmatprep.subr.bf16.mxu0 0
      %4703 = vmatpush1.bf16.msra.mxu0 %v4681
      %4704 = vmatprep.subr.bf16.mxu0 0
      %4705 = vmatpush1.bf16.msra.mxu0 %v4682
      %4706 = vmatprep.subr.bf16.mxu0 0
      %4707 = vmatpush1.bf16.msra.mxu0 %v4683
      %4708 = vmatprep.subr.bf16.mxu0 0
      %4709 = vmatpush1.bf16.msra.mxu0 0
      %4710 = vmatprep.subr.bf16.mxu0 0
      %4711 = vmatpush1.bf16.msra.mxu0 0
      %4712 = vmatprep.subr.bf16.mxu0 0
      %4713 = vmatpush1.bf16.msra.mxu0 0
      %4714 = vmatprep.subr.bf16.mxu0 0
      %4715 = vmatpush1.bf16.msra.mxu0 0
      %4716 = vmatprep.subr.bf16.mxu0 0
      %4717 = vmatpush1.bf16.msra.mxu0 0
      %4718 = vmatprep.subr.bf16.mxu0 0
      %4719 = vmatpush1.bf16.msra.mxu0 0
      %4720 = vmatprep.subr.bf16.mxu0 0
      %4721 = vmatpush1.bf16.msra.mxu0 0
      %4722 = vmatprep.subr.bf16.mxu0 0
      %4723 = vmatpush1.bf16.msra.mxu0 0
      %4724 = vmatprep.mubr.bf16.mxu0 0
      %4725 = vmatmul.mubr.bf16.gmra.mrb[0].mxu0 %v3048
      %v4726 = vpop.f32.mrb[0].mxu0
      %v4727 = vadd.f32 0.0, %v4726
      %v4728 = vpop.f32.mrb[0].mxu0
      %v4729 = vpop.f32.mrb[0].mxu0
      %v4730 = vadd.f32 0.0, %v4729
      %v4731 = vpop.f32.mrb[0].mxu0
      %4732 = vmatprep.mubr.bf16.mxu0 0
      %4733 = vmatmul.mubr.bf16.gmra.mrb[0].mxu0 %v3049
      %v4734 = vpop.f32.mrb[0].mxu0
      %v4735 = vadd.f32 0.0, %v4734
      %v4736 = vpop.f32.mrb[0].mxu0
      %v4737 = vpop.f32.mrb[0].mxu0
      %v4738 = vadd.f32 0.0, %v4737
      %v4739 = vpop.f32.mrb[0].mxu0
      %4740 = vmatprep.mubr.bf16.mxu0 0
      %4741 = vmatmul.mubr.bf16.gmra.mrb[0].mxu0 %v3050
      %v4742 = vpop.f32.mrb[0].mxu0
      %v4743 = vadd.f32 0.0, %v4742
      %v4744 = vpop.f32.mrb[0].mxu0
      %v4745 = vpop.f32.mrb[0].mxu0
      %v4746 = vadd.f32 0.0, %v4745
      %v4747 = vpop.f32.mrb[0].mxu0
      %4748 = vmatprep.mubr.bf16.mxu0 0
      %4749 = vmatmul.mubr.bf16.gmra.mrb[0].mxu0 %v3051
      %v4750 = vpop.f32.mrb[0].mxu0
      %v4751 = vadd.f32 0.0, %v4750
      %v4752 = vpop.f32.mrb[0].mxu0
      %v4753 = vpop.f32.mrb[0].mxu0
      %v4754 = vadd.f32 0.0, %v4753
      %v4755 = vpop.f32.mrb[0].mxu0
      %4756 = vmatprep.mubr.bf16.mxu0 0
      %4757 = vmatmul.mubr.bf16.gmra.mrb[0].mxu0 %v3052
      %v4758 = vpop.f32.mrb[0].mxu0
      %v4759 = vadd.f32 0.0, %v4758
      %v4760 = vpop.f32.mrb[0].mxu0
      %v4761 = vpop.f32.mrb[0].mxu0
      %v4762 = vadd.f32 0.0, %v4761
      %v4763 = vpop.f32.mrb[0].mxu0
      %4764 = vmatprep.mubr.bf16.mxu0 0
      %4765 = vmatmul.mubr.bf16.gmra.mrb[0].mxu0 %v3053
      %v4766 = vpop.f32.mrb[0].mxu0
      %v4767 = vadd.f32 0.0, %v4766
      %v4768 = vpop.f32.mrb[0].mxu0
      %v4769 = vpop.f32.mrb[0].mxu0
      %v4770 = vadd.f32 0.0, %v4769
      %v4771 = vpop.f32.mrb[0].mxu0
      %4772 = vmatprep.mubr.bf16.mxu0 0
      %4773 = vmatmul.mubr.bf16.gmra.mrb[0].mxu0 %v3054
      %v4774 = vpop.f32.mrb[0].mxu0
      %v4775 = vadd.f32 0.0, %v4774
      %v4776 = vpop.f32.mrb[0].mxu0
      %v4777 = vpop.f32.mrb[0].mxu0
      %v4778 = vadd.f32 0.0, %v4777
      %v4779 = vpop.f32.mrb[0].mxu0
      %4780 = vmatprep.mubr.bf16.mxu0 0
      %4781 = vmatmul.mubr.bf16.gmra.mrb[0].mxu0 %v3055
      %v4782 = vpop.f32.mrb[0].mxu0
      %v4783 = vadd.f32 0.0, %v4782
      %v4784 = vpop.f32.mrb[0].mxu0
      %v4785 = vpop.f32.mrb[0].mxu0
      %v4786 = vadd.f32 0.0, %v4785
      %v4787 = vpop.f32.mrb[0].mxu0
      %4788 = vmatprep.mubr.bf16.mxu0 0
      %4789 = vmatmul.mubr.bf16.gmra.mrb[0].mxu0 %v3056
      %v4790 = vpop.f32.mrb[0].mxu0
      %v4791 = vadd.f32 0.0, %v4790
      %v4792 = vpop.f32.mrb[0].mxu0
      %v4793 = vpop.f32.mrb[0].mxu0
      %v4794 = vadd.f32 0.0, %v4793
      %v4795 = vpop.f32.mrb[0].mxu0
      %4796 = vmatprep.mubr.bf16.mxu0 0
      %4797 = vmatmul.mubr.bf16.gmra.mrb[0].mxu0 %v3057
      %v4798 = vpop.f32.mrb[0].mxu0
      %v4799 = vadd.f32 0.0, %v4798
      %v4800 = vpop.f32.mrb[0].mxu0
      %v4801 = vpop.f32.mrb[0].mxu0
      %v4802 = vadd.f32 0.0, %v4801
      %v4803 = vpop.f32.mrb[0].mxu0
      %4804 = vmatprep.mubr.bf16.mxu0 0
      %4805 = vmatmul.mubr.bf16.gmra.mrb[0].mxu0 %v3058
      %v4806 = vpop.f32.mrb[0].mxu0
      %v4807 = vadd.f32 0.0, %v4806
      %v4808 = vpop.f32.mrb[0].mxu0
      %v4809 = vpop.f32.mrb[0].mxu0
      %v4810 = vadd.f32 0.0, %v4809
      %v4811 = vpop.f32.mrb[0].mxu0
      %4812 = vmatprep.mubr.bf16.mxu0 0
      %4813 = vmatmul.mubr.bf16.gmra.mrb[0].mxu0 %v3059
      %v4814 = vpop.f32.mrb[0].mxu0
      %v4815 = vadd.f32 0.0, %v4814
      %v4816 = vpop.f32.mrb[0].mxu0
      %v4817 = vpop.f32.mrb[0].mxu0
      %v4818 = vadd.f32 0.0, %v4817
      %v4819 = vpop.f32.mrb[0].mxu0
      %4820 = vmatprep.mubr.bf16.mxu0 0
      %4821 = vmatmul.mubr.bf16.gmra.mrb[0].mxu0 %v3060
      %v4822 = vpop.f32.mrb[0].mxu0
      %v4823 = vadd.f32 0.0, %v4822
      %v4824 = vpop.f32.mrb[0].mxu0
      %v4825 = vpop.f32.mrb[0].mxu0
      %v4826 = vadd.f32 0.0, %v4825
      %v4827 = vpop.f32.mrb[0].mxu0
      %4828 = vmatprep.mubr.bf16.mxu0 0
      %4829 = vmatmul.mubr.bf16.gmra.mrb[0].mxu0 %v3061
      %v4830 = vpop.f32.mrb[0].mxu0
      %v4831 = vadd.f32 0.0, %v4830
      %v4832 = vpop.f32.mrb[0].mxu0
      %v4833 = vpop.f32.mrb[0].mxu0
      %v4834 = vadd.f32 0.0, %v4833
      %v4835 = vpop.f32.mrb[0].mxu0
      %4836 = vmatprep.mubr.bf16.mxu0 0
      %4837 = vmatmul.mubr.bf16.gmra.mrb[0].mxu0 %v3852
      %v4838 = vpop.f32.mrb[0].mxu0
      %v4839 = vadd.f32 0.0, %v4838
      %v4840 = vpop.f32.mrb[0].mxu0
      %v4841 = vpop.f32.mrb[0].mxu0
      %v4842 = vadd.f32 0.0, %v4841
      %v4843 = vpop.f32.mrb[0].mxu0
      %4844 = vmatprep.mubr.bf16.mxu0 0
      %4845 = vmatmul.mubr.bf16.gmra.mrb[0].mxu0 %v4643
      %v4846 = vpop.f32.mrb[0].mxu0
      %v4847 = vadd.f32 0.0, %v4846
      %v4848 = vpop.f32.mrb[0].mxu0
      %v4849 = vpop.f32.mrb[0].mxu0
      %v4850 = vadd.f32 0.0, %v4849
      %v4851 = vpop.f32.mrb[0].mxu0
      %4852 = vdwg.mxu0
      %v4853 = vadd.f32 %v4588, %v4727
      %v4854 = vadd.f32 %v4589, %v4730
      %v4855 = vadd.f32 %v4590, %v4735
      %v4856 = vadd.f32 %v4591, %v4738
      %v4857 = vadd.f32 %v4592, %v4743
      %v4858 = vadd.f32 %v4593, %v4746
      %v4859 = vadd.f32 %v4594, %v4751
      %v4860 = vadd.f32 %v4595, %v4754
      %v4861 = vadd.f32 %v4596, %v4759
      %v4862 = vadd.f32 %v4597, %v4762
      %v4863 = vadd.f32 %v4598, %v4767
      %v4864 = vadd.f32 %v4599, %v4770
      %v4865 = vadd.f32 %v4600, %v4775
      %v4866 = vadd.f32 %v4601, %v4778
      %v4867 = vadd.f32 %v4602, %v4783
      %v4868 = vadd.f32 %v4603, %v4786
      %v4869 = vadd.f32 %v4604, %v4791
      %v4870 = vadd.f32 %v4605, %v4794
      %v4871 = vadd.f32 %v4606, %v4799
      %v4872 = vadd.f32 %v4607, %v4802
      %v4873 = vadd.f32 %v4608, %v4807
      %v4874 = vadd.f32 %v4609, %v4810
      %v4875 = vadd.f32 %v4610, %v4815
      %v4876 = vadd.f32 %v4611, %v4818
      %v4877 = vadd.f32 %v4612, %v4823
      %v4878 = vadd.f32 %v4613, %v4826
      %v4879 = vadd.f32 %v4614, %v4831
      %v4880 = vadd.f32 %v4615, %v4834
      %v4881 = vadd.f32 %v4616, %v4839
      %v4882 = vadd.f32 %v4617, %v4842
      %v4883 = vadd.f32 %v4618, %v4847
      %v4884 = vadd.f32 %v4619, %v4850
      %v4885 = vld [vmem:[%s5] sm:$0x1]
      %v4887 = vlaneseq
      %v4888 = vshrl.u32 %v4887, 7
      %v4889 = vsub.s32 0, %v4888
      %v4890 = vrot.slane %v4885, %v4889
      %v4892 = vmul.f32 %v4853, %v4890
      %v4893 = vmul.f32 %v4854, %v4890
      %v4894 = vmul.f32 %v4855, %v4890
      %v4895 = vmul.f32 %v4856, %v4890
      %v4896 = vmul.f32 %v4857, %v4890
      %v4897 = vmul.f32 %v4858, %v4890
      %v4898 = vmul.f32 %v4859, %v4890
      %v4899 = vmul.f32 %v4860, %v4890
      %v4900 = vmul.f32 %v4861, %v4890
      %v4901 = vmul.f32 %v4862, %v4890
      %v4902 = vmul.f32 %v4863, %v4890
      %v4903 = vmul.f32 %v4864, %v4890
      %v4904 = vmul.f32 %v4865, %v4890
      %v4905 = vmul.f32 %v4866, %v4890
      %v4906 = vmul.f32 %v4867, %v4890
      %v4907 = vmul.f32 %v4868, %v4890
      %v4908 = vmul.f32 %v4869, %v4890
      %v4909 = vmul.f32 %v4870, %v4890
      %v4910 = vmul.f32 %v4871, %v4890
      %v4911 = vmul.f32 %v4872, %v4890
      %v4912 = vmul.f32 %v4873, %v4890
      %v4913 = vmul.f32 %v4874, %v4890
      %v4914 = vmul.f32 %v4875, %v4890
      %v4915 = vmul.f32 %v4876, %v4890
      %v4916 = vmul.f32 %v4877, %v4890
      %v4917 = vmul.f32 %v4878, %v4890
      %v4918 = vmul.f32 %v4879, %v4890
      %v4919 = vmul.f32 %v4880, %v4890
      %v4920 = vmul.f32 %v4881, %v4890
      %v4921 = vmul.f32 %v4882, %v4890
      %v4922 = vmul.f32 %v4883, %v4890
      %v4923 = vmul.f32 %v4884, %v4890
      %v4924 = vld [vmem:[%s6] sm:$0x1]
      %v4926 = vlaneseq
      %v4927 = vshrl.u32 %v4926, 7
      %v4928 = vsub.s32 0, %v4927
      %v4929 = vrot.slane %v4924, %v4928
      %v4931 = vadd.f32 %v4892, %v4929
      %v4932 = vadd.f32 %v4893, %v4929
      %v4933 = vadd.f32 %v4894, %v4929
      %v4934 = vadd.f32 %v4895, %v4929
      %v4935 = vadd.f32 %v4896, %v4929
      %v4936 = vadd.f32 %v4897, %v4929
      %v4937 = vadd.f32 %v4898, %v4929
      %v4938 = vadd.f32 %v4899, %v4929
      %v4939 = vadd.f32 %v4900, %v4929
      %v4940 = vadd.f32 %v4901, %v4929
      %v4941 = vadd.f32 %v4902, %v4929
      %v4942 = vadd.f32 %v4903, %v4929
      %v4943 = vadd.f32 %v4904, %v4929
      %v4944 = vadd.f32 %v4905, %v4929
      %v4945 = vadd.f32 %v4906, %v4929
      %v4946 = vadd.f32 %v4907, %v4929
      %v4947 = vadd.f32 %v4908, %v4929
      %v4948 = vadd.f32 %v4909, %v4929
      %v4949 = vadd.f32 %v4910, %v4929
      %v4950 = vadd.f32 %v4911, %v4929
      %v4951 = vadd.f32 %v4912, %v4929
      %v4952 = vadd.f32 %v4913, %v4929
      %v4953 = vadd.f32 %v4914, %v4929
      %v4954 = vadd.f32 %v4915, %v4929
      %v4955 = vadd.f32 %v4916, %v4929
      %v4956 = vadd.f32 %v4917, %v4929
      %v4957 = vadd.f32 %v4918, %v4929
      %v4958 = vadd.f32 %v4919, %v4929
      %v4959 = vadd.f32 %v4920, %v4929
      %v4960 = vadd.f32 %v4921, %v4929
      %v4961 = vadd.f32 %v4922, %v4929
      %v4962 = vadd.f32 %v4923, %v4929
      %v4963 = vld [vmem:[%s273] sm:$0xf]
      %v4964 = vld [vmem:[%s273 + $0x4] sm:$0xf]
      %v4965 = vld [vmem:[%s273 + $0x8] sm:$0xf]
      %v4966 = vld [vmem:[%s273 + $0xc] sm:$0xf]
      %v4967 = vld [vmem:[%s273 + $0x10] sm:$0xf]
      %v4968 = vld [vmem:[%s273 + $0x14] sm:$0xf]
      %v4969 = vld [vmem:[%s273 + $0x18] sm:$0xf]
      %v4970 = vld [vmem:[%s273 + $0x1c] sm:$0xf]
      %v4971 = vld [vmem:[%s273 + $0x20] sm:$0xf]
      %v4972 = vld [vmem:[%s273 + $0x24] sm:$0xf]
      %v4973 = vld [vmem:[%s273 + $0x28] sm:$0xf]
      %v4974 = vld [vmem:[%s273 + $0x2c] sm:$0xf]
      %v4975 = vld [vmem:[%s273 + $0x30] sm:$0xf]
      %v4976 = vld [vmem:[%s273 + $0x34] sm:$0xf]
      %v4977 = vld [vmem:[%s273 + $0x38] sm:$0xf]
      %v4978 = vld [vmem:[%s273 + $0x3c] sm:$0xf]
      %v4979 = vld [vmem:[%s273 + $0x40] sm:$0xf]
      %v4980 = vld [vmem:[%s273 + $0x44] sm:$0xf]
      %v4981 = vld [vmem:[%s273 + $0x48] sm:$0xf]
      %v4982 = vld [vmem:[%s273 + $0x4c] sm:$0xf]
      %v4983 = vld [vmem:[%s273 + $0x50] sm:$0xf]
      %v4984 = vld [vmem:[%s273 + $0x54] sm:$0xf]
      %v4985 = vld [vmem:[%s273 + $0x58] sm:$0xf]
      %v4986 = vld [vmem:[%s273 + $0x5c] sm:$0xf]
      %v4987 = vld [vmem:[%s273 + $0x60] sm:$0xf]
      %v4988 = vld [vmem:[%s273 + $0x64] sm:$0xf]
      %v4989 = vld [vmem:[%s273 + $0x68] sm:$0xf]
      %v4990 = vld [vmem:[%s273 + $0x6c] sm:$0xf]
      %v4991 = vld [vmem:[%s273 + $0x70] sm:$0xf]
      %v4992 = vld [vmem:[%s273 + $0x74] sm:$0xf]
      %v4993 = vld [vmem:[%s273 + $0x78] sm:$0xf]
      %v4994 = vld [vmem:[%s273 + $0x7c] sm:$0xf]
      %v4995 = vunpack.c.l.bf16 %v4963
      %v4996 = vunpack.c.l.bf16 %v4964
      %v4997 = vunpack.c.l.bf16 %v4965
      %v4998 = vunpack.c.l.bf16 %v4966
      %v4999 = vunpack.c.l.bf16 %v4967
      %v5000 = vunpack.c.l.bf16 %v4968
      %v5001 = vunpack.c.l.bf16 %v4969
      %v5002 = vunpack.c.l.bf16 %v4970
      %v5003 = vunpack.c.l.bf16 %v4971
      %v5004 = vunpack.c.l.bf16 %v4972
      %v5005 = vunpack.c.l.bf16 %v4973
      %v5006 = vunpack.c.l.bf16 %v4974
      %v5007 = vunpack.c.l.bf16 %v4975
      %v5008 = vunpack.c.l.bf16 %v4976
      %v5009 = vunpack.c.l.bf16 %v4977
      %v5010 = vunpack.c.l.bf16 %v4978
      %v5011 = vunpack.c.l.bf16 %v4979
      %v5012 = vunpack.c.l.bf16 %v4980
      %v5013 = vunpack.c.l.bf16 %v4981
      %v5014 = vunpack.c.l.bf16 %v4982
      %v5015 = vunpack.c.l.bf16 %v4983
      %v5016 = vunpack.c.l.bf16 %v4984
      %v5017 = vunpack.c.l.bf16 %v4985
      %v5018 = vunpack.c.l.bf16 %v4986
      %v5019 = vunpack.c.l.bf16 %v4987
      %v5020 = vunpack.c.l.bf16 %v4988
      %v5021 = vunpack.c.l.bf16 %v4989
      %v5022 = vunpack.c.l.bf16 %v4990
      %v5023 = vunpack.c.l.bf16 %v4991
      %v5024 = vunpack.c.l.bf16 %v4992
      %v5025 = vunpack.c.l.bf16 %v4993
      %v5026 = vunpack.c.l.bf16 %v4994
      %v5027 = vsel %vm459, %v4995, 0.0
      %v5028 = vsel %vm459, %v4996, 0.0
      %v5029 = vsel %vm459, %v4997, 0.0
      %v5030 = vsel %vm459, %v4998, 0.0
      %v5031 = vsel %vm459, %v4999, 0.0
      %v5032 = vsel %vm459, %v5000, 0.0
      %v5033 = vsel %vm459, %v5001, 0.0
      %v5034 = vsel %vm459, %v5002, 0.0
      %v5035 = vsel %vm459, %v5003, 0.0
      %v5036 = vsel %vm459, %v5004, 0.0
      %v5037 = vsel %vm459, %v5005, 0.0
      %v5038 = vsel %vm459, %v5006, 0.0
      %v5039 = vsel %vm459, %v5007, 0.0
      %v5040 = vsel %vm459, %v5008, 0.0
      %v5041 = vsel %vm459, %v5009, 0.0
      %v5042 = vsel %vm459, %v5010, 0.0
      %v5043 = vsel %vm459, %v5011, 0.0
      %v5044 = vsel %vm459, %v5012, 0.0
      %v5045 = vsel %vm459, %v5013, 0.0
      %v5046 = vsel %vm459, %v5014, 0.0
      %v5047 = vsel %vm459, %v5015, 0.0
      %v5048 = vsel %vm459, %v5016, 0.0
      %v5049 = vsel %vm459, %v5017, 0.0
      %v5050 = vsel %vm459, %v5018, 0.0
      %v5051 = vsel %vm459, %v5019, 0.0
      %v5052 = vsel %vm459, %v5020, 0.0
      %v5053 = vsel %vm459, %v5021, 0.0
      %v5054 = vsel %vm459, %v5022, 0.0
      %v5055 = vsel %vm459, %v5023, 0.0
      %v5056 = vsel %vm459, %v5024, 0.0
      %v5057 = vsel %vm459, %v5025, 0.0
      %v5058 = vsel %vm459, %v5026, 0.0
      %v5059 = vadd.f32 %v4931, %v5027
      %v5060 = vadd.f32 %v4932, %v5028
      %v5061 = vadd.f32 %v4933, %v5029
      %v5062 = vadd.f32 %v4934, %v5030
      %v5063 = vadd.f32 %v4935, %v5031
      %v5064 = vadd.f32 %v4936, %v5032
      %v5065 = vadd.f32 %v4937, %v5033
      %v5066 = vadd.f32 %v4938, %v5034
      %v5067 = vadd.f32 %v4939, %v5035
      %v5068 = vadd.f32 %v4940, %v5036
      %v5069 = vadd.f32 %v4941, %v5037
      %v5070 = vadd.f32 %v4942, %v5038
      %v5071 = vadd.f32 %v4943, %v5039
      %v5072 = vadd.f32 %v4944, %v5040
      %v5073 = vadd.f32 %v4945, %v5041
      %v5074 = vadd.f32 %v4946, %v5042
      %v5075 = vadd.f32 %v4947, %v5043
      %v5076 = vadd.f32 %v4948, %v5044
      %v5077 = vadd.f32 %v4949, %v5045
      %v5078 = vadd.f32 %v4950, %v5046
      %v5079 = vadd.f32 %v4951, %v5047
      %v5080 = vadd.f32 %v4952, %v5048
      %v5081 = vadd.f32 %v4953, %v5049
      %v5082 = vadd.f32 %v4954, %v5050
      %v5083 = vadd.f32 %v4955, %v5051
      %v5084 = vadd.f32 %v4956, %v5052
      %v5085 = vadd.f32 %v4957, %v5053
      %v5086 = vadd.f32 %v4958, %v5054
      %v5087 = vadd.f32 %v4959, %v5055
      %v5088 = vadd.f32 %v4960, %v5056
      %v5089 = vadd.f32 %v4961, %v5057
      %v5090 = vadd.f32 %v4962, %v5058
      %v5091 = vmax.f32 %v5059, 0.0
      %v5092 = vmax.f32 %v5060, 0.0
      %v5093 = vmax.f32 %v5061, 0.0
      %v5094 = vmax.f32 %v5062, 0.0
      %v5095 = vmax.f32 %v5063, 0.0
      %v5096 = vmax.f32 %v5064, 0.0
      %v5097 = vmax.f32 %v5065, 0.0
      %v5098 = vmax.f32 %v5066, 0.0
      %v5099 = vmax.f32 %v5067, 0.0
      %v5100 = vmax.f32 %v5068, 0.0
      %v5101 = vmax.f32 %v5069, 0.0
      %v5102 = vmax.f32 %v5070, 0.0
      %v5103 = vmax.f32 %v5071, 0.0
      %v5104 = vmax.f32 %v5072, 0.0
      %v5105 = vmax.f32 %v5073, 0.0
      %v5106 = vmax.f32 %v5074, 0.0
      %v5107 = vmax.f32 %v5075, 0.0
      %v5108 = vmax.f32 %v5076, 0.0
      %v5109 = vmax.f32 %v5077, 0.0
      %v5110 = vmax.f32 %v5078, 0.0
      %v5111 = vmax.f32 %v5079, 0.0
      %v5112 = vmax.f32 %v5080, 0.0
      %v5113 = vmax.f32 %v5081, 0.0
      %v5114 = vmax.f32 %v5082, 0.0
      %v5115 = vmax.f32 %v5083, 0.0
      %v5116 = vmax.f32 %v5084, 0.0
      %v5117 = vmax.f32 %v5085, 0.0
      %v5118 = vmax.f32 %v5086, 0.0
      %v5119 = vmax.f32 %v5087, 0.0
      %v5120 = vmax.f32 %v5088, 0.0
      %v5121 = vmax.f32 %v5089, 0.0
      %v5122 = vmax.f32 %v5090, 0.0
      %5123 = vxpose.xlu0.b32.start [1/16] %v5091, 128
      %5124 = vxpose.xlu0.b32.cont [2/16] %v5092, 128
      %5125 = vxpose.xlu0.b32.cont [3/16] %v5093, 128
      %5126 = vxpose.xlu0.b32.cont [4/16] %v5094, 128
      %5127 = vxpose.xlu0.b32.cont [5/16] %v5095, 128
      %5128 = vxpose.xlu0.b32.cont [6/16] %v5096, 128
      %5129 = vxpose.xlu0.b32.cont [7/16] %v5097, 128
      %5130 = vxpose.xlu0.b32.cont [8/16] %v5098, 128
      %5131 = vxpose.xlu0.b32.cont [9/16] %v5099, 128
      %5132 = vxpose.xlu0.b32.cont [10/16] %v5100, 128
      %5133 = vxpose.xlu0.b32.cont [11/16] %v5101, 128
      %5134 = vxpose.xlu0.b32.cont [12/16] %v5102, 128
      %5135 = vxpose.xlu0.b32.cont [13/16] %v5103, 128
      %5136 = vxpose.xlu0.b32.cont [14/16] %v5104, 128
      %5137 = vxpose.xlu0.b32.cont [15/16] %v5105, 128
      %5138 = vxpose.xlu0.b32.end [16/16] %v5106, 128
      %v5139 = vpop.trf.xlu0
      %v5140 = vpop.trf.xlu0
      %v5141 = vpop.trf.xlu0
      %v5142 = vpop.trf.xlu0
      %v5143 = vpop.trf.xlu0
      %v5144 = vpop.trf.xlu0
      %v5145 = vpop.trf.xlu0
      %v5146 = vpop.trf.xlu0
      %v5147 = vpop.trf.xlu0
      %v5148 = vpop.trf.xlu0
      %v5149 = vpop.trf.xlu0
      %v5150 = vpop.trf.xlu0
      %v5151 = vpop.trf.xlu0
      %v5152 = vpop.trf.xlu0
      %v5153 = vpop.trf.xlu0
      %v5154 = vpop.trf.xlu0
      %5155 = vxpose.xlu0.b32.start [1/16] %v5107, 128
      %5156 = vxpose.xlu0.b32.cont [2/16] %v5108, 128
      %5157 = vxpose.xlu0.b32.cont [3/16] %v5109, 128
      %5158 = vxpose.xlu0.b32.cont [4/16] %v5110, 128
      %5159 = vxpose.xlu0.b32.cont [5/16] %v5111, 128
      %5160 = vxpose.xlu0.b32.cont [6/16] %v5112, 128
      %5161 = vxpose.xlu0.b32.cont [7/16] %v5113, 128
      %5162 = vxpose.xlu0.b32.cont [8/16] %v5114, 128
      %5163 = vxpose.xlu0.b32.cont [9/16] %v5115, 128
      %5164 = vxpose.xlu0.b32.cont [10/16] %v5116, 128
      %5165 = vxpose.xlu0.b32.cont [11/16] %v5117, 128
      %5166 = vxpose.xlu0.b32.cont [12/16] %v5118, 128
      %5167 = vxpose.xlu0.b32.cont [13/16] %v5119, 128
      %5168 = vxpose.xlu0.b32.cont [14/16] %v5120, 128
      %5169 = vxpose.xlu0.b32.cont [15/16] %v5121, 128
      %5170 = vxpose.xlu0.b32.end [16/16] %v5122, 128
      %v5171 = vpop.trf.xlu0
      %v5172 = vpop.trf.xlu0
      %v5173 = vpop.trf.xlu0
      %v5174 = vpop.trf.xlu0
      %v5175 = vpop.trf.xlu0
      %v5176 = vpop.trf.xlu0
      %v5177 = vpop.trf.xlu0
      %v5178 = vpop.trf.xlu0
      %v5179 = vpop.trf.xlu0
      %v5180 = vpop.trf.xlu0
      %v5181 = vpop.trf.xlu0
      %v5182 = vpop.trf.xlu0
      %v5183 = vpop.trf.xlu0
      %v5184 = vpop.trf.xlu0
      %v5185 = vpop.trf.xlu0
      %v5186 = vpop.trf.xlu0
      %5187 = vst [vmem:[%s278] sm:$0xff] %v5139
      %5188 = vst [vmem:[%s278 + $0x8] sm:$0xff] %v5171
      %p5189 = scmp.lt.s32.totalorder %s18, 1
      %s5190 = scalar_select %p5189, %s18, 1
      %s5191 = smul.addr %s5190, 2
      %s5192 = smul.addr %s5191, 8
      %s5193 = scalar_lea.vmem %s7, %s5192
      // Predicated region
      $region53: #{basic_block_forward.1} parent=47 // pred_check
        %p5194 = pneg %p188
      $region54: #{basic_block_forward.1} parent=47 // pred_check_branch
        %5196 = sbr.rel (%p5194) target = $region56
      $region55: #{basic_block_forward.1} parent=47 // pred_region
        _
      $region56: #{basic_block_forward.1} parent=47 // pred_fallthru
        _
    $region48: #{basic_block_forward.1} parent=5 // pred_fallthru
      _
    %p5197 = scmp.le.s32.totalorder 2, %s13
    // Predicated region
    $region57: #{basic_block_forward.1} parent=5 // pred_check
      %p5198 = pneg %p5197
    $region58: #{basic_block_forward.1} parent=5 // pred_check_branch
      %5200 = sbr.rel (%p5198) target = $region60
    $region59: #{basic_block_forward.1} parent=5 // pred_region
      %s5201 = ssub.s32 %s13, 2
      // Predicated region
      $region61: #{basic_block_forward.1} parent=59 // pred_check
        %p5202 = pneg %p194
      $region62: #{basic_block_forward.1} parent=59 // pred_check_branch
        %5204 = sbr.rel (%p5202) target = $region64
      $region63: #{basic_block_forward.1} parent=59 // pred_region
        %p5205 = scmp.lt.s32.totalorder %s19, 1
        %s5206 = scalar_select %p5205, %s19, 1
        %s5207 = smul.addr %s5206, 2
        %s5208 = smul.addr %s5207, 8
        %s5209 = scalar_lea.vmem %s7, %s5208
      $region64: #{basic_block_forward.1} parent=59 // pred_fallthru
        _
    $region60: #{basic_block_forward.1} parent=5 // pred_fallthru
      _
  $region6: #{basic_block_forward.1} parent=0 // loop_footer
    %s17 = sadd.s32 1, %s13
  $region7: #{basic_block_forward.1} parent=0 // loop_footer_branch
    %12 = sbr.rel target = $region3
  $region8: #{basic_block_forward.1} parent=0 // loop_exit
    _

</llo_original>
